<compile_context>
chip_gen: v7x
topology: tpu7x:2x2x1
jax: 0.10.0
libtpu: 0.0.40
codegen_flags: <defaults>
</compile_context>

<pallas_src>
import functools

import jax
import jax.numpy as jnp
from jax import lax
from jax.experimental import pallas as pl
from jax.experimental.pallas import tpu as pltpu


def _flownet_kernel(num_steps, n_pix, hw_over_b, scale,
                    x_ref, w_ref, agg_ref, dld_ref, z_ref, logdet_ref):
    """All block_num*step_num flow steps fused in one kernel invocation.

    Layout: activations are (R, P) = (B*C, H*W) float32 -- a free reshape of
    row-major NCHW (no HBM transpose), with the row/sublane axis a multiple of
    8 at the test shape.  The 1x1 conv is the block-diagonal kron(I_B, W[s]).

    x_ref   : (R, P)    f32 VMEM  -- input activations (aliased with z_ref)
    w_ref   : (S, R, R) f32 VMEM  -- per-step kron(I_B, W) channel-mixing weights
    agg_ref : (R, R)    f32 VMEM  -- batch->channel aggregation, kron(1_BxB, I_C)
    dld_ref : (S,)      f32 SMEM  -- per-step slogdet(W)[1] * H * W (data independent)
    z_ref   : (R, P)    f32 VMEM  -- running / output activations
    logdet_ref : (1,)   f32 SMEM  -- accumulated log-determinant
    """
    inv_n = jnp.float32(1.0 / n_pix)
    agg = agg_ref[...]                                   # (R, R), loop-invariant

    def one_step(s, x, logdet):
        # ---- ActNorm data-dependent stats, single pass over x.
        # agg @ x sums the B batch-rows of each channel (result replicated per
        # channel across batch rows); the lane-reduce then gives per-channel
        # totals directly in (R, 1) column layout for broadcasting against x.
        xx = x * x
        t1 = jnp.sum(jnp.dot(agg, x, preferred_element_type=jnp.float32),
                     axis=1, keepdims=True)              # (R, 1)
        t2 = jnp.sum(jnp.dot(agg, xx, preferred_element_type=jnp.float32),
                     axis=1, keepdims=True)              # (R, 1)
        mean = t1 * inv_n
        var = jnp.maximum(t2 * inv_n - mean * mean, 0.0)
        logs = jnp.log(scale / (jnp.sqrt(var) + 1e-6))   # (R, 1), per-channel (xB replicated)
        e = jnp.exp(logs)

        # ---- ActNorm apply + block-diagonal 1x1 conv (kron(I_B, W[s])).
        y = (x - mean) * e                               # (R, P)
        z_ref[...] = jnp.dot(w_ref[s], y, preferred_element_type=jnp.float32)

        # logs rows are replicated B times -> divide out B via hw_over_b = H*W/B.
        return logdet + jnp.sum(logs) * hw_over_b + dld_ref[s]

    # Step 0 reads the (input-aliased) x_ref directly; no initial copy needed.
    logdet = one_step(0, x_ref[...], jnp.float32(0.0))
    # Remaining steps read the running activation from z_ref.  Fully unrolled
    # (num_steps is small & static) for cross-iteration scheduler visibility.
    logdet = lax.fori_loop(
        1, num_steps,
        lambda s, ld: one_step(s, z_ref[...], ld),
        logdet,
        unroll=True)
    logdet_ref[0] = logdet


def flownet_encode(x_nchw, weights, dlogdets, logdet_init=0.0, scale=1.0):
    """FlowNet.encode: returns (z in NCHW, logdet scalar)."""
    B, C, H, W = x_nchw.shape
    S = weights.shape[0]
    R = B * C            # sublane axis (multiple of 8 at the test shape)
    P = H * W            # lane axis
    n_pix = B * H * W

    # Free row-major reshape NCHW -> (B*C, H*W); no HBM transpose in or out.
    x2d = x_nchw.reshape(R, P).astype(jnp.float32)

    # Tiny, data-independent parameter prep at trace time:
    #   per-step block-diagonal weights kron(I_B, W[s])  : (S, R, R)
    #   batch->channel aggregation matrix kron(1_BxB, I_C): (R, R)
    eye_b = jnp.eye(B, dtype=jnp.float32)
    ones_b = jnp.ones((B, B), dtype=jnp.float32)
    eye_c = jnp.eye(C, dtype=jnp.float32)
    w_big = jax.vmap(lambda w: jnp.kron(eye_b, w))(weights.astype(jnp.float32))
    agg = jnp.kron(ones_b, eye_c)
    dld32 = dlogdets.astype(jnp.float32)

    # Generation-aware VMEM budget: ~4x activation headroom (affine applied
    # in-place, few live temps) + params, capped at ~0.8x physical capacity
    # (v7x: 64 MiB/TC; v5e/v6e: 128 MiB).
    try:
        vmem_cap = int(pltpu.get_tpu_info().vmem_capacity_bytes)
    except Exception:
        vmem_cap = 64 * 2**20
    act_bytes = R * P * 4
    param_bytes = (S * R * R + R * R) * 4
    vmem_limit = int(min(int(0.8 * vmem_cap),
                         max(16 * 2**20, 4 * act_bytes + param_bytes + (1 << 20))))

    kernel = functools.partial(
        _flownet_kernel, S, n_pix, float(H * W) / float(B), float(scale))
    z2d, logdet = pl.pallas_call(
        kernel,
        out_shape=(
            jax.ShapeDtypeStruct((R, P), jnp.float32),
            jax.ShapeDtypeStruct((1,), jnp.float32),
        ),
        in_specs=[
            pl.BlockSpec(memory_space=pltpu.MemorySpace.VMEM),
            pl.BlockSpec(memory_space=pltpu.MemorySpace.VMEM),
            pl.BlockSpec(memory_space=pltpu.MemorySpace.VMEM),
            pl.BlockSpec(memory_space=pltpu.MemorySpace.SMEM),
        ],
        out_specs=(
            pl.BlockSpec(memory_space=pltpu.MemorySpace.VMEM),
            pl.BlockSpec(memory_space=pltpu.MemorySpace.SMEM),
        ),
        input_output_aliases={0: 0},  # x2d buffer is reused for z2d
        compiler_params=pltpu.CompilerParams(vmem_limit_bytes=vmem_limit),
    )(x2d, w_big, agg, dld32)

    z = z2d.reshape(B, C, H, W)       # free reshape back to NCHW
    return z, logdet[0] + jnp.float32(logdet_init)


def _reference_encode(x_nchw, weights, dlogdets, scale=1.0):
    """Pure-JAX reference mirroring the PyTorch two-pass formulation (correctness check)."""
    B, C, H, W = x_nchw.shape
    x = x_nchw.astype(jnp.float32)
    logdet = jnp.float32(0.0)
    for s in range(weights.shape[0]):
        bias = -jnp.mean(x, axis=(0, 2, 3), keepdims=True)
        var = jnp.mean((x + bias) ** 2, axis=(0, 2, 3), keepdims=True)
        logs = jnp.log(scale / (jnp.sqrt(var) + 1e-6))
        x = (x + bias) * jnp.exp(logs)
        logdet = logdet + jnp.sum(logs) * H * W
        x = jnp.einsum("oc,bchw->bohw", weights[s], x)
        logdet = logdet + dlogdets[s]
    return x, logdet


def make_flownet_params(key, in_channel, block_num=2, step_num=8):
    """Deterministic synthetic parameters: orthogonal 1x1-conv weights (QR of randn)."""
    num_steps = block_num * step_num
    keys = jax.random.split(key, num_steps)
    ws = []
    for k in keys:
        w_init = jax.random.normal(k, (in_channel, in_channel), jnp.float32)
        q, _ = jnp.linalg.qr(w_init)  # mimics torch.qr(torch.randn(...))[0]
        ws.append(q)
    return jnp.stack(ws, axis=0)  # (S, C, C)


if __name__ == "__main__":
    B, C, H, W = 2, 4, 16, 16
    block_num, step_num = 2, 8

    key = jax.random.PRNGKey(0)
    kx, kw = jax.random.split(key)
    x = jax.random.normal(kx, (B, C, H, W), jnp.float32)

    weights = make_flownet_params(kw, C, block_num, step_num)
    # slogdet has no in-kernel Pallas equivalent; precompute (data independent) in glue.
    dlogdets = jnp.stack(
        [jnp.linalg.slogdet(weights[s])[1] * (H * W) for s in range(weights.shape[0])]
    )

    encode = jax.jit(flownet_encode)
    z, logdet = encode(x, weights, dlogdets)
    z = jax.block_until_ready(z)
    logdet = jax.block_until_ready(logdet)

    z_ref, logdet_ref = _reference_encode(x, weights, dlogdets)
    assert jnp.allclose(z, z_ref, atol=1e-3, rtol=1e-3), "z mismatch"
    assert jnp.allclose(logdet, logdet_ref, atol=1e-2, rtol=1e-3), "logdet mismatch"

    print("KERNEL_OK")
</pallas_src>

<mosaic_0001>
module attributes {stable_mosaic.version = 11 : i64} {
  func.func @_flownet_kernel(%arg0: memref<8x256xf32, #tpu.memory_space<vmem>>, %arg1: memref<16x8x8xf32, #tpu.memory_space<vmem>>, %arg2: memref<8x8xf32, #tpu.memory_space<vmem>>, %arg3: memref<16xf32, #tpu.memory_space<smem>>, %arg4: memref<8x256xf32, #tpu.memory_space<vmem>>, %arg5: memref<1xf32, #tpu.memory_space<smem>>) attributes {dimension_semantics = [], scalar_prefetch = 0 : i64, scratch_operands = 0 : i64, tpu.core_type = #tpu.core_type<tc>} {
    %c0 = arith.constant 0 : index
    %c0_0 = arith.constant 0 : index
    %0 = vector.load %arg2[%c0, %c0_0] : memref<8x8xf32, #tpu.memory_space<vmem>>, vector<8x8xf32>
    %c0_1 = arith.constant 0 : index
    %c0_2 = arith.constant 0 : index
    %1 = vector.load %arg0[%c0_1, %c0_2] : memref<8x256xf32, #tpu.memory_space<vmem>>, vector<8x256xf32>
    %2 = arith.mulf %1, %1 : vector<8x256xf32>
    %cst = arith.constant dense<0.000000e+00> : vector<8x256xf32>
    %3 = tpu.matmul %0, %1, %cst {dimension_numbers = #tpu.dot_dimension_numbers<[1], [0], [0], [1], [0, 0, 1, 1], [], []>} : vector<8x8xf32>, vector<8x256xf32>, vector<8x256xf32> -> vector<8x256xf32>
    %cst_3 = arith.constant dense<0.000000e+00> : vector<8xf32>
    %4 = vector.multi_reduction <add>, %3, %cst_3 [1] : vector<8x256xf32> to vector<8xf32>
    %5 = vector.shape_cast %4 : vector<8xf32> to vector<8x1xf32>
    %cst_4 = arith.constant dense<0.000000e+00> : vector<8x256xf32>
    %6 = tpu.matmul %0, %2, %cst_4 {dimension_numbers = #tpu.dot_dimension_numbers<[1], [0], [0], [1], [0, 0, 1, 1], [], []>} : vector<8x8xf32>, vector<8x256xf32>, vector<8x256xf32> -> vector<8x256xf32>
    %cst_5 = arith.constant dense<0.000000e+00> : vector<8xf32>
    %7 = vector.multi_reduction <add>, %6, %cst_5 [1] : vector<8x256xf32> to vector<8xf32>
    %8 = vector.shape_cast %7 : vector<8xf32> to vector<8x1xf32>
    %cst_6 = arith.constant 0.001953125 : f32
    %9 = vector.broadcast %cst_6 : f32 to vector<8x1xf32>
    %10 = arith.mulf %5, %9 : vector<8x1xf32>
    %cst_7 = arith.constant 0.001953125 : f32
    %11 = vector.broadcast %cst_7 : f32 to vector<8x1xf32>
    %12 = arith.mulf %8, %11 : vector<8x1xf32>
    %13 = arith.mulf %10, %10 : vector<8x1xf32>
    %14 = arith.subf %12, %13 : vector<8x1xf32>
    %cst_8 = arith.constant 0.000000e+00 : f32
    %15 = vector.broadcast %cst_8 : f32 to vector<8x1xf32>
    %16 = arith.maximumf %14, %15 : vector<8x1xf32>
    %17 = math.sqrt %16 : vector<8x1xf32>
    %cst_9 = arith.constant 9.99999997E-7 : f32
    %18 = vector.broadcast %cst_9 : f32 to vector<8x1xf32>
    %19 = arith.addf %17, %18 : vector<8x1xf32>
    %cst_10 = arith.constant 1.000000e+00 : f32
    %20 = vector.broadcast %cst_10 : f32 to vector<8x1xf32>
    %21 = arith.divf %20, %19 : vector<8x1xf32>
    %22 = math.log %21 : vector<8x1xf32>
    %23 = math.exp %22 : vector<8x1xf32>
    %24 = vector.broadcast %10 : vector<8x1xf32> to vector<8x256xf32>
    %25 = arith.subf %1, %24 : vector<8x256xf32>
    %26 = vector.broadcast %23 : vector<8x1xf32> to vector<8x256xf32>
    %27 = arith.mulf %25, %26 : vector<8x256xf32>
    %c0_11 = arith.constant 0 : index
    %c0_12 = arith.constant 0 : index
    %c0_13 = arith.constant 0 : index
    %28 = vector.load %arg1[%c0_11, %c0_12, %c0_13] : memref<16x8x8xf32, #tpu.memory_space<vmem>>, vector<1x8x8xf32>
    %29 = vector.shape_cast %28 : vector<1x8x8xf32> to vector<8x8xf32>
    %cst_14 = arith.constant dense<0.000000e+00> : vector<8x256xf32>
    %30 = tpu.matmul %29, %27, %cst_14 {dimension_numbers = #tpu.dot_dimension_numbers<[1], [0], [0], [1], [0, 0, 1, 1], [], []>} : vector<8x8xf32>, vector<8x256xf32>, vector<8x256xf32> -> vector<8x256xf32>
    %c0_15 = arith.constant 0 : index
    %c0_16 = arith.constant 0 : index
    %31 = vector.load %arg4[%c0_15, %c0_16] : memref<8x256xf32, #tpu.memory_space<vmem>>, vector<8x256xf32>
    tpu.vector_store %arg4[%c0_15, %c0_16], %30 {strides = array<i32>} : memref<8x256xf32, #tpu.memory_space<vmem>>, vector<8x256xf32>,
    %32 = vector.shape_cast %22 : vector<8x1xf32> to vector<1x8x1xf32>
    %cst_17 = arith.constant dense<0.000000e+00> : vector<1xf32>
    %33 = vector.multi_reduction <add>, %32, %cst_17 [1, 2] : vector<1x8x1xf32> to vector<1xf32>
    %34 = vector.shape_cast %33 : vector<1xf32> to vector<1x1x1xf32>
    %35 = vector.extract %34[0, 0, 0] : f32 from vector<1x1x1xf32>
    %cst_18 = arith.constant 1.280000e+02 : f32
    %36 = arith.mulf %35, %cst_18 : f32
    %cst_19 = arith.constant 0.000000e+00 : f32
    %37 = arith.addf %cst_19, %36 : f32
    %c0_20 = arith.constant 0 : index
    %38 = memref.load %arg3[%c0_20] : memref<16xf32, #tpu.memory_space<smem>>
    %39 = arith.addf %37, %38 : f32
    %cst_21 = arith.constant 0.001953125 : f32
    %c1_i32 = arith.constant 1 : i32
    %c0_22 = arith.constant 0 : index
    %c0_23 = arith.constant 0 : index
    %40 = vector.load %arg4[%c0_22, %c0_23] : memref<8x256xf32, #tpu.memory_space<vmem>>, vector<8x256xf32>
    %41 = arith.mulf %40, %40 : vector<8x256xf32>
    %cst_24 = arith.constant dense<0.000000e+00> : vector<8x256xf32>
    %42 = tpu.matmul %0, %40, %cst_24 {dimension_numbers = #tpu.dot_dimension_numbers<[1], [0], [0], [1], [0, 0, 1, 1], [], []>} : vector<8x8xf32>, vector<8x256xf32>, vector<8x256xf32> -> vector<8x256xf32>
    %cst_25 = arith.constant dense<0.000000e+00> : vector<8xf32>
    %43 = vector.multi_reduction <add>, %42, %cst_25 [1] : vector<8x256xf32> to vector<8xf32>
    %44 = vector.shape_cast %43 : vector<8xf32> to vector<8x1xf32>
    %cst_26 = arith.constant dense<0.000000e+00> : vector<8x256xf32>
    %45 = tpu.matmul %0, %41, %cst_26 {dimension_numbers = #tpu.dot_dimension_numbers<[1], [0], [0], [1], [0, 0, 1, 1], [], []>} : vector<8x8xf32>, vector<8x256xf32>, vector<8x256xf32> -> vector<8x256xf32>
    %cst_27 = arith.constant dense<0.000000e+00> : vector<8xf32>
    %46 = vector.multi_reduction <add>, %45, %cst_27 [1] : vector<8x256xf32> to vector<8xf32>
    %47 = vector.shape_cast %46 : vector<8xf32> to vector<8x1xf32>
    %48 = vector.broadcast %cst_21 : f32 to vector<8x1xf32>
    %49 = arith.mulf %44, %48 : vector<8x1xf32>
    %50 = vector.broadcast %cst_21 : f32 to vector<8x1xf32>
    %51 = arith.mulf %47, %50 : vector<8x1xf32>
    %52 = arith.mulf %49, %49 : vector<8x1xf32>
    %53 = arith.subf %51, %52 : vector<8x1xf32>
    %cst_28 = arith.constant 0.000000e+00 : f32
    %54 = vector.broadcast %cst_28 : f32 to vector<8x1xf32>
    %55 = arith.maximumf %53, %54 : vector<8x1xf32>
    %56 = math.sqrt %55 : vector<8x1xf32>
    %cst_29 = arith.constant 9.99999997E-7 : f32
    %57 = vector.broadcast %cst_29 : f32 to vector<8x1xf32>
    %58 = arith.addf %56, %57 : vector<8x1xf32>
    %cst_30 = arith.constant 1.000000e+00 : f32
    %59 = vector.broadcast %cst_30 : f32 to vector<8x1xf32>
    %60 = arith.divf %59, %58 : vector<8x1xf32>
    %61 = math.log %60 : vector<8x1xf32>
    %62 = math.exp %61 : vector<8x1xf32>
    %63 = vector.broadcast %49 : vector<8x1xf32> to vector<8x256xf32>
    %64 = arith.subf %40, %63 : vector<8x256xf32>
    %65 = vector.broadcast %62 : vector<8x1xf32> to vector<8x256xf32>
    %66 = arith.mulf %64, %65 : vector<8x256xf32>
    %67 = arith.index_cast %c1_i32 : i32 to index
    %c0_31 = arith.constant 0 : index
    %c0_32 = arith.constant 0 : index
    %68 = vector.load %arg1[%67, %c0_31, %c0_32] : memref<16x8x8xf32, #tpu.memory_space<vmem>>, vector<1x8x8xf32>
    %69 = vector.shape_cast %68 : vector<1x8x8xf32> to vector<8x8xf32>
    %cst_33 = arith.constant dense<0.000000e+00> : vector<8x256xf32>
    %70 = tpu.matmul %69, %66, %cst_33 {dimension_numbers = #tpu.dot_dimension_numbers<[1], [0], [0], [1], [0, 0, 1, 1], [], []>} : vector<8x8xf32>, vector<8x256xf32>, vector<8x256xf32> -> vector<8x256xf32>
    %c0_34 = arith.constant 0 : index
    %c0_35 = arith.constant 0 : index
    %71 = vector.load %arg4[%c0_34, %c0_35] : memref<8x256xf32, #tpu.memory_space<vmem>>, vector<8x256xf32>
    tpu.vector_store %arg4[%c0_34, %c0_35], %70 {strides = array<i32>} : memref<8x256xf32, #tpu.memory_space<vmem>>, vector<8x256xf32>,
    %72 = vector.shape_cast %61 : vector<8x1xf32> to vector<1x8x1xf32>
    %cst_36 = arith.constant dense<0.000000e+00> : vector<1xf32>
    %73 = vector.multi_reduction <add>, %72, %cst_36 [1, 2] : vector<1x8x1xf32> to vector<1xf32>
    %74 = vector.shape_cast %73 : vector<1xf32> to vector<1x1x1xf32>
    %75 = vector.extract %74[0, 0, 0] : f32 from vector<1x1x1xf32>
    %cst_37 = arith.constant 1.280000e+02 : f32
    %76 = arith.mulf %75, %cst_37 : f32
    %77 = arith.addf %39, %76 : f32
    %78 = arith.index_cast %c1_i32 : i32 to index
    %79 = memref.load %arg3[%78] : memref<16xf32, #tpu.memory_space<smem>>
    %80 = arith.addf %77, %79 : f32
    %c2_i32 = arith.constant 2 : i32
    %c0_38 = arith.constant 0 : index
    %c0_39 = arith.constant 0 : index
    %81 = vector.load %arg4[%c0_38, %c0_39] : memref<8x256xf32, #tpu.memory_space<vmem>>, vector<8x256xf32>
    %82 = arith.mulf %81, %81 : vector<8x256xf32>
    %cst_40 = arith.constant dense<0.000000e+00> : vector<8x256xf32>
    %83 = tpu.matmul %0, %81, %cst_40 {dimension_numbers = #tpu.dot_dimension_numbers<[1], [0], [0], [1], [0, 0, 1, 1], [], []>} : vector<8x8xf32>, vector<8x256xf32>, vector<8x256xf32> -> vector<8x256xf32>
    %cst_41 = arith.constant dense<0.000000e+00> : vector<8xf32>
    %84 = vector.multi_reduction <add>, %83, %cst_41 [1] : vector<8x256xf32> to vector<8xf32>
    %85 = vector.shape_cast %84 : vector<8xf32> to vector<8x1xf32>
    %cst_42 = arith.constant dense<0.000000e+00> : vector<8x256xf32>
    %86 = tpu.matmul %0, %82, %cst_42 {dimension_numbers = #tpu.dot_dimension_numbers<[1], [0], [0], [1], [0, 0, 1, 1], [], []>} : vector<8x8xf32>, vector<8x256xf32>, vector<8x256xf32> -> vector<8x256xf32>
    %cst_43 = arith.constant dense<0.000000e+00> : vector<8xf32>
    %87 = vector.multi_reduction <add>, %86, %cst_43 [1] : vector<8x256xf32> to vector<8xf32>
    %88 = vector.shape_cast %87 : vector<8xf32> to vector<8x1xf32>
    %89 = vector.broadcast %cst_21 : f32 to vector<8x1xf32>
    %90 = arith.mulf %85, %89 : vector<8x1xf32>
    %91 = vector.broadcast %cst_21 : f32 to vector<8x1xf32>
    %92 = arith.mulf %88, %91 : vector<8x1xf32>
    %93 = arith.mulf %90, %90 : vector<8x1xf32>
    %94 = arith.subf %92, %93 : vector<8x1xf32>
    %cst_44 = arith.constant 0.000000e+00 : f32
    %95 = vector.broadcast %cst_44 : f32 to vector<8x1xf32>
    %96 = arith.maximumf %94, %95 : vector<8x1xf32>
    %97 = math.sqrt %96 : vector<8x1xf32>
    %cst_45 = arith.constant 9.99999997E-7 : f32
    %98 = vector.broadcast %cst_45 : f32 to vector<8x1xf32>
    %99 = arith.addf %97, %98 : vector<8x1xf32>
    %cst_46 = arith.constant 1.000000e+00 : f32
    %100 = vector.broadcast %cst_46 : f32 to vector<8x1xf32>
    %101 = arith.divf %100, %99 : vector<8x1xf32>
    %102 = math.log %101 : vector<8x1xf32>
    %103 = math.exp %102 : vector<8x1xf32>
    %104 = vector.broadcast %90 : vector<8x1xf32> to vector<8x256xf32>
    %105 = arith.subf %81, %104 : vector<8x256xf32>
    %106 = vector.broadcast %103 : vector<8x1xf32> to vector<8x256xf32>
    %107 = arith.mulf %105, %106 : vector<8x256xf32>
    %108 = arith.index_cast %c2_i32 : i32 to index
    %c0_47 = arith.constant 0 : index
    %c0_48 = arith.constant 0 : index
    %109 = vector.load %arg1[%108, %c0_47, %c0_48] : memref<16x8x8xf32, #tpu.memory_space<vmem>>, vector<1x8x8xf32>
    %110 = vector.shape_cast %109 : vector<1x8x8xf32> to vector<8x8xf32>
    %cst_49 = arith.constant dense<0.000000e+00> : vector<8x256xf32>
    %111 = tpu.matmul %110, %107, %cst_49 {dimension_numbers = #tpu.dot_dimension_numbers<[1], [0], [0], [1], [0, 0, 1, 1], [], []>} : vector<8x8xf32>, vector<8x256xf32>, vector<8x256xf32> -> vector<8x256xf32>
    %c0_50 = arith.constant 0 : index
    %c0_51 = arith.constant 0 : index
    %112 = vector.load %arg4[%c0_50, %c0_51] : memref<8x256xf32, #tpu.memory_space<vmem>>, vector<8x256xf32>
    tpu.vector_store %arg4[%c0_50, %c0_51], %111 {strides = array<i32>} : memref<8x256xf32, #tpu.memory_space<vmem>>, vector<8x256xf32>,
    %113 = vector.shape_cast %102 : vector<8x1xf32> to vector<1x8x1xf32>
    %cst_52 = arith.constant dense<0.000000e+00> : vector<1xf32>
    %114 = vector.multi_reduction <add>, %113, %cst_52 [1, 2] : vector<1x8x1xf32> to vector<1xf32>
    %115 = vector.shape_cast %114 : vector<1xf32> to vector<1x1x1xf32>
    %116 = vector.extract %115[0, 0, 0] : f32 from vector<1x1x1xf32>
    %cst_53 = arith.constant 1.280000e+02 : f32
    %117 = arith.mulf %116, %cst_53 : f32
    %118 = arith.addf %80, %117 : f32
    %119 = arith.index_cast %c2_i32 : i32 to index
    %120 = memref.load %arg3[%119] : memref<16xf32, #tpu.memory_space<smem>>
    %121 = arith.addf %118, %120 : f32
    %c3_i32 = arith.constant 3 : i32
    %c0_54 = arith.constant 0 : index
    %c0_55 = arith.constant 0 : index
    %122 = vector.load %arg4[%c0_54, %c0_55] : memref<8x256xf32, #tpu.memory_space<vmem>>, vector<8x256xf32>
    %123 = arith.mulf %122, %122 : vector<8x256xf32>
    %cst_56 = arith.constant dense<0.000000e+00> : vector<8x256xf32>
    %124 = tpu.matmul %0, %122, %cst_56 {dimension_numbers = #tpu.dot_dimension_numbers<[1], [0], [0], [1], [0, 0, 1, 1], [], []>} : vector<8x8xf32>, vector<8x256xf32>, vector<8x256xf32> -> vector<8x256xf32>
    %cst_57 = arith.constant dense<0.000000e+00> : vector<8xf32>
    %125 = vector.multi_reduction <add>, %124, %cst_57 [1] : vector<8x256xf32> to vector<8xf32>
    %126 = vector.shape_cast %125 : vector<8xf32> to vector<8x1xf32>
    %cst_58 = arith.constant dense<0.000000e+00> : vector<8x256xf32>
    %127 = tpu.matmul %0, %123, %cst_58 {dimension_numbers = #tpu.dot_dimension_numbers<[1], [0], [0], [1], [0, 0, 1, 1], [], []>} : vector<8x8xf32>, vector<8x256xf32>, vector<8x256xf32> -> vector<8x256xf32>
    %cst_59 = arith.constant dense<0.000000e+00> : vector<8xf32>
    %128 = vector.multi_reduction <add>, %127, %cst_59 [1] : vector<8x256xf32> to vector<8xf32>
    %129 = vector.shape_cast %128 : vector<8xf32> to vector<8x1xf32>
    %130 = vector.broadcast %cst_21 : f32 to vector<8x1xf32>
    %131 = arith.mulf %126, %130 : vector<8x1xf32>
    %132 = vector.broadcast %cst_21 : f32 to vector<8x1xf32>
    %133 = arith.mulf %129, %132 : vector<8x1xf32>
    %134 = arith.mulf %131, %131 : vector<8x1xf32>
    %135 = arith.subf %133, %134 : vector<8x1xf32>
    %cst_60 = arith.constant 0.000000e+00 : f32
    %136 = vector.broadcast %cst_60 : f32 to vector<8x1xf32>
    %137 = arith.maximumf %135, %136 : vector<8x1xf32>
    %138 = math.sqrt %137 : vector<8x1xf32>
    %cst_61 = arith.constant 9.99999997E-7 : f32
    %139 = vector.broadcast %cst_61 : f32 to vector<8x1xf32>
    %140 = arith.addf %138, %139 : vector<8x1xf32>
    %cst_62 = arith.constant 1.000000e+00 : f32
    %141 = vector.broadcast %cst_62 : f32 to vector<8x1xf32>
    %142 = arith.divf %141, %140 : vector<8x1xf32>
    %143 = math.log %142 : vector<8x1xf32>
    %144 = math.exp %143 : vector<8x1xf32>
    %145 = vector.broadcast %131 : vector<8x1xf32> to vector<8x256xf32>
    %146 = arith.subf %122, %145 : vector<8x256xf32>
    %147 = vector.broadcast %144 : vector<8x1xf32> to vector<8x256xf32>
    %148 = arith.mulf %146, %147 : vector<8x256xf32>
    %149 = arith.index_cast %c3_i32 : i32 to index
    %c0_63 = arith.constant 0 : index
    %c0_64 = arith.constant 0 : index
    %150 = vector.load %arg1[%149, %c0_63, %c0_64] : memref<16x8x8xf32, #tpu.memory_space<vmem>>, vector<1x8x8xf32>
    %151 = vector.shape_cast %150 : vector<1x8x8xf32> to vector<8x8xf32>
    %cst_65 = arith.constant dense<0.000000e+00> : vector<8x256xf32>
    %152 = tpu.matmul %151, %148, %cst_65 {dimension_numbers = #tpu.dot_dimension_numbers<[1], [0], [0], [1], [0, 0, 1, 1], [], []>} : vector<8x8xf32>, vector<8x256xf32>, vector<8x256xf32> -> vector<8x256xf32>
    %c0_66 = arith.constant 0 : index
    %c0_67 = arith.constant 0 : index
    %153 = vector.load %arg4[%c0_66, %c0_67] : memref<8x256xf32, #tpu.memory_space<vmem>>, vector<8x256xf32>
    tpu.vector_store %arg4[%c0_66, %c0_67], %152 {strides = array<i32>} : memref<8x256xf32, #tpu.memory_space<vmem>>, vector<8x256xf32>,
    %154 = vector.shape_cast %143 : vector<8x1xf32> to vector<1x8x1xf32>
    %cst_68 = arith.constant dense<0.000000e+00> : vector<1xf32>
    %155 = vector.multi_reduction <add>, %154, %cst_68 [1, 2] : vector<1x8x1xf32> to vector<1xf32>
    %156 = vector.shape_cast %155 : vector<1xf32> to vector<1x1x1xf32>
    %157 = vector.extract %156[0, 0, 0] : f32 from vector<1x1x1xf32>
    %cst_69 = arith.constant 1.280000e+02 : f32
    %158 = arith.mulf %157, %cst_69 : f32
    %159 = arith.addf %121, %158 : f32
    %160 = arith.index_cast %c3_i32 : i32 to index
    %161 = memref.load %arg3[%160] : memref<16xf32, #tpu.memory_space<smem>>
    %162 = arith.addf %159, %161 : f32
    %c4_i32 = arith.constant 4 : i32
    %c0_70 = arith.constant 0 : index
    %c0_71 = arith.constant 0 : index
    %163 = vector.load %arg4[%c0_70, %c0_71] : memref<8x256xf32, #tpu.memory_space<vmem>>, vector<8x256xf32>
    %164 = arith.mulf %163, %163 : vector<8x256xf32>
    %cst_72 = arith.constant dense<0.000000e+00> : vector<8x256xf32>
    %165 = tpu.matmul %0, %163, %cst_72 {dimension_numbers = #tpu.dot_dimension_numbers<[1], [0], [0], [1], [0, 0, 1, 1], [], []>} : vector<8x8xf32>, vector<8x256xf32>, vector<8x256xf32> -> vector<8x256xf32>
    %cst_73 = arith.constant dense<0.000000e+00> : vector<8xf32>
    %166 = vector.multi_reduction <add>, %165, %cst_73 [1] : vector<8x256xf32> to vector<8xf32>
    %167 = vector.shape_cast %166 : vector<8xf32> to vector<8x1xf32>
    %cst_74 = arith.constant dense<0.000000e+00> : vector<8x256xf32>
    %168 = tpu.matmul %0, %164, %cst_74 {dimension_numbers = #tpu.dot_dimension_numbers<[1], [0], [0], [1], [0, 0, 1, 1], [], []>} : vector<8x8xf32>, vector<8x256xf32>, vector<8x256xf32> -> vector<8x256xf32>
    %cst_75 = arith.constant dense<0.000000e+00> : vector<8xf32>
    %169 = vector.multi_reduction <add>, %168, %cst_75 [1] : vector<8x256xf32> to vector<8xf32>
    %170 = vector.shape_cast %169 : vector<8xf32> to vector<8x1xf32>
    %171 = vector.broadcast %cst_21 : f32 to vector<8x1xf32>
    %172 = arith.mulf %167, %171 : vector<8x1xf32>
    %173 = vector.broadcast %cst_21 : f32 to vector<8x1xf32>
    %174 = arith.mulf %170, %173 : vector<8x1xf32>
    %175 = arith.mulf %172, %172 : vector<8x1xf32>
    %176 = arith.subf %174, %175 : vector<8x1xf32>
    %cst_76 = arith.constant 0.000000e+00 : f32
    %177 = vector.broadcast %cst_76 : f32 to vector<8x1xf32>
    %178 = arith.maximumf %176, %177 : vector<8x1xf32>
    %179 = math.sqrt %178 : vector<8x1xf32>
    %cst_77 = arith.constant 9.99999997E-7 : f32
    %180 = vector.broadcast %cst_77 : f32 to vector<8x1xf32>
    %181 = arith.addf %179, %180 : vector<8x1xf32>
    %cst_78 = arith.constant 1.000000e+00 : f32
    %182 = vector.broadcast %cst_78 : f32 to vector<8x1xf32>
    %183 = arith.divf %182, %181 : vector<8x1xf32>
    %184 = math.log %183 : vector<8x1xf32>
    %185 = math.exp %184 : vector<8x1xf32>
    %186 = vector.broadcast %172 : vector<8x1xf32> to vector<8x256xf32>
    %187 = arith.subf %163, %186 : vector<8x256xf32>
    %188 = vector.broadcast %185 : vector<8x1xf32> to vector<8x256xf32>
    %189 = arith.mulf %187, %188 : vector<8x256xf32>
    %190 = arith.index_cast %c4_i32 : i32 to index
    %c0_79 = arith.constant 0 : index
    %c0_80 = arith.constant 0 : index
    %191 = vector.load %arg1[%190, %c0_79, %c0_80] : memref<16x8x8xf32, #tpu.memory_space<vmem>>, vector<1x8x8xf32>
    %192 = vector.shape_cast %191 : vector<1x8x8xf32> to vector<8x8xf32>
    %cst_81 = arith.constant dense<0.000000e+00> : vector<8x256xf32>
    %193 = tpu.matmul %192, %189, %cst_81 {dimension_numbers = #tpu.dot_dimension_numbers<[1], [0], [0], [1], [0, 0, 1, 1], [], []>} : vector<8x8xf32>, vector<8x256xf32>, vector<8x256xf32> -> vector<8x256xf32>
    %c0_82 = arith.constant 0 : index
    %c0_83 = arith.constant 0 : index
    %194 = vector.load %arg4[%c0_82, %c0_83] : memref<8x256xf32, #tpu.memory_space<vmem>>, vector<8x256xf32>
    tpu.vector_store %arg4[%c0_82, %c0_83], %193 {strides = array<i32>} : memref<8x256xf32, #tpu.memory_space<vmem>>, vector<8x256xf32>,
    %195 = vector.shape_cast %184 : vector<8x1xf32> to vector<1x8x1xf32>
    %cst_84 = arith.constant dense<0.000000e+00> : vector<1xf32>
    %196 = vector.multi_reduction <add>, %195, %cst_84 [1, 2] : vector<1x8x1xf32> to vector<1xf32>
    %197 = vector.shape_cast %196 : vector<1xf32> to vector<1x1x1xf32>
    %198 = vector.extract %197[0, 0, 0] : f32 from vector<1x1x1xf32>
    %cst_85 = arith.constant 1.280000e+02 : f32
    %199 = arith.mulf %198, %cst_85 : f32
    %200 = arith.addf %162, %199 : f32
    %201 = arith.index_cast %c4_i32 : i32 to index
    %202 = memref.load %arg3[%201] : memref<16xf32, #tpu.memory_space<smem>>
    %203 = arith.addf %200, %202 : f32
    %c5_i32 = arith.constant 5 : i32
    %c0_86 = arith.constant 0 : index
    %c0_87 = arith.constant 0 : index
    %204 = vector.load %arg4[%c0_86, %c0_87] : memref<8x256xf32, #tpu.memory_space<vmem>>, vector<8x256xf32>
    %205 = arith.mulf %204, %204 : vector<8x256xf32>
    %cst_88 = arith.constant dense<0.000000e+00> : vector<8x256xf32>
    %206 = tpu.matmul %0, %204, %cst_88 {dimension_numbers = #tpu.dot_dimension_numbers<[1], [0], [0], [1], [0, 0, 1, 1], [], []>} : vector<8x8xf32>, vector<8x256xf32>, vector<8x256xf32> -> vector<8x256xf32>
    %cst_89 = arith.constant dense<0.000000e+00> : vector<8xf32>
    %207 = vector.multi_reduction <add>, %206, %cst_89 [1] : vector<8x256xf32> to vector<8xf32>
    %208 = vector.shape_cast %207 : vector<8xf32> to vector<8x1xf32>
    %cst_90 = arith.constant dense<0.000000e+00> : vector<8x256xf32>
    %209 = tpu.matmul %0, %205, %cst_90 {dimension_numbers = #tpu.dot_dimension_numbers<[1], [0], [0], [1], [0, 0, 1, 1], [], []>} : vector<8x8xf32>, vector<8x256xf32>, vector<8x256xf32> -> vector<8x256xf32>
    %cst_91 = arith.constant dense<0.000000e+00> : vector<8xf32>
    %210 = vector.multi_reduction <add>, %209, %cst_91 [1] : vector<8x256xf32> to vector<8xf32>
    %211 = vector.shape_cast %210 : vector<8xf32> to vector<8x1xf32>
    %212 = vector.broadcast %cst_21 : f32 to vector<8x1xf32>
    %213 = arith.mulf %208, %212 : vector<8x1xf32>
    %214 = vector.broadcast %cst_21 : f32 to vector<8x1xf32>
    %215 = arith.mulf %211, %214 : vector<8x1xf32>
    %216 = arith.mulf %213, %213 : vector<8x1xf32>
    %217 = arith.subf %215, %216 : vector<8x1xf32>
    %cst_92 = arith.constant 0.000000e+00 : f32
    %218 = vector.broadcast %cst_92 : f32 to vector<8x1xf32>
    %219 = arith.maximumf %217, %218 : vector<8x1xf32>
    %220 = math.sqrt %219 : vector<8x1xf32>
    %cst_93 = arith.constant 9.99999997E-7 : f32
    %221 = vector.broadcast %cst_93 : f32 to vector<8x1xf32>
    %222 = arith.addf %220, %221 : vector<8x1xf32>
    %cst_94 = arith.constant 1.000000e+00 : f32
    %223 = vector.broadcast %cst_94 : f32 to vector<8x1xf32>
    %224 = arith.divf %223, %222 : vector<8x1xf32>
    %225 = math.log %224 : vector<8x1xf32>
    %226 = math.exp %225 : vector<8x1xf32>
    %227 = vector.broadcast %213 : vector<8x1xf32> to vector<8x256xf32>
    %228 = arith.subf %204, %227 : vector<8x256xf32>
    %229 = vector.broadcast %226 : vector<8x1xf32> to vector<8x256xf32>
    %230 = arith.mulf %228, %229 : vector<8x256xf32>
    %231 = arith.index_cast %c5_i32 : i32 to index
    %c0_95 = arith.constant 0 : index
    %c0_96 = arith.constant 0 : index
    %232 = vector.load %arg1[%231, %c0_95, %c0_96] : memref<16x8x8xf32, #tpu.memory_space<vmem>>, vector<1x8x8xf32>
    %233 = vector.shape_cast %232 : vector<1x8x8xf32> to vector<8x8xf32>
    %cst_97 = arith.constant dense<0.000000e+00> : vector<8x256xf32>
    %234 = tpu.matmul %233, %230, %cst_97 {dimension_numbers = #tpu.dot_dimension_numbers<[1], [0], [0], [1], [0, 0, 1, 1], [], []>} : vector<8x8xf32>, vector<8x256xf32>, vector<8x256xf32> -> vector<8x256xf32>
    %c0_98 = arith.constant 0 : index
    %c0_99 = arith.constant 0 : index
    %235 = vector.load %arg4[%c0_98, %c0_99] : memref<8x256xf32, #tpu.memory_space<vmem>>, vector<8x256xf32>
    tpu.vector_store %arg4[%c0_98, %c0_99], %234 {strides = array<i32>} : memref<8x256xf32, #tpu.memory_space<vmem>>, vector<8x256xf32>,
    %236 = vector.shape_cast %225 : vector<8x1xf32> to vector<1x8x1xf32>
    %cst_100 = arith.constant dense<0.000000e+00> : vector<1xf32>
    %237 = vector.multi_reduction <add>, %236, %cst_100 [1, 2] : vector<1x8x1xf32> to vector<1xf32>
    %238 = vector.shape_cast %237 : vector<1xf32> to vector<1x1x1xf32>
    %239 = vector.extract %238[0, 0, 0] : f32 from vector<1x1x1xf32>
    %cst_101 = arith.constant 1.280000e+02 : f32
    %240 = arith.mulf %239, %cst_101 : f32
    %241 = arith.addf %203, %240 : f32
    %242 = arith.index_cast %c5_i32 : i32 to index
    %243 = memref.load %arg3[%242] : memref<16xf32, #tpu.memory_space<smem>>
    %244 = arith.addf %241, %243 : f32
    %c6_i32 = arith.constant 6 : i32
    %c0_102 = arith.constant 0 : index
    %c0_103 = arith.constant 0 : index
    %245 = vector.load %arg4[%c0_102, %c0_103] : memref<8x256xf32, #tpu.memory_space<vmem>>, vector<8x256xf32>
    %246 = arith.mulf %245, %245 : vector<8x256xf32>
    %cst_104 = arith.constant dense<0.000000e+00> : vector<8x256xf32>
    %247 = tpu.matmul %0, %245, %cst_104 {dimension_numbers = #tpu.dot_dimension_numbers<[1], [0], [0], [1], [0, 0, 1, 1], [], []>} : vector<8x8xf32>, vector<8x256xf32>, vector<8x256xf32> -> vector<8x256xf32>
    %cst_105 = arith.constant dense<0.000000e+00> : vector<8xf32>
    %248 = vector.multi_reduction <add>, %247, %cst_105 [1] : vector<8x256xf32> to vector<8xf32>
    %249 = vector.shape_cast %248 : vector<8xf32> to vector<8x1xf32>
    %cst_106 = arith.constant dense<0.000000e+00> : vector<8x256xf32>
    %250 = tpu.matmul %0, %246, %cst_106 {dimension_numbers = #tpu.dot_dimension_numbers<[1], [0], [0], [1], [0, 0, 1, 1], [], []>} : vector<8x8xf32>, vector<8x256xf32>, vector<8x256xf32> -> vector<8x256xf32>
    %cst_107 = arith.constant dense<0.000000e+00> : vector<8xf32>
    %251 = vector.multi_reduction <add>, %250, %cst_107 [1] : vector<8x256xf32> to vector<8xf32>
    %252 = vector.shape_cast %251 : vector<8xf32> to vector<8x1xf32>
    %253 = vector.broadcast %cst_21 : f32 to vector<8x1xf32>
    %254 = arith.mulf %249, %253 : vector<8x1xf32>
    %255 = vector.broadcast %cst_21 : f32 to vector<8x1xf32>
    %256 = arith.mulf %252, %255 : vector<8x1xf32>
    %257 = arith.mulf %254, %254 : vector<8x1xf32>
    %258 = arith.subf %256, %257 : vector<8x1xf32>
    %cst_108 = arith.constant 0.000000e+00 : f32
    %259 = vector.broadcast %cst_108 : f32 to vector<8x1xf32>
    %260 = arith.maximumf %258, %259 : vector<8x1xf32>
    %261 = math.sqrt %260 : vector<8x1xf32>
    %cst_109 = arith.constant 9.99999997E-7 : f32
    %262 = vector.broadcast %cst_109 : f32 to vector<8x1xf32>
    %263 = arith.addf %261, %262 : vector<8x1xf32>
    %cst_110 = arith.constant 1.000000e+00 : f32
    %264 = vector.broadcast %cst_110 : f32 to vector<8x1xf32>
    %265 = arith.divf %264, %263 : vector<8x1xf32>
    %266 = math.log %265 : vector<8x1xf32>
    %267 = math.exp %266 : vector<8x1xf32>
    %268 = vector.broadcast %254 : vector<8x1xf32> to vector<8x256xf32>
    %269 = arith.subf %245, %268 : vector<8x256xf32>
    %270 = vector.broadcast %267 : vector<8x1xf32> to vector<8x256xf32>
    %271 = arith.mulf %269, %270 : vector<8x256xf32>
    %272 = arith.index_cast %c6_i32 : i32 to index
    %c0_111 = arith.constant 0 : index
    %c0_112 = arith.constant 0 : index
    %273 = vector.load %arg1[%272, %c0_111, %c0_112] : memref<16x8x8xf32, #tpu.memory_space<vmem>>, vector<1x8x8xf32>
    %274 = vector.shape_cast %273 : vector<1x8x8xf32> to vector<8x8xf32>
    %cst_113 = arith.constant dense<0.000000e+00> : vector<8x256xf32>
    %275 = tpu.matmul %274, %271, %cst_113 {dimension_numbers = #tpu.dot_dimension_numbers<[1], [0], [0], [1], [0, 0, 1, 1], [], []>} : vector<8x8xf32>, vector<8x256xf32>, vector<8x256xf32> -> vector<8x256xf32>
    %c0_114 = arith.constant 0 : index
    %c0_115 = arith.constant 0 : index
    %276 = vector.load %arg4[%c0_114, %c0_115] : memref<8x256xf32, #tpu.memory_space<vmem>>, vector<8x256xf32>
    tpu.vector_store %arg4[%c0_114, %c0_115], %275 {strides = array<i32>} : memref<8x256xf32, #tpu.memory_space<vmem>>, vector<8x256xf32>,
    %277 = vector.shape_cast %266 : vector<8x1xf32> to vector<1x8x1xf32>
    %cst_116 = arith.constant dense<0.000000e+00> : vector<1xf32>
    %278 = vector.multi_reduction <add>, %277, %cst_116 [1, 2] : vector<1x8x1xf32> to vector<1xf32>
    %279 = vector.shape_cast %278 : vector<1xf32> to vector<1x1x1xf32>
    %280 = vector.extract %279[0, 0, 0] : f32 from vector<1x1x1xf32>
    %cst_117 = arith.constant 1.280000e+02 : f32
    %281 = arith.mulf %280, %cst_117 : f32
    %282 = arith.addf %244, %281 : f32
    %283 = arith.index_cast %c6_i32 : i32 to index
    %284 = memref.load %arg3[%283] : memref<16xf32, #tpu.memory_space<smem>>
    %285 = arith.addf %282, %284 : f32
    %c7_i32 = arith.constant 7 : i32
    %c0_118 = arith.constant 0 : index
    %c0_119 = arith.constant 0 : index
    %286 = vector.load %arg4[%c0_118, %c0_119] : memref<8x256xf32, #tpu.memory_space<vmem>>, vector<8x256xf32>
    %287 = arith.mulf %286, %286 : vector<8x256xf32>
    %cst_120 = arith.constant dense<0.000000e+00> : vector<8x256xf32>
    %288 = tpu.matmul %0, %286, %cst_120 {dimension_numbers = #tpu.dot_dimension_numbers<[1], [0], [0], [1], [0, 0, 1, 1], [], []>} : vector<8x8xf32>, vector<8x256xf32>, vector<8x256xf32> -> vector<8x256xf32>
    %cst_121 = arith.constant dense<0.000000e+00> : vector<8xf32>
    %289 = vector.multi_reduction <add>, %288, %cst_121 [1] : vector<8x256xf32> to vector<8xf32>
    %290 = vector.shape_cast %289 : vector<8xf32> to vector<8x1xf32>
    %cst_122 = arith.constant dense<0.000000e+00> : vector<8x256xf32>
    %291 = tpu.matmul %0, %287, %cst_122 {dimension_numbers = #tpu.dot_dimension_numbers<[1], [0], [0], [1], [0, 0, 1, 1], [], []>} : vector<8x8xf32>, vector<8x256xf32>, vector<8x256xf32> -> vector<8x256xf32>
    %cst_123 = arith.constant dense<0.000000e+00> : vector<8xf32>
    %292 = vector.multi_reduction <add>, %291, %cst_123 [1] : vector<8x256xf32> to vector<8xf32>
    %293 = vector.shape_cast %292 : vector<8xf32> to vector<8x1xf32>
    %294 = vector.broadcast %cst_21 : f32 to vector<8x1xf32>
    %295 = arith.mulf %290, %294 : vector<8x1xf32>
    %296 = vector.broadcast %cst_21 : f32 to vector<8x1xf32>
    %297 = arith.mulf %293, %296 : vector<8x1xf32>
    %298 = arith.mulf %295, %295 : vector<8x1xf32>
    %299 = arith.subf %297, %298 : vector<8x1xf32>
    %cst_124 = arith.constant 0.000000e+00 : f32
    %300 = vector.broadcast %cst_124 : f32 to vector<8x1xf32>
    %301 = arith.maximumf %299, %300 : vector<8x1xf32>
    %302 = math.sqrt %301 : vector<8x1xf32>
    %cst_125 = arith.constant 9.99999997E-7 : f32
    %303 = vector.broadcast %cst_125 : f32 to vector<8x1xf32>
    %304 = arith.addf %302, %303 : vector<8x1xf32>
    %cst_126 = arith.constant 1.000000e+00 : f32
    %305 = vector.broadcast %cst_126 : f32 to vector<8x1xf32>
    %306 = arith.divf %305, %304 : vector<8x1xf32>
    %307 = math.log %306 : vector<8x1xf32>
    %308 = math.exp %307 : vector<8x1xf32>
    %309 = vector.broadcast %295 : vector<8x1xf32> to vector<8x256xf32>
    %310 = arith.subf %286, %309 : vector<8x256xf32>
    %311 = vector.broadcast %308 : vector<8x1xf32> to vector<8x256xf32>
    %312 = arith.mulf %310, %311 : vector<8x256xf32>
    %313 = arith.index_cast %c7_i32 : i32 to index
    %c0_127 = arith.constant 0 : index
    %c0_128 = arith.constant 0 : index
    %314 = vector.load %arg1[%313, %c0_127, %c0_128] : memref<16x8x8xf32, #tpu.memory_space<vmem>>, vector<1x8x8xf32>
    %315 = vector.shape_cast %314 : vector<1x8x8xf32> to vector<8x8xf32>
    %cst_129 = arith.constant dense<0.000000e+00> : vector<8x256xf32>
    %316 = tpu.matmul %315, %312, %cst_129 {dimension_numbers = #tpu.dot_dimension_numbers<[1], [0], [0], [1], [0, 0, 1, 1], [], []>} : vector<8x8xf32>, vector<8x256xf32>, vector<8x256xf32> -> vector<8x256xf32>
    %c0_130 = arith.constant 0 : index
    %c0_131 = arith.constant 0 : index
    %317 = vector.load %arg4[%c0_130, %c0_131] : memref<8x256xf32, #tpu.memory_space<vmem>>, vector<8x256xf32>
    tpu.vector_store %arg4[%c0_130, %c0_131], %316 {strides = array<i32>} : memref<8x256xf32, #tpu.memory_space<vmem>>, vector<8x256xf32>,
    %318 = vector.shape_cast %307 : vector<8x1xf32> to vector<1x8x1xf32>
    %cst_132 = arith.constant dense<0.000000e+00> : vector<1xf32>
    %319 = vector.multi_reduction <add>, %318, %cst_132 [1, 2] : vector<1x8x1xf32> to vector<1xf32>
    %320 = vector.shape_cast %319 : vector<1xf32> to vector<1x1x1xf32>
    %321 = vector.extract %320[0, 0, 0] : f32 from vector<1x1x1xf32>
    %cst_133 = arith.constant 1.280000e+02 : f32
    %322 = arith.mulf %321, %cst_133 : f32
    %323 = arith.addf %285, %322 : f32
    %324 = arith.index_cast %c7_i32 : i32 to index
    %325 = memref.load %arg3[%324] : memref<16xf32, #tpu.memory_space<smem>>
    %326 = arith.addf %323, %325 : f32
    %c8_i32 = arith.constant 8 : i32
    %c0_134 = arith.constant 0 : index
    %c0_135 = arith.constant 0 : index
    %327 = vector.load %arg4[%c0_134, %c0_135] : memref<8x256xf32, #tpu.memory_space<vmem>>, vector<8x256xf32>
    %328 = arith.mulf %327, %327 : vector<8x256xf32>
    %cst_136 = arith.constant dense<0.000000e+00> : vector<8x256xf32>
    %329 = tpu.matmul %0, %327, %cst_136 {dimension_numbers = #tpu.dot_dimension_numbers<[1], [0], [0], [1], [0, 0, 1, 1], [], []>} : vector<8x8xf32>, vector<8x256xf32>, vector<8x256xf32> -> vector<8x256xf32>
    %cst_137 = arith.constant dense<0.000000e+00> : vector<8xf32>
    %330 = vector.multi_reduction <add>, %329, %cst_137 [1] : vector<8x256xf32> to vector<8xf32>
    %331 = vector.shape_cast %330 : vector<8xf32> to vector<8x1xf32>
    %cst_138 = arith.constant dense<0.000000e+00> : vector<8x256xf32>
    %332 = tpu.matmul %0, %328, %cst_138 {dimension_numbers = #tpu.dot_dimension_numbers<[1], [0], [0], [1], [0, 0, 1, 1], [], []>} : vector<8x8xf32>, vector<8x256xf32>, vector<8x256xf32> -> vector<8x256xf32>
    %cst_139 = arith.constant dense<0.000000e+00> : vector<8xf32>
    %333 = vector.multi_reduction <add>, %332, %cst_139 [1] : vector<8x256xf32> to vector<8xf32>
    %334 = vector.shape_cast %333 : vector<8xf32> to vector<8x1xf32>
    %335 = vector.broadcast %cst_21 : f32 to vector<8x1xf32>
    %336 = arith.mulf %331, %335 : vector<8x1xf32>
    %337 = vector.broadcast %cst_21 : f32 to vector<8x1xf32>
    %338 = arith.mulf %334, %337 : vector<8x1xf32>
    %339 = arith.mulf %336, %336 : vector<8x1xf32>
    %340 = arith.subf %338, %339 : vector<8x1xf32>
    %cst_140 = arith.constant 0.000000e+00 : f32
    %341 = vector.broadcast %cst_140 : f32 to vector<8x1xf32>
    %342 = arith.maximumf %340, %341 : vector<8x1xf32>
    %343 = math.sqrt %342 : vector<8x1xf32>
    %cst_141 = arith.constant 9.99999997E-7 : f32
    %344 = vector.broadcast %cst_141 : f32 to vector<8x1xf32>
    %345 = arith.addf %343, %344 : vector<8x1xf32>
    %cst_142 = arith.constant 1.000000e+00 : f32
    %346 = vector.broadcast %cst_142 : f32 to vector<8x1xf32>
    %347 = arith.divf %346, %345 : vector<8x1xf32>
    %348 = math.log %347 : vector<8x1xf32>
    %349 = math.exp %348 : vector<8x1xf32>
    %350 = vector.broadcast %336 : vector<8x1xf32> to vector<8x256xf32>
    %351 = arith.subf %327, %350 : vector<8x256xf32>
    %352 = vector.broadcast %349 : vector<8x1xf32> to vector<8x256xf32>
    %353 = arith.mulf %351, %352 : vector<8x256xf32>
    %354 = arith.index_cast %c8_i32 : i32 to index
    %c0_143 = arith.constant 0 : index
    %c0_144 = arith.constant 0 : index
    %355 = vector.load %arg1[%354, %c0_143, %c0_144] : memref<16x8x8xf32, #tpu.memory_space<vmem>>, vector<1x8x8xf32>
    %356 = vector.shape_cast %355 : vector<1x8x8xf32> to vector<8x8xf32>
    %cst_145 = arith.constant dense<0.000000e+00> : vector<8x256xf32>
    %357 = tpu.matmul %356, %353, %cst_145 {dimension_numbers = #tpu.dot_dimension_numbers<[1], [0], [0], [1], [0, 0, 1, 1], [], []>} : vector<8x8xf32>, vector<8x256xf32>, vector<8x256xf32> -> vector<8x256xf32>
    %c0_146 = arith.constant 0 : index
    %c0_147 = arith.constant 0 : index
    %358 = vector.load %arg4[%c0_146, %c0_147] : memref<8x256xf32, #tpu.memory_space<vmem>>, vector<8x256xf32>
    tpu.vector_store %arg4[%c0_146, %c0_147], %357 {strides = array<i32>} : memref<8x256xf32, #tpu.memory_space<vmem>>, vector<8x256xf32>,
    %359 = vector.shape_cast %348 : vector<8x1xf32> to vector<1x8x1xf32>
    %cst_148 = arith.constant dense<0.000000e+00> : vector<1xf32>
    %360 = vector.multi_reduction <add>, %359, %cst_148 [1, 2] : vector<1x8x1xf32> to vector<1xf32>
    %361 = vector.shape_cast %360 : vector<1xf32> to vector<1x1x1xf32>
    %362 = vector.extract %361[0, 0, 0] : f32 from vector<1x1x1xf32>
    %cst_149 = arith.constant 1.280000e+02 : f32
    %363 = arith.mulf %362, %cst_149 : f32
    %364 = arith.addf %326, %363 : f32
    %365 = arith.index_cast %c8_i32 : i32 to index
    %366 = memref.load %arg3[%365] : memref<16xf32, #tpu.memory_space<smem>>
    %367 = arith.addf %364, %366 : f32
    %c9_i32 = arith.constant 9 : i32
    %c0_150 = arith.constant 0 : index
    %c0_151 = arith.constant 0 : index
    %368 = vector.load %arg4[%c0_150, %c0_151] : memref<8x256xf32, #tpu.memory_space<vmem>>, vector<8x256xf32>
    %369 = arith.mulf %368, %368 : vector<8x256xf32>
    %cst_152 = arith.constant dense<0.000000e+00> : vector<8x256xf32>
    %370 = tpu.matmul %0, %368, %cst_152 {dimension_numbers = #tpu.dot_dimension_numbers<[1], [0], [0], [1], [0, 0, 1, 1], [], []>} : vector<8x8xf32>, vector<8x256xf32>, vector<8x256xf32> -> vector<8x256xf32>
    %cst_153 = arith.constant dense<0.000000e+00> : vector<8xf32>
    %371 = vector.multi_reduction <add>, %370, %cst_153 [1] : vector<8x256xf32> to vector<8xf32>
    %372 = vector.shape_cast %371 : vector<8xf32> to vector<8x1xf32>
    %cst_154 = arith.constant dense<0.000000e+00> : vector<8x256xf32>
    %373 = tpu.matmul %0, %369, %cst_154 {dimension_numbers = #tpu.dot_dimension_numbers<[1], [0], [0], [1], [0, 0, 1, 1], [], []>} : vector<8x8xf32>, vector<8x256xf32>, vector<8x256xf32> -> vector<8x256xf32>
    %cst_155 = arith.constant dense<0.000000e+00> : vector<8xf32>
    %374 = vector.multi_reduction <add>, %373, %cst_155 [1] : vector<8x256xf32> to vector<8xf32>
    %375 = vector.shape_cast %374 : vector<8xf32> to vector<8x1xf32>
    %376 = vector.broadcast %cst_21 : f32 to vector<8x1xf32>
    %377 = arith.mulf %372, %376 : vector<8x1xf32>
    %378 = vector.broadcast %cst_21 : f32 to vector<8x1xf32>
    %379 = arith.mulf %375, %378 : vector<8x1xf32>
    %380 = arith.mulf %377, %377 : vector<8x1xf32>
    %381 = arith.subf %379, %380 : vector<8x1xf32>
    %cst_156 = arith.constant 0.000000e+00 : f32
    %382 = vector.broadcast %cst_156 : f32 to vector<8x1xf32>
    %383 = arith.maximumf %381, %382 : vector<8x1xf32>
    %384 = math.sqrt %383 : vector<8x1xf32>
    %cst_157 = arith.constant 9.99999997E-7 : f32
    %385 = vector.broadcast %cst_157 : f32 to vector<8x1xf32>
    %386 = arith.addf %384, %385 : vector<8x1xf32>
    %cst_158 = arith.constant 1.000000e+00 : f32
    %387 = vector.broadcast %cst_158 : f32 to vector<8x1xf32>
    %388 = arith.divf %387, %386 : vector<8x1xf32>
    %389 = math.log %388 : vector<8x1xf32>
    %390 = math.exp %389 : vector<8x1xf32>
    %391 = vector.broadcast %377 : vector<8x1xf32> to vector<8x256xf32>
    %392 = arith.subf %368, %391 : vector<8x256xf32>
    %393 = vector.broadcast %390 : vector<8x1xf32> to vector<8x256xf32>
    %394 = arith.mulf %392, %393 : vector<8x256xf32>
    %395 = arith.index_cast %c9_i32 : i32 to index
    %c0_159 = arith.constant 0 : index
    %c0_160 = arith.constant 0 : index
    %396 = vector.load %arg1[%395, %c0_159, %c0_160] : memref<16x8x8xf32, #tpu.memory_space<vmem>>, vector<1x8x8xf32>
    %397 = vector.shape_cast %396 : vector<1x8x8xf32> to vector<8x8xf32>
    %cst_161 = arith.constant dense<0.000000e+00> : vector<8x256xf32>
    %398 = tpu.matmul %397, %394, %cst_161 {dimension_numbers = #tpu.dot_dimension_numbers<[1], [0], [0], [1], [0, 0, 1, 1], [], []>} : vector<8x8xf32>, vector<8x256xf32>, vector<8x256xf32> -> vector<8x256xf32>
    %c0_162 = arith.constant 0 : index
    %c0_163 = arith.constant 0 : index
    %399 = vector.load %arg4[%c0_162, %c0_163] : memref<8x256xf32, #tpu.memory_space<vmem>>, vector<8x256xf32>
    tpu.vector_store %arg4[%c0_162, %c0_163], %398 {strides = array<i32>} : memref<8x256xf32, #tpu.memory_space<vmem>>, vector<8x256xf32>,
    %400 = vector.shape_cast %389 : vector<8x1xf32> to vector<1x8x1xf32>
    %cst_164 = arith.constant dense<0.000000e+00> : vector<1xf32>
    %401 = vector.multi_reduction <add>, %400, %cst_164 [1, 2] : vector<1x8x1xf32> to vector<1xf32>
    %402 = vector.shape_cast %401 : vector<1xf32> to vector<1x1x1xf32>
    %403 = vector.extract %402[0, 0, 0] : f32 from vector<1x1x1xf32>
    %cst_165 = arith.constant 1.280000e+02 : f32
    %404 = arith.mulf %403, %cst_165 : f32
    %405 = arith.addf %367, %404 : f32
    %406 = arith.index_cast %c9_i32 : i32 to index
    %407 = memref.load %arg3[%406] : memref<16xf32, #tpu.memory_space<smem>>
    %408 = arith.addf %405, %407 : f32
    %c10_i32 = arith.constant 10 : i32
    %c0_166 = arith.constant 0 : index
    %c0_167 = arith.constant 0 : index
    %409 = vector.load %arg4[%c0_166, %c0_167] : memref<8x256xf32, #tpu.memory_space<vmem>>, vector<8x256xf32>
    %410 = arith.mulf %409, %409 : vector<8x256xf32>
    %cst_168 = arith.constant dense<0.000000e+00> : vector<8x256xf32>
    %411 = tpu.matmul %0, %409, %cst_168 {dimension_numbers = #tpu.dot_dimension_numbers<[1], [0], [0], [1], [0, 0, 1, 1], [], []>} : vector<8x8xf32>, vector<8x256xf32>, vector<8x256xf32> -> vector<8x256xf32>
    %cst_169 = arith.constant dense<0.000000e+00> : vector<8xf32>
    %412 = vector.multi_reduction <add>, %411, %cst_169 [1] : vector<8x256xf32> to vector<8xf32>
    %413 = vector.shape_cast %412 : vector<8xf32> to vector<8x1xf32>
    %cst_170 = arith.constant dense<0.000000e+00> : vector<8x256xf32>
    %414 = tpu.matmul %0, %410, %cst_170 {dimension_numbers = #tpu.dot_dimension_numbers<[1], [0], [0], [1], [0, 0, 1, 1], [], []>} : vector<8x8xf32>, vector<8x256xf32>, vector<8x256xf32> -> vector<8x256xf32>
    %cst_171 = arith.constant dense<0.000000e+00> : vector<8xf32>
    %415 = vector.multi_reduction <add>, %414, %cst_171 [1] : vector<8x256xf32> to vector<8xf32>
    %416 = vector.shape_cast %415 : vector<8xf32> to vector<8x1xf32>
    %417 = vector.broadcast %cst_21 : f32 to vector<8x1xf32>
    %418 = arith.mulf %413, %417 : vector<8x1xf32>
    %419 = vector.broadcast %cst_21 : f32 to vector<8x1xf32>
    %420 = arith.mulf %416, %419 : vector<8x1xf32>
    %421 = arith.mulf %418, %418 : vector<8x1xf32>
    %422 = arith.subf %420, %421 : vector<8x1xf32>
    %cst_172 = arith.constant 0.000000e+00 : f32
    %423 = vector.broadcast %cst_172 : f32 to vector<8x1xf32>
    %424 = arith.maximumf %422, %423 : vector<8x1xf32>
    %425 = math.sqrt %424 : vector<8x1xf32>
    %cst_173 = arith.constant 9.99999997E-7 : f32
    %426 = vector.broadcast %cst_173 : f32 to vector<8x1xf32>
    %427 = arith.addf %425, %426 : vector<8x1xf32>
    %cst_174 = arith.constant 1.000000e+00 : f32
    %428 = vector.broadcast %cst_174 : f32 to vector<8x1xf32>
    %429 = arith.divf %428, %427 : vector<8x1xf32>
    %430 = math.log %429 : vector<8x1xf32>
    %431 = math.exp %430 : vector<8x1xf32>
    %432 = vector.broadcast %418 : vector<8x1xf32> to vector<8x256xf32>
    %433 = arith.subf %409, %432 : vector<8x256xf32>
    %434 = vector.broadcast %431 : vector<8x1xf32> to vector<8x256xf32>
    %435 = arith.mulf %433, %434 : vector<8x256xf32>
    %436 = arith.index_cast %c10_i32 : i32 to index
    %c0_175 = arith.constant 0 : index
    %c0_176 = arith.constant 0 : index
    %437 = vector.load %arg1[%436, %c0_175, %c0_176] : memref<16x8x8xf32, #tpu.memory_space<vmem>>, vector<1x8x8xf32>
    %438 = vector.shape_cast %437 : vector<1x8x8xf32> to vector<8x8xf32>
    %cst_177 = arith.constant dense<0.000000e+00> : vector<8x256xf32>
    %439 = tpu.matmul %438, %435, %cst_177 {dimension_numbers = #tpu.dot_dimension_numbers<[1], [0], [0], [1], [0, 0, 1, 1], [], []>} : vector<8x8xf32>, vector<8x256xf32>, vector<8x256xf32> -> vector<8x256xf32>
    %c0_178 = arith.constant 0 : index
    %c0_179 = arith.constant 0 : index
    %440 = vector.load %arg4[%c0_178, %c0_179] : memref<8x256xf32, #tpu.memory_space<vmem>>, vector<8x256xf32>
    tpu.vector_store %arg4[%c0_178, %c0_179], %439 {strides = array<i32>} : memref<8x256xf32, #tpu.memory_space<vmem>>, vector<8x256xf32>,
    %441 = vector.shape_cast %430 : vector<8x1xf32> to vector<1x8x1xf32>
    %cst_180 = arith.constant dense<0.000000e+00> : vector<1xf32>
    %442 = vector.multi_reduction <add>, %441, %cst_180 [1, 2] : vector<1x8x1xf32> to vector<1xf32>
    %443 = vector.shape_cast %442 : vector<1xf32> to vector<1x1x1xf32>
    %444 = vector.extract %443[0, 0, 0] : f32 from vector<1x1x1xf32>
    %cst_181 = arith.constant 1.280000e+02 : f32
    %445 = arith.mulf %444, %cst_181 : f32
    %446 = arith.addf %408, %445 : f32
    %447 = arith.index_cast %c10_i32 : i32 to index
    %448 = memref.load %arg3[%447] : memref<16xf32, #tpu.memory_space<smem>>
    %449 = arith.addf %446, %448 : f32
    %c11_i32 = arith.constant 11 : i32
    %c0_182 = arith.constant 0 : index
    %c0_183 = arith.constant 0 : index
    %450 = vector.load %arg4[%c0_182, %c0_183] : memref<8x256xf32, #tpu.memory_space<vmem>>, vector<8x256xf32>
    %451 = arith.mulf %450, %450 : vector<8x256xf32>
    %cst_184 = arith.constant dense<0.000000e+00> : vector<8x256xf32>
    %452 = tpu.matmul %0, %450, %cst_184 {dimension_numbers = #tpu.dot_dimension_numbers<[1], [0], [0], [1], [0, 0, 1, 1], [], []>} : vector<8x8xf32>, vector<8x256xf32>, vector<8x256xf32> -> vector<8x256xf32>
    %cst_185 = arith.constant dense<0.000000e+00> : vector<8xf32>
    %453 = vector.multi_reduction <add>, %452, %cst_185 [1] : vector<8x256xf32> to vector<8xf32>
    %454 = vector.shape_cast %453 : vector<8xf32> to vector<8x1xf32>
    %cst_186 = arith.constant dense<0.000000e+00> : vector<8x256xf32>
    %455 = tpu.matmul %0, %451, %cst_186 {dimension_numbers = #tpu.dot_dimension_numbers<[1], [0], [0], [1], [0, 0, 1, 1], [], []>} : vector<8x8xf32>, vector<8x256xf32>, vector<8x256xf32> -> vector<8x256xf32>
    %cst_187 = arith.constant dense<0.000000e+00> : vector<8xf32>
    %456 = vector.multi_reduction <add>, %455, %cst_187 [1] : vector<8x256xf32> to vector<8xf32>
    %457 = vector.shape_cast %456 : vector<8xf32> to vector<8x1xf32>
    %458 = vector.broadcast %cst_21 : f32 to vector<8x1xf32>
    %459 = arith.mulf %454, %458 : vector<8x1xf32>
    %460 = vector.broadcast %cst_21 : f32 to vector<8x1xf32>
    %461 = arith.mulf %457, %460 : vector<8x1xf32>
    %462 = arith.mulf %459, %459 : vector<8x1xf32>
    %463 = arith.subf %461, %462 : vector<8x1xf32>
    %cst_188 = arith.constant 0.000000e+00 : f32
    %464 = vector.broadcast %cst_188 : f32 to vector<8x1xf32>
    %465 = arith.maximumf %463, %464 : vector<8x1xf32>
    %466 = math.sqrt %465 : vector<8x1xf32>
    %cst_189 = arith.constant 9.99999997E-7 : f32
    %467 = vector.broadcast %cst_189 : f32 to vector<8x1xf32>
    %468 = arith.addf %466, %467 : vector<8x1xf32>
    %cst_190 = arith.constant 1.000000e+00 : f32
    %469 = vector.broadcast %cst_190 : f32 to vector<8x1xf32>
    %470 = arith.divf %469, %468 : vector<8x1xf32>
    %471 = math.log %470 : vector<8x1xf32>
    %472 = math.exp %471 : vector<8x1xf32>
    %473 = vector.broadcast %459 : vector<8x1xf32> to vector<8x256xf32>
    %474 = arith.subf %450, %473 : vector<8x256xf32>
    %475 = vector.broadcast %472 : vector<8x1xf32> to vector<8x256xf32>
    %476 = arith.mulf %474, %475 : vector<8x256xf32>
    %477 = arith.index_cast %c11_i32 : i32 to index
    %c0_191 = arith.constant 0 : index
    %c0_192 = arith.constant 0 : index
    %478 = vector.load %arg1[%477, %c0_191, %c0_192] : memref<16x8x8xf32, #tpu.memory_space<vmem>>, vector<1x8x8xf32>
    %479 = vector.shape_cast %478 : vector<1x8x8xf32> to vector<8x8xf32>
    %cst_193 = arith.constant dense<0.000000e+00> : vector<8x256xf32>
    %480 = tpu.matmul %479, %476, %cst_193 {dimension_numbers = #tpu.dot_dimension_numbers<[1], [0], [0], [1], [0, 0, 1, 1], [], []>} : vector<8x8xf32>, vector<8x256xf32>, vector<8x256xf32> -> vector<8x256xf32>
    %c0_194 = arith.constant 0 : index
    %c0_195 = arith.constant 0 : index
    %481 = vector.load %arg4[%c0_194, %c0_195] : memref<8x256xf32, #tpu.memory_space<vmem>>, vector<8x256xf32>
    tpu.vector_store %arg4[%c0_194, %c0_195], %480 {strides = array<i32>} : memref<8x256xf32, #tpu.memory_space<vmem>>, vector<8x256xf32>,
    %482 = vector.shape_cast %471 : vector<8x1xf32> to vector<1x8x1xf32>
    %cst_196 = arith.constant dense<0.000000e+00> : vector<1xf32>
    %483 = vector.multi_reduction <add>, %482, %cst_196 [1, 2] : vector<1x8x1xf32> to vector<1xf32>
    %484 = vector.shape_cast %483 : vector<1xf32> to vector<1x1x1xf32>
    %485 = vector.extract %484[0, 0, 0] : f32 from vector<1x1x1xf32>
    %cst_197 = arith.constant 1.280000e+02 : f32
    %486 = arith.mulf %485, %cst_197 : f32
    %487 = arith.addf %449, %486 : f32
    %488 = arith.index_cast %c11_i32 : i32 to index
    %489 = memref.load %arg3[%488] : memref<16xf32, #tpu.memory_space<smem>>
    %490 = arith.addf %487, %489 : f32
    %c12_i32 = arith.constant 12 : i32
    %c0_198 = arith.constant 0 : index
    %c0_199 = arith.constant 0 : index
    %491 = vector.load %arg4[%c0_198, %c0_199] : memref<8x256xf32, #tpu.memory_space<vmem>>, vector<8x256xf32>
    %492 = arith.mulf %491, %491 : vector<8x256xf32>
    %cst_200 = arith.constant dense<0.000000e+00> : vector<8x256xf32>
    %493 = tpu.matmul %0, %491, %cst_200 {dimension_numbers = #tpu.dot_dimension_numbers<[1], [0], [0], [1], [0, 0, 1, 1], [], []>} : vector<8x8xf32>, vector<8x256xf32>, vector<8x256xf32> -> vector<8x256xf32>
    %cst_201 = arith.constant dense<0.000000e+00> : vector<8xf32>
    %494 = vector.multi_reduction <add>, %493, %cst_201 [1] : vector<8x256xf32> to vector<8xf32>
    %495 = vector.shape_cast %494 : vector<8xf32> to vector<8x1xf32>
    %cst_202 = arith.constant dense<0.000000e+00> : vector<8x256xf32>
    %496 = tpu.matmul %0, %492, %cst_202 {dimension_numbers = #tpu.dot_dimension_numbers<[1], [0], [0], [1], [0, 0, 1, 1], [], []>} : vector<8x8xf32>, vector<8x256xf32>, vector<8x256xf32> -> vector<8x256xf32>
    %cst_203 = arith.constant dense<0.000000e+00> : vector<8xf32>
    %497 = vector.multi_reduction <add>, %496, %cst_203 [1] : vector<8x256xf32> to vector<8xf32>
    %498 = vector.shape_cast %497 : vector<8xf32> to vector<8x1xf32>
    %499 = vector.broadcast %cst_21 : f32 to vector<8x1xf32>
    %500 = arith.mulf %495, %499 : vector<8x1xf32>
    %501 = vector.broadcast %cst_21 : f32 to vector<8x1xf32>
    %502 = arith.mulf %498, %501 : vector<8x1xf32>
    %503 = arith.mulf %500, %500 : vector<8x1xf32>
    %504 = arith.subf %502, %503 : vector<8x1xf32>
    %cst_204 = arith.constant 0.000000e+00 : f32
    %505 = vector.broadcast %cst_204 : f32 to vector<8x1xf32>
    %506 = arith.maximumf %504, %505 : vector<8x1xf32>
    %507 = math.sqrt %506 : vector<8x1xf32>
    %cst_205 = arith.constant 9.99999997E-7 : f32
    %508 = vector.broadcast %cst_205 : f32 to vector<8x1xf32>
    %509 = arith.addf %507, %508 : vector<8x1xf32>
    %cst_206 = arith.constant 1.000000e+00 : f32
    %510 = vector.broadcast %cst_206 : f32 to vector<8x1xf32>
    %511 = arith.divf %510, %509 : vector<8x1xf32>
    %512 = math.log %511 : vector<8x1xf32>
    %513 = math.exp %512 : vector<8x1xf32>
    %514 = vector.broadcast %500 : vector<8x1xf32> to vector<8x256xf32>
    %515 = arith.subf %491, %514 : vector<8x256xf32>
    %516 = vector.broadcast %513 : vector<8x1xf32> to vector<8x256xf32>
    %517 = arith.mulf %515, %516 : vector<8x256xf32>
    %518 = arith.index_cast %c12_i32 : i32 to index
    %c0_207 = arith.constant 0 : index
    %c0_208 = arith.constant 0 : index
    %519 = vector.load %arg1[%518, %c0_207, %c0_208] : memref<16x8x8xf32, #tpu.memory_space<vmem>>, vector<1x8x8xf32>
    %520 = vector.shape_cast %519 : vector<1x8x8xf32> to vector<8x8xf32>
    %cst_209 = arith.constant dense<0.000000e+00> : vector<8x256xf32>
    %521 = tpu.matmul %520, %517, %cst_209 {dimension_numbers = #tpu.dot_dimension_numbers<[1], [0], [0], [1], [0, 0, 1, 1], [], []>} : vector<8x8xf32>, vector<8x256xf32>, vector<8x256xf32> -> vector<8x256xf32>
    %c0_210 = arith.constant 0 : index
    %c0_211 = arith.constant 0 : index
    %522 = vector.load %arg4[%c0_210, %c0_211] : memref<8x256xf32, #tpu.memory_space<vmem>>, vector<8x256xf32>
    tpu.vector_store %arg4[%c0_210, %c0_211], %521 {strides = array<i32>} : memref<8x256xf32, #tpu.memory_space<vmem>>, vector<8x256xf32>,
    %523 = vector.shape_cast %512 : vector<8x1xf32> to vector<1x8x1xf32>
    %cst_212 = arith.constant dense<0.000000e+00> : vector<1xf32>
    %524 = vector.multi_reduction <add>, %523, %cst_212 [1, 2] : vector<1x8x1xf32> to vector<1xf32>
    %525 = vector.shape_cast %524 : vector<1xf32> to vector<1x1x1xf32>
    %526 = vector.extract %525[0, 0, 0] : f32 from vector<1x1x1xf32>
    %cst_213 = arith.constant 1.280000e+02 : f32
    %527 = arith.mulf %526, %cst_213 : f32
    %528 = arith.addf %490, %527 : f32
    %529 = arith.index_cast %c12_i32 : i32 to index
    %530 = memref.load %arg3[%529] : memref<16xf32, #tpu.memory_space<smem>>
    %531 = arith.addf %528, %530 : f32
    %c13_i32 = arith.constant 13 : i32
    %c0_214 = arith.constant 0 : index
    %c0_215 = arith.constant 0 : index
    %532 = vector.load %arg4[%c0_214, %c0_215] : memref<8x256xf32, #tpu.memory_space<vmem>>, vector<8x256xf32>
    %533 = arith.mulf %532, %532 : vector<8x256xf32>
    %cst_216 = arith.constant dense<0.000000e+00> : vector<8x256xf32>
    %534 = tpu.matmul %0, %532, %cst_216 {dimension_numbers = #tpu.dot_dimension_numbers<[1], [0], [0], [1], [0, 0, 1, 1], [], []>} : vector<8x8xf32>, vector<8x256xf32>, vector<8x256xf32> -> vector<8x256xf32>
    %cst_217 = arith.constant dense<0.000000e+00> : vector<8xf32>
    %535 = vector.multi_reduction <add>, %534, %cst_217 [1] : vector<8x256xf32> to vector<8xf32>
    %536 = vector.shape_cast %535 : vector<8xf32> to vector<8x1xf32>
    %cst_218 = arith.constant dense<0.000000e+00> : vector<8x256xf32>
    %537 = tpu.matmul %0, %533, %cst_218 {dimension_numbers = #tpu.dot_dimension_numbers<[1], [0], [0], [1], [0, 0, 1, 1], [], []>} : vector<8x8xf32>, vector<8x256xf32>, vector<8x256xf32> -> vector<8x256xf32>
    %cst_219 = arith.constant dense<0.000000e+00> : vector<8xf32>
    %538 = vector.multi_reduction <add>, %537, %cst_219 [1] : vector<8x256xf32> to vector<8xf32>
    %539 = vector.shape_cast %538 : vector<8xf32> to vector<8x1xf32>
    %540 = vector.broadcast %cst_21 : f32 to vector<8x1xf32>
    %541 = arith.mulf %536, %540 : vector<8x1xf32>
    %542 = vector.broadcast %cst_21 : f32 to vector<8x1xf32>
    %543 = arith.mulf %539, %542 : vector<8x1xf32>
    %544 = arith.mulf %541, %541 : vector<8x1xf32>
    %545 = arith.subf %543, %544 : vector<8x1xf32>
    %cst_220 = arith.constant 0.000000e+00 : f32
    %546 = vector.broadcast %cst_220 : f32 to vector<8x1xf32>
    %547 = arith.maximumf %545, %546 : vector<8x1xf32>
    %548 = math.sqrt %547 : vector<8x1xf32>
    %cst_221 = arith.constant 9.99999997E-7 : f32
    %549 = vector.broadcast %cst_221 : f32 to vector<8x1xf32>
    %550 = arith.addf %548, %549 : vector<8x1xf32>
    %cst_222 = arith.constant 1.000000e+00 : f32
    %551 = vector.broadcast %cst_222 : f32 to vector<8x1xf32>
    %552 = arith.divf %551, %550 : vector<8x1xf32>
    %553 = math.log %552 : vector<8x1xf32>
    %554 = math.exp %553 : vector<8x1xf32>
    %555 = vector.broadcast %541 : vector<8x1xf32> to vector<8x256xf32>
    %556 = arith.subf %532, %555 : vector<8x256xf32>
    %557 = vector.broadcast %554 : vector<8x1xf32> to vector<8x256xf32>
    %558 = arith.mulf %556, %557 : vector<8x256xf32>
    %559 = arith.index_cast %c13_i32 : i32 to index
    %c0_223 = arith.constant 0 : index
    %c0_224 = arith.constant 0 : index
    %560 = vector.load %arg1[%559, %c0_223, %c0_224] : memref<16x8x8xf32, #tpu.memory_space<vmem>>, vector<1x8x8xf32>
    %561 = vector.shape_cast %560 : vector<1x8x8xf32> to vector<8x8xf32>
    %cst_225 = arith.constant dense<0.000000e+00> : vector<8x256xf32>
    %562 = tpu.matmul %561, %558, %cst_225 {dimension_numbers = #tpu.dot_dimension_numbers<[1], [0], [0], [1], [0, 0, 1, 1], [], []>} : vector<8x8xf32>, vector<8x256xf32>, vector<8x256xf32> -> vector<8x256xf32>
    %c0_226 = arith.constant 0 : index
    %c0_227 = arith.constant 0 : index
    %563 = vector.load %arg4[%c0_226, %c0_227] : memref<8x256xf32, #tpu.memory_space<vmem>>, vector<8x256xf32>
    tpu.vector_store %arg4[%c0_226, %c0_227], %562 {strides = array<i32>} : memref<8x256xf32, #tpu.memory_space<vmem>>, vector<8x256xf32>,
    %564 = vector.shape_cast %553 : vector<8x1xf32> to vector<1x8x1xf32>
    %cst_228 = arith.constant dense<0.000000e+00> : vector<1xf32>
    %565 = vector.multi_reduction <add>, %564, %cst_228 [1, 2] : vector<1x8x1xf32> to vector<1xf32>
    %566 = vector.shape_cast %565 : vector<1xf32> to vector<1x1x1xf32>
    %567 = vector.extract %566[0, 0, 0] : f32 from vector<1x1x1xf32>
    %cst_229 = arith.constant 1.280000e+02 : f32
    %568 = arith.mulf %567, %cst_229 : f32
    %569 = arith.addf %531, %568 : f32
    %570 = arith.index_cast %c13_i32 : i32 to index
    %571 = memref.load %arg3[%570] : memref<16xf32, #tpu.memory_space<smem>>
    %572 = arith.addf %569, %571 : f32
    %c14_i32 = arith.constant 14 : i32
    %c0_230 = arith.constant 0 : index
    %c0_231 = arith.constant 0 : index
    %573 = vector.load %arg4[%c0_230, %c0_231] : memref<8x256xf32, #tpu.memory_space<vmem>>, vector<8x256xf32>
    %574 = arith.mulf %573, %573 : vector<8x256xf32>
    %cst_232 = arith.constant dense<0.000000e+00> : vector<8x256xf32>
    %575 = tpu.matmul %0, %573, %cst_232 {dimension_numbers = #tpu.dot_dimension_numbers<[1], [0], [0], [1], [0, 0, 1, 1], [], []>} : vector<8x8xf32>, vector<8x256xf32>, vector<8x256xf32> -> vector<8x256xf32>
    %cst_233 = arith.constant dense<0.000000e+00> : vector<8xf32>
    %576 = vector.multi_reduction <add>, %575, %cst_233 [1] : vector<8x256xf32> to vector<8xf32>
    %577 = vector.shape_cast %576 : vector<8xf32> to vector<8x1xf32>
    %cst_234 = arith.constant dense<0.000000e+00> : vector<8x256xf32>
    %578 = tpu.matmul %0, %574, %cst_234 {dimension_numbers = #tpu.dot_dimension_numbers<[1], [0], [0], [1], [0, 0, 1, 1], [], []>} : vector<8x8xf32>, vector<8x256xf32>, vector<8x256xf32> -> vector<8x256xf32>
    %cst_235 = arith.constant dense<0.000000e+00> : vector<8xf32>
    %579 = vector.multi_reduction <add>, %578, %cst_235 [1] : vector<8x256xf32> to vector<8xf32>
    %580 = vector.shape_cast %579 : vector<8xf32> to vector<8x1xf32>
    %581 = vector.broadcast %cst_21 : f32 to vector<8x1xf32>
    %582 = arith.mulf %577, %581 : vector<8x1xf32>
    %583 = vector.broadcast %cst_21 : f32 to vector<8x1xf32>
    %584 = arith.mulf %580, %583 : vector<8x1xf32>
    %585 = arith.mulf %582, %582 : vector<8x1xf32>
    %586 = arith.subf %584, %585 : vector<8x1xf32>
    %cst_236 = arith.constant 0.000000e+00 : f32
    %587 = vector.broadcast %cst_236 : f32 to vector<8x1xf32>
    %588 = arith.maximumf %586, %587 : vector<8x1xf32>
    %589 = math.sqrt %588 : vector<8x1xf32>
    %cst_237 = arith.constant 9.99999997E-7 : f32
    %590 = vector.broadcast %cst_237 : f32 to vector<8x1xf32>
    %591 = arith.addf %589, %590 : vector<8x1xf32>
    %cst_238 = arith.constant 1.000000e+00 : f32
    %592 = vector.broadcast %cst_238 : f32 to vector<8x1xf32>
    %593 = arith.divf %592, %591 : vector<8x1xf32>
    %594 = math.log %593 : vector<8x1xf32>
    %595 = math.exp %594 : vector<8x1xf32>
    %596 = vector.broadcast %582 : vector<8x1xf32> to vector<8x256xf32>
    %597 = arith.subf %573, %596 : vector<8x256xf32>
    %598 = vector.broadcast %595 : vector<8x1xf32> to vector<8x256xf32>
    %599 = arith.mulf %597, %598 : vector<8x256xf32>
    %600 = arith.index_cast %c14_i32 : i32 to index
    %c0_239 = arith.constant 0 : index
    %c0_240 = arith.constant 0 : index
    %601 = vector.load %arg1[%600, %c0_239, %c0_240] : memref<16x8x8xf32, #tpu.memory_space<vmem>>, vector<1x8x8xf32>
    %602 = vector.shape_cast %601 : vector<1x8x8xf32> to vector<8x8xf32>
    %cst_241 = arith.constant dense<0.000000e+00> : vector<8x256xf32>
    %603 = tpu.matmul %602, %599, %cst_241 {dimension_numbers = #tpu.dot_dimension_numbers<[1], [0], [0], [1], [0, 0, 1, 1], [], []>} : vector<8x8xf32>, vector<8x256xf32>, vector<8x256xf32> -> vector<8x256xf32>
    %c0_242 = arith.constant 0 : index
    %c0_243 = arith.constant 0 : index
    %604 = vector.load %arg4[%c0_242, %c0_243] : memref<8x256xf32, #tpu.memory_space<vmem>>, vector<8x256xf32>
    tpu.vector_store %arg4[%c0_242, %c0_243], %603 {strides = array<i32>} : memref<8x256xf32, #tpu.memory_space<vmem>>, vector<8x256xf32>,
    %605 = vector.shape_cast %594 : vector<8x1xf32> to vector<1x8x1xf32>
    %cst_244 = arith.constant dense<0.000000e+00> : vector<1xf32>
    %606 = vector.multi_reduction <add>, %605, %cst_244 [1, 2] : vector<1x8x1xf32> to vector<1xf32>
    %607 = vector.shape_cast %606 : vector<1xf32> to vector<1x1x1xf32>
    %608 = vector.extract %607[0, 0, 0] : f32 from vector<1x1x1xf32>
    %cst_245 = arith.constant 1.280000e+02 : f32
    %609 = arith.mulf %608, %cst_245 : f32
    %610 = arith.addf %572, %609 : f32
    %611 = arith.index_cast %c14_i32 : i32 to index
    %612 = memref.load %arg3[%611] : memref<16xf32, #tpu.memory_space<smem>>
    %613 = arith.addf %610, %612 : f32
    %c15_i32 = arith.constant 15 : i32
    %c0_246 = arith.constant 0 : index
    %c0_247 = arith.constant 0 : index
    %614 = vector.load %arg4[%c0_246, %c0_247] : memref<8x256xf32, #tpu.memory_space<vmem>>, vector<8x256xf32>
    %615 = arith.mulf %614, %614 : vector<8x256xf32>
    %cst_248 = arith.constant dense<0.000000e+00> : vector<8x256xf32>
    %616 = tpu.matmul %0, %614, %cst_248 {dimension_numbers = #tpu.dot_dimension_numbers<[1], [0], [0], [1], [0, 0, 1, 1], [], []>} : vector<8x8xf32>, vector<8x256xf32>, vector<8x256xf32> -> vector<8x256xf32>
    %cst_249 = arith.constant dense<0.000000e+00> : vector<8xf32>
    %617 = vector.multi_reduction <add>, %616, %cst_249 [1] : vector<8x256xf32> to vector<8xf32>
    %618 = vector.shape_cast %617 : vector<8xf32> to vector<8x1xf32>
    %cst_250 = arith.constant dense<0.000000e+00> : vector<8x256xf32>
    %619 = tpu.matmul %0, %615, %cst_250 {dimension_numbers = #tpu.dot_dimension_numbers<[1], [0], [0], [1], [0, 0, 1, 1], [], []>} : vector<8x8xf32>, vector<8x256xf32>, vector<8x256xf32> -> vector<8x256xf32>
    %cst_251 = arith.constant dense<0.000000e+00> : vector<8xf32>
    %620 = vector.multi_reduction <add>, %619, %cst_251 [1] : vector<8x256xf32> to vector<8xf32>
    %621 = vector.shape_cast %620 : vector<8xf32> to vector<8x1xf32>
    %622 = vector.broadcast %cst_21 : f32 to vector<8x1xf32>
    %623 = arith.mulf %618, %622 : vector<8x1xf32>
    %624 = vector.broadcast %cst_21 : f32 to vector<8x1xf32>
    %625 = arith.mulf %621, %624 : vector<8x1xf32>
    %626 = arith.mulf %623, %623 : vector<8x1xf32>
    %627 = arith.subf %625, %626 : vector<8x1xf32>
    %cst_252 = arith.constant 0.000000e+00 : f32
    %628 = vector.broadcast %cst_252 : f32 to vector<8x1xf32>
    %629 = arith.maximumf %627, %628 : vector<8x1xf32>
    %630 = math.sqrt %629 : vector<8x1xf32>
    %cst_253 = arith.constant 9.99999997E-7 : f32
    %631 = vector.broadcast %cst_253 : f32 to vector<8x1xf32>
    %632 = arith.addf %630, %631 : vector<8x1xf32>
    %cst_254 = arith.constant 1.000000e+00 : f32
    %633 = vector.broadcast %cst_254 : f32 to vector<8x1xf32>
    %634 = arith.divf %633, %632 : vector<8x1xf32>
    %635 = math.log %634 : vector<8x1xf32>
    %636 = math.exp %635 : vector<8x1xf32>
    %637 = vector.broadcast %623 : vector<8x1xf32> to vector<8x256xf32>
    %638 = arith.subf %614, %637 : vector<8x256xf32>
    %639 = vector.broadcast %636 : vector<8x1xf32> to vector<8x256xf32>
    %640 = arith.mulf %638, %639 : vector<8x256xf32>
    %641 = arith.index_cast %c15_i32 : i32 to index
    %c0_255 = arith.constant 0 : index
    %c0_256 = arith.constant 0 : index
    %642 = vector.load %arg1[%641, %c0_255, %c0_256] : memref<16x8x8xf32, #tpu.memory_space<vmem>>, vector<1x8x8xf32>
    %643 = vector.shape_cast %642 : vector<1x8x8xf32> to vector<8x8xf32>
    %cst_257 = arith.constant dense<0.000000e+00> : vector<8x256xf32>
    %644 = tpu.matmul %643, %640, %cst_257 {dimension_numbers = #tpu.dot_dimension_numbers<[1], [0], [0], [1], [0, 0, 1, 1], [], []>} : vector<8x8xf32>, vector<8x256xf32>, vector<8x256xf32> -> vector<8x256xf32>
    %c0_258 = arith.constant 0 : index
    %c0_259 = arith.constant 0 : index
    %645 = vector.load %arg4[%c0_258, %c0_259] : memref<8x256xf32, #tpu.memory_space<vmem>>, vector<8x256xf32>
    tpu.vector_store %arg4[%c0_258, %c0_259], %644 {strides = array<i32>} : memref<8x256xf32, #tpu.memory_space<vmem>>, vector<8x256xf32>,
    %646 = vector.shape_cast %635 : vector<8x1xf32> to vector<1x8x1xf32>
    %cst_260 = arith.constant dense<0.000000e+00> : vector<1xf32>
    %647 = vector.multi_reduction <add>, %646, %cst_260 [1, 2] : vector<1x8x1xf32> to vector<1xf32>
    %648 = vector.shape_cast %647 : vector<1xf32> to vector<1x1x1xf32>
    %649 = vector.extract %648[0, 0, 0] : f32 from vector<1x1x1xf32>
    %cst_261 = arith.constant 1.280000e+02 : f32
    %650 = arith.mulf %649, %cst_261 : f32
    %651 = arith.addf %613, %650 : f32
    %652 = arith.index_cast %c15_i32 : i32 to index
    %653 = memref.load %arg3[%652] : memref<16xf32, #tpu.memory_space<smem>>
    %654 = arith.addf %651, %653 : f32
    %c15_i32_262 = arith.constant 15 : i32
    %c0_263 = arith.constant 0 : index
    %655 = memref.load %arg5[%c0_263] : memref<1xf32, #tpu.memory_space<smem>>
    memref.store %654, %arg5[%c0_263] : memref<1xf32, #tpu.memory_space<smem>>
    return
  }
}

</mosaic_0001>

<llo_original>
// kernel: flownet_encode.1
$region0: #{flownet_encode.1}
  #allocation0 [shape = 'u32[]', space=smem, size = 0x4, offset = 0x4, fixed_abs, tag = 'smem constant byte address 0x4 - core index']
  #allocation1 [shape = 'u32[144,128]{1,0:T(1,128)}', space=vmem, size = 0x12000, scoped, tag = 'internal scratch']
  %s0 = inlined_call_operand.vmem [shape: f32[8,256], index: 0, kind: input, shape index: {}, may-alias: {0,4}]
  %s1 = inlined_call_operand.vmem [shape: f32[16,8,8], index: 1, kind: input, shape index: {}]
  %s2 = inlined_call_operand.vmem [shape: f32[8,8], index: 2, kind: input, shape index: {}]
  %s3 = inlined_call_operand.vmem [shape: f32[16], index: 3, kind: input, shape index: {}]
  %s4 = inlined_call_operand.vmem [shape: f32[8,256], index: 4, kind: output, shape index: {0}, may-alias: {0,4}]
  %s5 = inlined_call_operand.hbm [shape: f32[1], index: 5, kind: output, shape index: {1}]
  %6 = xla_tuple %s4, %s5
  %s7 = sld [smem:[#allocation0]]
  $region38: #{flownet_encode.1} parent=0
    _
  %s9 = ssub.s32 1, %s7
  %s10 = scalar_select 0, %s9, %s7
  $region1: #{flownet_encode.1} parent=0
    #allocation2 [shape = 'u8[512]{0}', space=smem, size = 0x200, scoped, tag = 'input window, operand 3, single buffered']
    #allocation3 [shape = 's32[1]{0}', space=sflag, size = 0x4, scoped, tag = 'scoped memory for flownet_encode.1']
    #allocation4 [shape = 's32[1]{0}', space=sflag, size = 0x4, scoped, tag = 'scoped memory for flownet_encode.1']
    #allocation5 [shape = 'u8[512]{0}', space=smem, size = 0x200, scoped, tag = 'output window, operand 1, single buffered']
    %11 = vsyncpa [#allocation4], 0
    %12 = vsyncpa [#allocation3], 0
    // Predicated region
    $region2: #{flownet_encode.1} parent=1 // pred_check
      _
    $region3: #{flownet_encode.1} parent=1 // pred_check_branch
      %14 = sbr.rel (0) target = $region5
    $region4: #{flownet_encode.1} parent=1 // pred_region
      _
    $region5: #{flownet_encode.1} parent=1 // pred_fallthru
      _
    // Predicated region
    $region6: #{flownet_encode.1} parent=1 // pred_check
      _
    $region7: #{flownet_encode.1} parent=1 // pred_check_branch
      %16 = sbr.rel (0) target = $region9
    $region8: #{flownet_encode.1} parent=1 // pred_region
      _
    $region9: #{flownet_encode.1} parent=1 // pred_fallthru
      _
    // Predicated region
    $region10: #{flownet_encode.1} parent=1 // pred_check
      _
    $region11: #{flownet_encode.1} parent=1 // pred_check_branch
      %18 = sbr.rel (0) target = $region13
    $region12: #{flownet_encode.1} parent=1 // pred_region
      _
    $region13: #{flownet_encode.1} parent=1 // pred_fallthru
      _
    // Predicated region
    $region14: #{flownet_encode.1} parent=1 // pred_check
      _
    $region15: #{flownet_encode.1} parent=1 // pred_check_branch
      %20 = sbr.rel (0) target = $region17
    $region16: #{flownet_encode.1} parent=1 // pred_region
      %s22 = ssub.s32 16, 16
      %23 = vsyncadd [#allocation4], %s22
      %s25 = sshll.u32 %s3, 4
      %s26 = int_to_ptr.vmem [resolvable:$true] %s25
      %28 = dma.vmem_to_smem %s26, 16, [#allocation2], [#allocation4]
    $region17: #{flownet_encode.1} parent=1 // pred_fallthru
      _
    // Predicated region
    $region18: #{flownet_encode.1} parent=1 // pred_check
      _
    $region19: #{flownet_encode.1} parent=1 // pred_check_branch
      %30 = sbr.rel (0) target = $region21
    $region20: #{flownet_encode.1} parent=1 // pred_region
      %31 = dma.done [#allocation4], 16
    $region21: #{flownet_encode.1} parent=1 // pred_fallthru
      _
    %32 = sfence
    %v33 = vld [vmem:[%s2] sm:$0xff]
    %v34 = vld [vmem:[%s0] sm:$0xff]
    %v35 = vld [vmem:[%s0 + $0x8] sm:$0xff]
    %v36 = vmul.f32 %v34, %v34
    %v37 = vmul.f32 %v35, %v35
    %vm38 = vcmask 64512
    %v40 = vsel %vm38, %v33, 0
    %42 = vmatprep.subr.mxu0 %v35
    %43 = vmatpush1.msra.mxu0 %v34
    %44 = vmatprep.subr.mxu0 0.0
    %45 = vmatpush1.msra.mxu0 0.0
    %46 = vmatprep.subr.mxu0 0.0
    %47 = vmatpush1.msra.mxu0 0.0
    %48 = vmatprep.subr.mxu0 0.0
    %49 = vmatpush1.msra.mxu0 0.0
    %50 = vmatprep.subr.mxu0 0.0
    %51 = vmatpush1.msra.mxu0 0.0
    %52 = vmatprep.subr.mxu0 0.0
    %53 = vmatpush1.msra.mxu0 0.0
    %54 = vmatprep.subr.mxu0 0.0
    %55 = vmatpush1.msra.mxu0 0.0
    %56 = vmatprep.subr.mxu0 0.0
    %57 = vmatpush1.msra.mxu0 0.0
    %58 = vmatprep.subr.mxu0 0.0
    %59 = vmatpush1.msra.mxu0 0.0
    %60 = vmatprep.subr.mxu0 0.0
    %61 = vmatpush1.msra.mxu0 0.0
    %62 = vmatprep.subr.mxu0 0.0
    %63 = vmatpush1.msra.mxu0 0.0
    %64 = vmatprep.subr.mxu0 0.0
    %65 = vmatpush1.msra.mxu0 0.0
    %66 = vmatprep.subr.mxu0 0.0
    %67 = vmatpush1.msra.mxu0 0.0
    %68 = vmatprep.subr.mxu0 0.0
    %69 = vmatpush1.msra.mxu0 0.0
    %70 = vmatprep.subr.mxu0 0.0
    %71 = vmatpush1.msra.mxu0 0.0
    %72 = vmatprep.subr.mxu0 0.0
    %73 = vmatpush1.msra.mxu0 0.0
    %74 = vmatprep.subr.mxu0 0.0
    %75 = vmatpush1.msra.mxu0 0.0
    %76 = vmatprep.subr.mxu0 0.0
    %77 = vmatpush1.msra.mxu0 0.0
    %78 = vmatprep.subr.mxu0 0.0
    %79 = vmatpush1.msra.mxu0 0.0
    %80 = vmatprep.subr.mxu0 0.0
    %81 = vmatpush1.msra.mxu0 0.0
    %82 = vmatprep.subr.mxu0 0.0
    %83 = vmatpush1.msra.mxu0 0.0
    %84 = vmatprep.subr.mxu0 0.0
    %85 = vmatpush1.msra.mxu0 0.0
    %86 = vmatprep.subr.mxu0 0.0
    %87 = vmatpush1.msra.mxu0 0.0
    %88 = vmatprep.subr.mxu0 0.0
    %89 = vmatpush1.msra.mxu0 0.0
    %90 = vmatprep.subr.mxu0 0.0
    %91 = vmatpush1.msra.mxu0 0.0
    %92 = vmatprep.subr.mxu0 0.0
    %93 = vmatpush1.msra.mxu0 0.0
    %94 = vmatprep.subr.mxu0 0.0
    %95 = vmatpush1.msra.mxu0 0.0
    %96 = vmatprep.subr.mxu0 0.0
    %97 = vmatpush1.msra.mxu0 0.0
    %98 = vmatprep.subr.mxu0 0.0
    %99 = vmatpush1.msra.mxu0 0.0
    %100 = vmatprep.subr.mxu0 0.0
    %101 = vmatpush1.msra.mxu0 0.0
    %102 = vmatprep.subr.mxu0 0.0
    %103 = vmatpush1.msra.mxu0 0.0
    %104 = vmatprep.subr.mxu0 0.0
    %105 = vmatpush1.msra.mxu0 0.0
    %106 = vmatprep.mubr.f32.mxu0 0.0
    %107 = vmatmul.mubr.f32.gmra.mrb[0].mxu0 %v40
    %v108 = vpop.f32.mrb[0].mxu0
    %v109 = vadd.f32 0.0, %v108
    %v110 = vpop.f32.mrb[0].mxu0
    %v111 = vadd.f32 0.0, %v110
    %112 = vdwg.mxu0
    %v113 = vadd.f32 %v109, %v111
    %114 = vadd.xlane.f32.xlu0 %v113
    %v115 = vpop.xlane.xlu0 %114
    %116 = vmatprep.subr.mxu0 %v37
    %117 = vmatpush1.msra.mxu0 %v36
    %118 = vmatprep.subr.mxu0 0.0
    %119 = vmatpush1.msra.mxu0 0.0
    %120 = vmatprep.subr.mxu0 0.0
    %121 = vmatpush1.msra.mxu0 0.0
    %122 = vmatprep.subr.mxu0 0.0
    %123 = vmatpush1.msra.mxu0 0.0
    %124 = vmatprep.subr.mxu0 0.0
    %125 = vmatpush1.msra.mxu0 0.0
    %126 = vmatprep.subr.mxu0 0.0
    %127 = vmatpush1.msra.mxu0 0.0
    %128 = vmatprep.subr.mxu0 0.0
    %129 = vmatpush1.msra.mxu0 0.0
    %130 = vmatprep.subr.mxu0 0.0
    %131 = vmatpush1.msra.mxu0 0.0
    %132 = vmatprep.subr.mxu0 0.0
    %133 = vmatpush1.msra.mxu0 0.0
    %134 = vmatprep.subr.mxu0 0.0
    %135 = vmatpush1.msra.mxu0 0.0
    %136 = vmatprep.subr.mxu0 0.0
    %137 = vmatpush1.msra.mxu0 0.0
    %138 = vmatprep.subr.mxu0 0.0
    %139 = vmatpush1.msra.mxu0 0.0
    %140 = vmatprep.subr.mxu0 0.0
    %141 = vmatpush1.msra.mxu0 0.0
    %142 = vmatprep.subr.mxu0 0.0
    %143 = vmatpush1.msra.mxu0 0.0
    %144 = vmatprep.subr.mxu0 0.0
    %145 = vmatpush1.msra.mxu0 0.0
    %146 = vmatprep.subr.mxu0 0.0
    %147 = vmatpush1.msra.mxu0 0.0
    %148 = vmatprep.subr.mxu0 0.0
    %149 = vmatpush1.msra.mxu0 0.0
    %150 = vmatprep.subr.mxu0 0.0
    %151 = vmatpush1.msra.mxu0 0.0
    %152 = vmatprep.subr.mxu0 0.0
    %153 = vmatpush1.msra.mxu0 0.0
    %154 = vmatprep.subr.mxu0 0.0
    %155 = vmatpush1.msra.mxu0 0.0
    %156 = vmatprep.subr.mxu0 0.0
    %157 = vmatpush1.msra.mxu0 0.0
    %158 = vmatprep.subr.mxu0 0.0
    %159 = vmatpush1.msra.mxu0 0.0
    %160 = vmatprep.subr.mxu0 0.0
    %161 = vmatpush1.msra.mxu0 0.0
    %162 = vmatprep.subr.mxu0 0.0
    %163 = vmatpush1.msra.mxu0 0.0
    %164 = vmatprep.subr.mxu0 0.0
    %165 = vmatpush1.msra.mxu0 0.0
    %166 = vmatprep.subr.mxu0 0.0
    %167 = vmatpush1.msra.mxu0 0.0
    %168 = vmatprep.subr.mxu0 0.0
    %169 = vmatpush1.msra.mxu0 0.0
    %170 = vmatprep.subr.mxu0 0.0
    %171 = vmatpush1.msra.mxu0 0.0
    %172 = vmatprep.subr.mxu0 0.0
    %173 = vmatpush1.msra.mxu0 0.0
    %174 = vmatprep.subr.mxu0 0.0
    %175 = vmatpush1.msra.mxu0 0.0
    %176 = vmatprep.subr.mxu0 0.0
    %177 = vmatpush1.msra.mxu0 0.0
    %178 = vmatprep.subr.mxu0 0.0
    %179 = vmatpush1.msra.mxu0 0.0
    %180 = vmatprep.mubr.f32.mxu0 0.0
    %181 = vmatmul.mubr.f32.gmra.mrb[0].mxu0 %v40
    %v182 = vpop.f32.mrb[0].mxu0
    %v183 = vadd.f32 0.0, %v182
    %v184 = vpop.f32.mrb[0].mxu0
    %v185 = vadd.f32 0.0, %v184
    %186 = vdwg.mxu0
    %v187 = vadd.f32 %v183, %v185
    %188 = vadd.xlane.f32.xlu0 %v187
    %v189 = vpop.xlane.xlu0 %188
    %v190 = vmul.f32 %v115, 0.001953125
    %v191 = vmul.f32 %v189, 0.001953125
    %v192 = vmul.f32 %v190, %v190
    %v193 = vsub.f32 %v191, %v192
    %v194 = vmax.f32 %v193, 0.0
    %v195 = vrsqrt.pop %v194
    %v196 = vmul.f32 %v194, %v195
    %vm197 = vcmp.eq.f32.partialorder %v194, inf
    %v198 = vsel %vm197, %v194, %v196
    %vm199 = vcmp.eq.f32.partialorder %v194, 0.0
    %v200 = vand.u32 %v194, 2147483648
    %v201 = vsel %vm199, %v200, %v198
    %v202 = vadd.f32 %v201, 1e-06
    %v203 = vrcp.pop %v202
    %v204 = vmul.f32 1.0, %v203
    %v205 = vlog2.pop %v204
    %v206 = vmul.f32 %v205, 0.6931472
    %v207 = vmul.f32 %v206, 1.442695
    %v208 = vpow.pop %v207
    %v209 = vsub.f32 %v34, %v190
    %v210 = vsub.f32 %v35, %v190
    %v211 = vmul.f32 %v209, %v208
    %v212 = vmul.f32 %v210, %v208
    %v213 = vld [vmem:[%s1] sm:$0xff]
    %v215 = vsel %vm38, %v213, 0
    %217 = vmatprep.subr.mxu0 %v212
    %218 = vmatpush1.msra.mxu0 %v211
    %219 = vmatprep.subr.mxu0 0.0
    %220 = vmatpush1.msra.mxu0 0.0
    %221 = vmatprep.subr.mxu0 0.0
    %222 = vmatpush1.msra.mxu0 0.0
    %223 = vmatprep.subr.mxu0 0.0
    %224 = vmatpush1.msra.mxu0 0.0
    %225 = vmatprep.subr.mxu0 0.0
    %226 = vmatpush1.msra.mxu0 0.0
    %227 = vmatprep.subr.mxu0 0.0
    %228 = vmatpush1.msra.mxu0 0.0
    %229 = vmatprep.subr.mxu0 0.0
    %230 = vmatpush1.msra.mxu0 0.0
    %231 = vmatprep.subr.mxu0 0.0
    %232 = vmatpush1.msra.mxu0 0.0
    %233 = vmatprep.subr.mxu0 0.0
    %234 = vmatpush1.msra.mxu0 0.0
    %235 = vmatprep.subr.mxu0 0.0
    %236 = vmatpush1.msra.mxu0 0.0
    %237 = vmatprep.subr.mxu0 0.0
    %238 = vmatpush1.msra.mxu0 0.0
    %239 = vmatprep.subr.mxu0 0.0
    %240 = vmatpush1.msra.mxu0 0.0
    %241 = vmatprep.subr.mxu0 0.0
    %242 = vmatpush1.msra.mxu0 0.0
    %243 = vmatprep.subr.mxu0 0.0
    %244 = vmatpush1.msra.mxu0 0.0
    %245 = vmatprep.subr.mxu0 0.0
    %246 = vmatpush1.msra.mxu0 0.0
    %247 = vmatprep.subr.mxu0 0.0
    %248 = vmatpush1.msra.mxu0 0.0
    %249 = vmatprep.subr.mxu0 0.0
    %250 = vmatpush1.msra.mxu0 0.0
    %251 = vmatprep.subr.mxu0 0.0
    %252 = vmatpush1.msra.mxu0 0.0
    %253 = vmatprep.subr.mxu0 0.0
    %254 = vmatpush1.msra.mxu0 0.0
    %255 = vmatprep.subr.mxu0 0.0
    %256 = vmatpush1.msra.mxu0 0.0
    %257 = vmatprep.subr.mxu0 0.0
    %258 = vmatpush1.msra.mxu0 0.0
    %259 = vmatprep.subr.mxu0 0.0
    %260 = vmatpush1.msra.mxu0 0.0
    %261 = vmatprep.subr.mxu0 0.0
    %262 = vmatpush1.msra.mxu0 0.0
    %263 = vmatprep.subr.mxu0 0.0
    %264 = vmatpush1.msra.mxu0 0.0
    %265 = vmatprep.subr.mxu0 0.0
    %266 = vmatpush1.msra.mxu0 0.0
    %267 = vmatprep.subr.mxu0 0.0
    %268 = vmatpush1.msra.mxu0 0.0
    %269 = vmatprep.subr.mxu0 0.0
    %270 = vmatpush1.msra.mxu0 0.0
    %271 = vmatprep.subr.mxu0 0.0
    %272 = vmatpush1.msra.mxu0 0.0
    %273 = vmatprep.subr.mxu0 0.0
    %274 = vmatpush1.msra.mxu0 0.0
    %275 = vmatprep.subr.mxu0 0.0
    %276 = vmatpush1.msra.mxu0 0.0
    %277 = vmatprep.subr.mxu0 0.0
    %278 = vmatpush1.msra.mxu0 0.0
    %279 = vmatprep.subr.mxu0 0.0
    %280 = vmatpush1.msra.mxu0 0.0
    %281 = vmatprep.mubr.f32.mxu0 0.0
    %282 = vmatmul.mubr.f32.gmra.mrb[0].mxu0 %v215
    %v283 = vpop.f32.mrb[0].mxu0
    %v284 = vadd.f32 0.0, %v283
    %v285 = vpop.f32.mrb[0].mxu0
    %v286 = vadd.f32 0.0, %v285
    %287 = vdwg.mxu0
    %288 = vst [vmem:[%s4] sm:$0xff] %v284
    %289 = vst [vmem:[%s4 + $0x8] sm:$0xff] %v286
    %vm290 = vcmask 7168
    %v291 = vsel %vm290, %v206, 0.0
    %292 = vadd.xlane.f32.xlu0 %v291
    %v293 = vpop.xlane.xlu0 %292
    %v294 = vrot.slane %v293, 4
    %v295 = vadd.f32 %v293, %v294
    %v296 = vrot.slane %v295, 2
    %v297 = vadd.f32 %v295, %v296
    %v298 = vrot.slane %v297, 1
    %v299 = vadd.f32 %v297, %v298
    %s300 = vtos %v299
    %s301 = smul.f32 %s300, 128.0
    %s302 = sadd.f32 %s301, 0.0
    %s303 = sld [smem:[#allocation2]]
    %s304 = sadd.f32 %s302, %s303
    %v305 = vld [vmem:[%s4] sm:$0xff]
    %v306 = vld [vmem:[%s4 + $0x8] sm:$0xff]
    %v307 = vmul.f32 %v305, %v305
    %v308 = vmul.f32 %v306, %v306
    %309 = vmatprep.subr.mxu0 %v306
    %310 = vmatpush1.msra.mxu0 %v305
    %311 = vmatprep.subr.mxu0 0.0
    %312 = vmatpush1.msra.mxu0 0.0
    %313 = vmatprep.subr.mxu0 0.0
    %314 = vmatpush1.msra.mxu0 0.0
    %315 = vmatprep.subr.mxu0 0.0
    %316 = vmatpush1.msra.mxu0 0.0
    %317 = vmatprep.subr.mxu0 0.0
    %318 = vmatpush1.msra.mxu0 0.0
    %319 = vmatprep.subr.mxu0 0.0
    %320 = vmatpush1.msra.mxu0 0.0
    %321 = vmatprep.subr.mxu0 0.0
    %322 = vmatpush1.msra.mxu0 0.0
    %323 = vmatprep.subr.mxu0 0.0
    %324 = vmatpush1.msra.mxu0 0.0
    %325 = vmatprep.subr.mxu0 0.0
    %326 = vmatpush1.msra.mxu0 0.0
    %327 = vmatprep.subr.mxu0 0.0
    %328 = vmatpush1.msra.mxu0 0.0
    %329 = vmatprep.subr.mxu0 0.0
    %330 = vmatpush1.msra.mxu0 0.0
    %331 = vmatprep.subr.mxu0 0.0
    %332 = vmatpush1.msra.mxu0 0.0
    %333 = vmatprep.subr.mxu0 0.0
    %334 = vmatpush1.msra.mxu0 0.0
    %335 = vmatprep.subr.mxu0 0.0
    %336 = vmatpush1.msra.mxu0 0.0
    %337 = vmatprep.subr.mxu0 0.0
    %338 = vmatpush1.msra.mxu0 0.0
    %339 = vmatprep.subr.mxu0 0.0
    %340 = vmatpush1.msra.mxu0 0.0
    %341 = vmatprep.subr.mxu0 0.0
    %342 = vmatpush1.msra.mxu0 0.0
    %343 = vmatprep.subr.mxu0 0.0
    %344 = vmatpush1.msra.mxu0 0.0
    %345 = vmatprep.subr.mxu0 0.0
    %346 = vmatpush1.msra.mxu0 0.0
    %347 = vmatprep.subr.mxu0 0.0
    %348 = vmatpush1.msra.mxu0 0.0
    %349 = vmatprep.subr.mxu0 0.0
    %350 = vmatpush1.msra.mxu0 0.0
    %351 = vmatprep.subr.mxu0 0.0
    %352 = vmatpush1.msra.mxu0 0.0
    %353 = vmatprep.subr.mxu0 0.0
    %354 = vmatpush1.msra.mxu0 0.0
    %355 = vmatprep.subr.mxu0 0.0
    %356 = vmatpush1.msra.mxu0 0.0
    %357 = vmatprep.subr.mxu0 0.0
    %358 = vmatpush1.msra.mxu0 0.0
    %359 = vmatprep.subr.mxu0 0.0
    %360 = vmatpush1.msra.mxu0 0.0
    %361 = vmatprep.subr.mxu0 0.0
    %362 = vmatpush1.msra.mxu0 0.0
    %363 = vmatprep.subr.mxu0 0.0
    %364 = vmatpush1.msra.mxu0 0.0
    %365 = vmatprep.subr.mxu0 0.0
    %366 = vmatpush1.msra.mxu0 0.0
    %367 = vmatprep.subr.mxu0 0.0
    %368 = vmatpush1.msra.mxu0 0.0
    %369 = vmatprep.subr.mxu0 0.0
    %370 = vmatpush1.msra.mxu0 0.0
    %371 = vmatprep.subr.mxu0 0.0
    %372 = vmatpush1.msra.mxu0 0.0
    %373 = vmatprep.mubr.f32.mxu0 0.0
    %374 = vmatmul.mubr.f32.gmra.mrb[0].mxu0 %v40
    %v375 = vpop.f32.mrb[0].mxu0
    %v376 = vadd.f32 0.0, %v375
    %v377 = vpop.f32.mrb[0].mxu0
    %v378 = vadd.f32 0.0, %v377
    %379 = vdwg.mxu0
    %v380 = vadd.f32 %v376, %v378
    %381 = vadd.xlane.f32.xlu0 %v380
    %v382 = vpop.xlane.xlu0 %381
    %383 = vmatprep.subr.mxu0 %v308
    %384 = vmatpush1.msra.mxu0 %v307
    %385 = vmatprep.subr.mxu0 0.0
    %386 = vmatpush1.msra.mxu0 0.0
    %387 = vmatprep.subr.mxu0 0.0
    %388 = vmatpush1.msra.mxu0 0.0
    %389 = vmatprep.subr.mxu0 0.0
    %390 = vmatpush1.msra.mxu0 0.0
    %391 = vmatprep.subr.mxu0 0.0
    %392 = vmatpush1.msra.mxu0 0.0
    %393 = vmatprep.subr.mxu0 0.0
    %394 = vmatpush1.msra.mxu0 0.0
    %395 = vmatprep.subr.mxu0 0.0
    %396 = vmatpush1.msra.mxu0 0.0
    %397 = vmatprep.subr.mxu0 0.0
    %398 = vmatpush1.msra.mxu0 0.0
    %399 = vmatprep.subr.mxu0 0.0
    %400 = vmatpush1.msra.mxu0 0.0
    %401 = vmatprep.subr.mxu0 0.0
    %402 = vmatpush1.msra.mxu0 0.0
    %403 = vmatprep.subr.mxu0 0.0
    %404 = vmatpush1.msra.mxu0 0.0
    %405 = vmatprep.subr.mxu0 0.0
    %406 = vmatpush1.msra.mxu0 0.0
    %407 = vmatprep.subr.mxu0 0.0
    %408 = vmatpush1.msra.mxu0 0.0
    %409 = vmatprep.subr.mxu0 0.0
    %410 = vmatpush1.msra.mxu0 0.0
    %411 = vmatprep.subr.mxu0 0.0
    %412 = vmatpush1.msra.mxu0 0.0
    %413 = vmatprep.subr.mxu0 0.0
    %414 = vmatpush1.msra.mxu0 0.0
    %415 = vmatprep.subr.mxu0 0.0
    %416 = vmatpush1.msra.mxu0 0.0
    %417 = vmatprep.subr.mxu0 0.0
    %418 = vmatpush1.msra.mxu0 0.0
    %419 = vmatprep.subr.mxu0 0.0
    %420 = vmatpush1.msra.mxu0 0.0
    %421 = vmatprep.subr.mxu0 0.0
    %422 = vmatpush1.msra.mxu0 0.0
    %423 = vmatprep.subr.mxu0 0.0
    %424 = vmatpush1.msra.mxu0 0.0
    %425 = vmatprep.subr.mxu0 0.0
    %426 = vmatpush1.msra.mxu0 0.0
    %427 = vmatprep.subr.mxu0 0.0
    %428 = vmatpush1.msra.mxu0 0.0
    %429 = vmatprep.subr.mxu0 0.0
    %430 = vmatpush1.msra.mxu0 0.0
    %431 = vmatprep.subr.mxu0 0.0
    %432 = vmatpush1.msra.mxu0 0.0
    %433 = vmatprep.subr.mxu0 0.0
    %434 = vmatpush1.msra.mxu0 0.0
    %435 = vmatprep.subr.mxu0 0.0
    %436 = vmatpush1.msra.mxu0 0.0
    %437 = vmatprep.subr.mxu0 0.0
    %438 = vmatpush1.msra.mxu0 0.0
    %439 = vmatprep.subr.mxu0 0.0
    %440 = vmatpush1.msra.mxu0 0.0
    %441 = vmatprep.subr.mxu0 0.0
    %442 = vmatpush1.msra.mxu0 0.0
    %443 = vmatprep.subr.mxu0 0.0
    %444 = vmatpush1.msra.mxu0 0.0
    %445 = vmatprep.subr.mxu0 0.0
    %446 = vmatpush1.msra.mxu0 0.0
    %447 = vmatprep.mubr.f32.mxu0 0.0
    %448 = vmatmul.mubr.f32.gmra.mrb[0].mxu0 %v40
    %v449 = vpop.f32.mrb[0].mxu0
    %v450 = vadd.f32 0.0, %v449
    %v451 = vpop.f32.mrb[0].mxu0
    %v452 = vadd.f32 0.0, %v451
    %453 = vdwg.mxu0
    %v454 = vadd.f32 %v450, %v452
    %455 = vadd.xlane.f32.xlu0 %v454
    %v456 = vpop.xlane.xlu0 %455
    %v457 = vmul.f32 %v382, 0.001953125
    %v458 = vmul.f32 %v456, 0.001953125
    %v459 = vmul.f32 %v457, %v457
    %v460 = vsub.f32 %v458, %v459
    %v461 = vmax.f32 %v460, 0.0
    %v462 = vrsqrt.pop %v461
    %v463 = vmul.f32 %v461, %v462
    %vm464 = vcmp.eq.f32.partialorder %v461, inf
    %v465 = vsel %vm464, %v461, %v463
    %vm466 = vcmp.eq.f32.partialorder %v461, 0.0
    %v467 = vand.u32 %v461, 2147483648
    %v468 = vsel %vm466, %v467, %v465
    %v469 = vadd.f32 %v468, 1e-06
    %v470 = vrcp.pop %v469
    %v471 = vmul.f32 1.0, %v470
    %v472 = vlog2.pop %v471
    %v473 = vmul.f32 %v472, 0.6931472
    %v474 = vmul.f32 %v473, 1.442695
    %v475 = vpow.pop %v474
    %v476 = vsub.f32 %v305, %v457
    %v477 = vsub.f32 %v306, %v457
    %v478 = vmul.f32 %v476, %v475
    %v479 = vmul.f32 %v477, %v475
    %s480 = scalar_lea.vmem %s1, 8
    %v481 = vld [vmem:[%s480] sm:$0xff]
    %v483 = vsel %vm38, %v481, 0
    %485 = vmatprep.subr.mxu0 %v479
    %486 = vmatpush1.msra.mxu0 %v478
    %487 = vmatprep.subr.mxu0 0.0
    %488 = vmatpush1.msra.mxu0 0.0
    %489 = vmatprep.subr.mxu0 0.0
    %490 = vmatpush1.msra.mxu0 0.0
    %491 = vmatprep.subr.mxu0 0.0
    %492 = vmatpush1.msra.mxu0 0.0
    %493 = vmatprep.subr.mxu0 0.0
    %494 = vmatpush1.msra.mxu0 0.0
    %495 = vmatprep.subr.mxu0 0.0
    %496 = vmatpush1.msra.mxu0 0.0
    %497 = vmatprep.subr.mxu0 0.0
    %498 = vmatpush1.msra.mxu0 0.0
    %499 = vmatprep.subr.mxu0 0.0
    %500 = vmatpush1.msra.mxu0 0.0
    %501 = vmatprep.subr.mxu0 0.0
    %502 = vmatpush1.msra.mxu0 0.0
    %503 = vmatprep.subr.mxu0 0.0
    %504 = vmatpush1.msra.mxu0 0.0
    %505 = vmatprep.subr.mxu0 0.0
    %506 = vmatpush1.msra.mxu0 0.0
    %507 = vmatprep.subr.mxu0 0.0
    %508 = vmatpush1.msra.mxu0 0.0
    %509 = vmatprep.subr.mxu0 0.0
    %510 = vmatpush1.msra.mxu0 0.0
    %511 = vmatprep.subr.mxu0 0.0
    %512 = vmatpush1.msra.mxu0 0.0
    %513 = vmatprep.subr.mxu0 0.0
    %514 = vmatpush1.msra.mxu0 0.0
    %515 = vmatprep.subr.mxu0 0.0
    %516 = vmatpush1.msra.mxu0 0.0
    %517 = vmatprep.subr.mxu0 0.0
    %518 = vmatpush1.msra.mxu0 0.0
    %519 = vmatprep.subr.mxu0 0.0
    %520 = vmatpush1.msra.mxu0 0.0
    %521 = vmatprep.subr.mxu0 0.0
    %522 = vmatpush1.msra.mxu0 0.0
    %523 = vmatprep.subr.mxu0 0.0
    %524 = vmatpush1.msra.mxu0 0.0
    %525 = vmatprep.subr.mxu0 0.0
    %526 = vmatpush1.msra.mxu0 0.0
    %527 = vmatprep.subr.mxu0 0.0
    %528 = vmatpush1.msra.mxu0 0.0
    %529 = vmatprep.subr.mxu0 0.0
    %530 = vmatpush1.msra.mxu0 0.0
    %531 = vmatprep.subr.mxu0 0.0
    %532 = vmatpush1.msra.mxu0 0.0
    %533 = vmatprep.subr.mxu0 0.0
    %534 = vmatpush1.msra.mxu0 0.0
    %535 = vmatprep.subr.mxu0 0.0
    %536 = vmatpush1.msra.mxu0 0.0
    %537 = vmatprep.subr.mxu0 0.0
    %538 = vmatpush1.msra.mxu0 0.0
    %539 = vmatprep.subr.mxu0 0.0
    %540 = vmatpush1.msra.mxu0 0.0
    %541 = vmatprep.subr.mxu0 0.0
    %542 = vmatpush1.msra.mxu0 0.0
    %543 = vmatprep.subr.mxu0 0.0
    %544 = vmatpush1.msra.mxu0 0.0
    %545 = vmatprep.subr.mxu0 0.0
    %546 = vmatpush1.msra.mxu0 0.0
    %547 = vmatprep.subr.mxu0 0.0
    %548 = vmatpush1.msra.mxu0 0.0
    %549 = vmatprep.mubr.f32.mxu0 0.0
    %550 = vmatmul.mubr.f32.gmra.mrb[0].mxu0 %v483
    %v551 = vpop.f32.mrb[0].mxu0
    %v552 = vadd.f32 0.0, %v551
    %v553 = vpop.f32.mrb[0].mxu0
    %v554 = vadd.f32 0.0, %v553
    %555 = vdwg.mxu0
    %556 = vst [vmem:[%s4] sm:$0xff] %v552
    %557 = vst [vmem:[%s4 + $0x8] sm:$0xff] %v554
    %v558 = vsel %vm290, %v473, 0.0
    %559 = vadd.xlane.f32.xlu0 %v558
    %v560 = vpop.xlane.xlu0 %559
    %v561 = vrot.slane %v560, 4
    %v562 = vadd.f32 %v560, %v561
    %v563 = vrot.slane %v562, 2
    %v564 = vadd.f32 %v562, %v563
    %v565 = vrot.slane %v564, 1
    %v566 = vadd.f32 %v564, %v565
    %s567 = vtos %v566
    %s568 = smul.f32 %s567, 128.0
    %s569 = sadd.f32 %s304, %s568
    %s570 = sld [smem:[#allocation2 + $0x1]]
    %s571 = sadd.f32 %s569, %s570
    %v572 = vld [vmem:[%s4] sm:$0xff]
    %v573 = vld [vmem:[%s4 + $0x8] sm:$0xff]
    %v574 = vmul.f32 %v572, %v572
    %v575 = vmul.f32 %v573, %v573
    %576 = vmatprep.subr.mxu0 %v573
    %577 = vmatpush1.msra.mxu0 %v572
    %578 = vmatprep.subr.mxu0 0.0
    %579 = vmatpush1.msra.mxu0 0.0
    %580 = vmatprep.subr.mxu0 0.0
    %581 = vmatpush1.msra.mxu0 0.0
    %582 = vmatprep.subr.mxu0 0.0
    %583 = vmatpush1.msra.mxu0 0.0
    %584 = vmatprep.subr.mxu0 0.0
    %585 = vmatpush1.msra.mxu0 0.0
    %586 = vmatprep.subr.mxu0 0.0
    %587 = vmatpush1.msra.mxu0 0.0
    %588 = vmatprep.subr.mxu0 0.0
    %589 = vmatpush1.msra.mxu0 0.0
    %590 = vmatprep.subr.mxu0 0.0
    %591 = vmatpush1.msra.mxu0 0.0
    %592 = vmatprep.subr.mxu0 0.0
    %593 = vmatpush1.msra.mxu0 0.0
    %594 = vmatprep.subr.mxu0 0.0
    %595 = vmatpush1.msra.mxu0 0.0
    %596 = vmatprep.subr.mxu0 0.0
    %597 = vmatpush1.msra.mxu0 0.0
    %598 = vmatprep.subr.mxu0 0.0
    %599 = vmatpush1.msra.mxu0 0.0
    %600 = vmatprep.subr.mxu0 0.0
    %601 = vmatpush1.msra.mxu0 0.0
    %602 = vmatprep.subr.mxu0 0.0
    %603 = vmatpush1.msra.mxu0 0.0
    %604 = vmatprep.subr.mxu0 0.0
    %605 = vmatpush1.msra.mxu0 0.0
    %606 = vmatprep.subr.mxu0 0.0
    %607 = vmatpush1.msra.mxu0 0.0
    %608 = vmatprep.subr.mxu0 0.0
    %609 = vmatpush1.msra.mxu0 0.0
    %610 = vmatprep.subr.mxu0 0.0
    %611 = vmatpush1.msra.mxu0 0.0
    %612 = vmatprep.subr.mxu0 0.0
    %613 = vmatpush1.msra.mxu0 0.0
    %614 = vmatprep.subr.mxu0 0.0
    %615 = vmatpush1.msra.mxu0 0.0
    %616 = vmatprep.subr.mxu0 0.0
    %617 = vmatpush1.msra.mxu0 0.0
    %618 = vmatprep.subr.mxu0 0.0
    %619 = vmatpush1.msra.mxu0 0.0
    %620 = vmatprep.subr.mxu0 0.0
    %621 = vmatpush1.msra.mxu0 0.0
    %622 = vmatprep.subr.mxu0 0.0
    %623 = vmatpush1.msra.mxu0 0.0
    %624 = vmatprep.subr.mxu0 0.0
    %625 = vmatpush1.msra.mxu0 0.0
    %626 = vmatprep.subr.mxu0 0.0
    %627 = vmatpush1.msra.mxu0 0.0
    %628 = vmatprep.subr.mxu0 0.0
    %629 = vmatpush1.msra.mxu0 0.0
    %630 = vmatprep.subr.mxu0 0.0
    %631 = vmatpush1.msra.mxu0 0.0
    %632 = vmatprep.subr.mxu0 0.0
    %633 = vmatpush1.msra.mxu0 0.0
    %634 = vmatprep.subr.mxu0 0.0
    %635 = vmatpush1.msra.mxu0 0.0
    %636 = vmatprep.subr.mxu0 0.0
    %637 = vmatpush1.msra.mxu0 0.0
    %638 = vmatprep.subr.mxu0 0.0
    %639 = vmatpush1.msra.mxu0 0.0
    %640 = vmatprep.mubr.f32.mxu0 0.0
    %641 = vmatmul.mubr.f32.gmra.mrb[0].mxu0 %v40
    %v642 = vpop.f32.mrb[0].mxu0
    %v643 = vadd.f32 0.0, %v642
    %v644 = vpop.f32.mrb[0].mxu0
    %v645 = vadd.f32 0.0, %v644
    %646 = vdwg.mxu0
    %v647 = vadd.f32 %v643, %v645
    %648 = vadd.xlane.f32.xlu0 %v647
    %v649 = vpop.xlane.xlu0 %648
    %650 = vmatprep.subr.mxu0 %v575
    %651 = vmatpush1.msra.mxu0 %v574
    %652 = vmatprep.subr.mxu0 0.0
    %653 = vmatpush1.msra.mxu0 0.0
    %654 = vmatprep.subr.mxu0 0.0
    %655 = vmatpush1.msra.mxu0 0.0
    %656 = vmatprep.subr.mxu0 0.0
    %657 = vmatpush1.msra.mxu0 0.0
    %658 = vmatprep.subr.mxu0 0.0
    %659 = vmatpush1.msra.mxu0 0.0
    %660 = vmatprep.subr.mxu0 0.0
    %661 = vmatpush1.msra.mxu0 0.0
    %662 = vmatprep.subr.mxu0 0.0
    %663 = vmatpush1.msra.mxu0 0.0
    %664 = vmatprep.subr.mxu0 0.0
    %665 = vmatpush1.msra.mxu0 0.0
    %666 = vmatprep.subr.mxu0 0.0
    %667 = vmatpush1.msra.mxu0 0.0
    %668 = vmatprep.subr.mxu0 0.0
    %669 = vmatpush1.msra.mxu0 0.0
    %670 = vmatprep.subr.mxu0 0.0
    %671 = vmatpush1.msra.mxu0 0.0
    %672 = vmatprep.subr.mxu0 0.0
    %673 = vmatpush1.msra.mxu0 0.0
    %674 = vmatprep.subr.mxu0 0.0
    %675 = vmatpush1.msra.mxu0 0.0
    %676 = vmatprep.subr.mxu0 0.0
    %677 = vmatpush1.msra.mxu0 0.0
    %678 = vmatprep.subr.mxu0 0.0
    %679 = vmatpush1.msra.mxu0 0.0
    %680 = vmatprep.subr.mxu0 0.0
    %681 = vmatpush1.msra.mxu0 0.0
    %682 = vmatprep.subr.mxu0 0.0
    %683 = vmatpush1.msra.mxu0 0.0
    %684 = vmatprep.subr.mxu0 0.0
    %685 = vmatpush1.msra.mxu0 0.0
    %686 = vmatprep.subr.mxu0 0.0
    %687 = vmatpush1.msra.mxu0 0.0
    %688 = vmatprep.subr.mxu0 0.0
    %689 = vmatpush1.msra.mxu0 0.0
    %690 = vmatprep.subr.mxu0 0.0
    %691 = vmatpush1.msra.mxu0 0.0
    %692 = vmatprep.subr.mxu0 0.0
    %693 = vmatpush1.msra.mxu0 0.0
    %694 = vmatprep.subr.mxu0 0.0
    %695 = vmatpush1.msra.mxu0 0.0
    %696 = vmatprep.subr.mxu0 0.0
    %697 = vmatpush1.msra.mxu0 0.0
    %698 = vmatprep.subr.mxu0 0.0
    %699 = vmatpush1.msra.mxu0 0.0
    %700 = vmatprep.subr.mxu0 0.0
    %701 = vmatpush1.msra.mxu0 0.0
    %702 = vmatprep.subr.mxu0 0.0
    %703 = vmatpush1.msra.mxu0 0.0
    %704 = vmatprep.subr.mxu0 0.0
    %705 = vmatpush1.msra.mxu0 0.0
    %706 = vmatprep.subr.mxu0 0.0
    %707 = vmatpush1.msra.mxu0 0.0
    %708 = vmatprep.subr.mxu0 0.0
    %709 = vmatpush1.msra.mxu0 0.0
    %710 = vmatprep.subr.mxu0 0.0
    %711 = vmatpush1.msra.mxu0 0.0
    %712 = vmatprep.subr.mxu0 0.0
    %713 = vmatpush1.msra.mxu0 0.0
    %714 = vmatprep.mubr.f32.mxu0 0.0
    %715 = vmatmul.mubr.f32.gmra.mrb[0].mxu0 %v40
    %v716 = vpop.f32.mrb[0].mxu0
    %v717 = vadd.f32 0.0, %v716
    %v718 = vpop.f32.mrb[0].mxu0
    %v719 = vadd.f32 0.0, %v718
    %720 = vdwg.mxu0
    %v721 = vadd.f32 %v717, %v719
    %722 = vadd.xlane.f32.xlu0 %v721
    %v723 = vpop.xlane.xlu0 %722
    %v724 = vmul.f32 %v649, 0.001953125
    %v725 = vmul.f32 %v723, 0.001953125
    %v726 = vmul.f32 %v724, %v724
    %v727 = vsub.f32 %v725, %v726
    %v728 = vmax.f32 %v727, 0.0
    %v729 = vrsqrt.pop %v728
    %v730 = vmul.f32 %v728, %v729
    %vm731 = vcmp.eq.f32.partialorder %v728, inf
    %v732 = vsel %vm731, %v728, %v730
    %vm733 = vcmp.eq.f32.partialorder %v728, 0.0
    %v734 = vand.u32 %v728, 2147483648
    %v735 = vsel %vm733, %v734, %v732
    %v736 = vadd.f32 %v735, 1e-06
    %v737 = vrcp.pop %v736
    %v738 = vmul.f32 1.0, %v737
    %v739 = vlog2.pop %v738
    %v740 = vmul.f32 %v739, 0.6931472
    %v741 = vmul.f32 %v740, 1.442695
    %v742 = vpow.pop %v741
    %v743 = vsub.f32 %v572, %v724
    %v744 = vsub.f32 %v573, %v724
    %v745 = vmul.f32 %v743, %v742
    %v746 = vmul.f32 %v744, %v742
    %s747 = scalar_lea.vmem %s1, 16
    %v748 = vld [vmem:[%s747] sm:$0xff]
    %v750 = vsel %vm38, %v748, 0
    %752 = vmatprep.subr.mxu0 %v746
    %753 = vmatpush1.msra.mxu0 %v745
    %754 = vmatprep.subr.mxu0 0.0
    %755 = vmatpush1.msra.mxu0 0.0
    %756 = vmatprep.subr.mxu0 0.0
    %757 = vmatpush1.msra.mxu0 0.0
    %758 = vmatprep.subr.mxu0 0.0
    %759 = vmatpush1.msra.mxu0 0.0
    %760 = vmatprep.subr.mxu0 0.0
    %761 = vmatpush1.msra.mxu0 0.0
    %762 = vmatprep.subr.mxu0 0.0
    %763 = vmatpush1.msra.mxu0 0.0
    %764 = vmatprep.subr.mxu0 0.0
    %765 = vmatpush1.msra.mxu0 0.0
    %766 = vmatprep.subr.mxu0 0.0
    %767 = vmatpush1.msra.mxu0 0.0
    %768 = vmatprep.subr.mxu0 0.0
    %769 = vmatpush1.msra.mxu0 0.0
    %770 = vmatprep.subr.mxu0 0.0
    %771 = vmatpush1.msra.mxu0 0.0
    %772 = vmatprep.subr.mxu0 0.0
    %773 = vmatpush1.msra.mxu0 0.0
    %774 = vmatprep.subr.mxu0 0.0
    %775 = vmatpush1.msra.mxu0 0.0
    %776 = vmatprep.subr.mxu0 0.0
    %777 = vmatpush1.msra.mxu0 0.0
    %778 = vmatprep.subr.mxu0 0.0
    %779 = vmatpush1.msra.mxu0 0.0
    %780 = vmatprep.subr.mxu0 0.0
    %781 = vmatpush1.msra.mxu0 0.0
    %782 = vmatprep.subr.mxu0 0.0
    %783 = vmatpush1.msra.mxu0 0.0
    %784 = vmatprep.subr.mxu0 0.0
    %785 = vmatpush1.msra.mxu0 0.0
    %786 = vmatprep.subr.mxu0 0.0
    %787 = vmatpush1.msra.mxu0 0.0
    %788 = vmatprep.subr.mxu0 0.0
    %789 = vmatpush1.msra.mxu0 0.0
    %790 = vmatprep.subr.mxu0 0.0
    %791 = vmatpush1.msra.mxu0 0.0
    %792 = vmatprep.subr.mxu0 0.0
    %793 = vmatpush1.msra.mxu0 0.0
    %794 = vmatprep.subr.mxu0 0.0
    %795 = vmatpush1.msra.mxu0 0.0
    %796 = vmatprep.subr.mxu0 0.0
    %797 = vmatpush1.msra.mxu0 0.0
    %798 = vmatprep.subr.mxu0 0.0
    %799 = vmatpush1.msra.mxu0 0.0
    %800 = vmatprep.subr.mxu0 0.0
    %801 = vmatpush1.msra.mxu0 0.0
    %802 = vmatprep.subr.mxu0 0.0
    %803 = vmatpush1.msra.mxu0 0.0
    %804 = vmatprep.subr.mxu0 0.0
    %805 = vmatpush1.msra.mxu0 0.0
    %806 = vmatprep.subr.mxu0 0.0
    %807 = vmatpush1.msra.mxu0 0.0
    %808 = vmatprep.subr.mxu0 0.0
    %809 = vmatpush1.msra.mxu0 0.0
    %810 = vmatprep.subr.mxu0 0.0
    %811 = vmatpush1.msra.mxu0 0.0
    %812 = vmatprep.subr.mxu0 0.0
    %813 = vmatpush1.msra.mxu0 0.0
    %814 = vmatprep.subr.mxu0 0.0
    %815 = vmatpush1.msra.mxu0 0.0
    %816 = vmatprep.mubr.f32.mxu0 0.0
    %817 = vmatmul.mubr.f32.gmra.mrb[0].mxu0 %v750
    %v818 = vpop.f32.mrb[0].mxu0
    %v819 = vadd.f32 0.0, %v818
    %v820 = vpop.f32.mrb[0].mxu0
    %v821 = vadd.f32 0.0, %v820
    %822 = vdwg.mxu0
    %823 = vst [vmem:[%s4] sm:$0xff] %v819
    %824 = vst [vmem:[%s4 + $0x8] sm:$0xff] %v821
    %v825 = vsel %vm290, %v740, 0.0
    %826 = vadd.xlane.f32.xlu0 %v825
    %v827 = vpop.xlane.xlu0 %826
    %v828 = vrot.slane %v827, 4
    %v829 = vadd.f32 %v827, %v828
    %v830 = vrot.slane %v829, 2
    %v831 = vadd.f32 %v829, %v830
    %v832 = vrot.slane %v831, 1
    %v833 = vadd.f32 %v831, %v832
    %s834 = vtos %v833
    %s835 = smul.f32 %s834, 128.0
    %s836 = sadd.f32 %s571, %s835
    %s837 = sld [smem:[#allocation2 + $0x2]]
    %s838 = sadd.f32 %s836, %s837
    %v839 = vld [vmem:[%s4] sm:$0xff]
    %v840 = vld [vmem:[%s4 + $0x8] sm:$0xff]
    %v841 = vmul.f32 %v839, %v839
    %v842 = vmul.f32 %v840, %v840
    %843 = vmatprep.subr.mxu0 %v840
    %844 = vmatpush1.msra.mxu0 %v839
    %845 = vmatprep.subr.mxu0 0.0
    %846 = vmatpush1.msra.mxu0 0.0
    %847 = vmatprep.subr.mxu0 0.0
    %848 = vmatpush1.msra.mxu0 0.0
    %849 = vmatprep.subr.mxu0 0.0
    %850 = vmatpush1.msra.mxu0 0.0
    %851 = vmatprep.subr.mxu0 0.0
    %852 = vmatpush1.msra.mxu0 0.0
    %853 = vmatprep.subr.mxu0 0.0
    %854 = vmatpush1.msra.mxu0 0.0
    %855 = vmatprep.subr.mxu0 0.0
    %856 = vmatpush1.msra.mxu0 0.0
    %857 = vmatprep.subr.mxu0 0.0
    %858 = vmatpush1.msra.mxu0 0.0
    %859 = vmatprep.subr.mxu0 0.0
    %860 = vmatpush1.msra.mxu0 0.0
    %861 = vmatprep.subr.mxu0 0.0
    %862 = vmatpush1.msra.mxu0 0.0
    %863 = vmatprep.subr.mxu0 0.0
    %864 = vmatpush1.msra.mxu0 0.0
    %865 = vmatprep.subr.mxu0 0.0
    %866 = vmatpush1.msra.mxu0 0.0
    %867 = vmatprep.subr.mxu0 0.0
    %868 = vmatpush1.msra.mxu0 0.0
    %869 = vmatprep.subr.mxu0 0.0
    %870 = vmatpush1.msra.mxu0 0.0
    %871 = vmatprep.subr.mxu0 0.0
    %872 = vmatpush1.msra.mxu0 0.0
    %873 = vmatprep.subr.mxu0 0.0
    %874 = vmatpush1.msra.mxu0 0.0
    %875 = vmatprep.subr.mxu0 0.0
    %876 = vmatpush1.msra.mxu0 0.0
    %877 = vmatprep.subr.mxu0 0.0
    %878 = vmatpush1.msra.mxu0 0.0
    %879 = vmatprep.subr.mxu0 0.0
    %880 = vmatpush1.msra.mxu0 0.0
    %881 = vmatprep.subr.mxu0 0.0
    %882 = vmatpush1.msra.mxu0 0.0
    %883 = vmatprep.subr.mxu0 0.0
    %884 = vmatpush1.msra.mxu0 0.0
    %885 = vmatprep.subr.mxu0 0.0
    %886 = vmatpush1.msra.mxu0 0.0
    %887 = vmatprep.subr.mxu0 0.0
    %888 = vmatpush1.msra.mxu0 0.0
    %889 = vmatprep.subr.mxu0 0.0
    %890 = vmatpush1.msra.mxu0 0.0
    %891 = vmatprep.subr.mxu0 0.0
    %892 = vmatpush1.msra.mxu0 0.0
    %893 = vmatprep.subr.mxu0 0.0
    %894 = vmatpush1.msra.mxu0 0.0
    %895 = vmatprep.subr.mxu0 0.0
    %896 = vmatpush1.msra.mxu0 0.0
    %897 = vmatprep.subr.mxu0 0.0
    %898 = vmatpush1.msra.mxu0 0.0
    %899 = vmatprep.subr.mxu0 0.0
    %900 = vmatpush1.msra.mxu0 0.0
    %901 = vmatprep.subr.mxu0 0.0
    %902 = vmatpush1.msra.mxu0 0.0
    %903 = vmatprep.subr.mxu0 0.0
    %904 = vmatpush1.msra.mxu0 0.0
    %905 = vmatprep.subr.mxu0 0.0
    %906 = vmatpush1.msra.mxu0 0.0
    %907 = vmatprep.mubr.f32.mxu0 0.0
    %908 = vmatmul.mubr.f32.gmra.mrb[0].mxu0 %v40
    %v909 = vpop.f32.mrb[0].mxu0
    %v910 = vadd.f32 0.0, %v909
    %v911 = vpop.f32.mrb[0].mxu0
    %v912 = vadd.f32 0.0, %v911
    %913 = vdwg.mxu0
    %v914 = vadd.f32 %v910, %v912
    %915 = vadd.xlane.f32.xlu0 %v914
    %v916 = vpop.xlane.xlu0 %915
    %917 = vmatprep.subr.mxu0 %v842
    %918 = vmatpush1.msra.mxu0 %v841
    %919 = vmatprep.subr.mxu0 0.0
    %920 = vmatpush1.msra.mxu0 0.0
    %921 = vmatprep.subr.mxu0 0.0
    %922 = vmatpush1.msra.mxu0 0.0
    %923 = vmatprep.subr.mxu0 0.0
    %924 = vmatpush1.msra.mxu0 0.0
    %925 = vmatprep.subr.mxu0 0.0
    %926 = vmatpush1.msra.mxu0 0.0
    %927 = vmatprep.subr.mxu0 0.0
    %928 = vmatpush1.msra.mxu0 0.0
    %929 = vmatprep.subr.mxu0 0.0
    %930 = vmatpush1.msra.mxu0 0.0
    %931 = vmatprep.subr.mxu0 0.0
    %932 = vmatpush1.msra.mxu0 0.0
    %933 = vmatprep.subr.mxu0 0.0
    %934 = vmatpush1.msra.mxu0 0.0
    %935 = vmatprep.subr.mxu0 0.0
    %936 = vmatpush1.msra.mxu0 0.0
    %937 = vmatprep.subr.mxu0 0.0
    %938 = vmatpush1.msra.mxu0 0.0
    %939 = vmatprep.subr.mxu0 0.0
    %940 = vmatpush1.msra.mxu0 0.0
    %941 = vmatprep.subr.mxu0 0.0
    %942 = vmatpush1.msra.mxu0 0.0
    %943 = vmatprep.subr.mxu0 0.0
    %944 = vmatpush1.msra.mxu0 0.0
    %945 = vmatprep.subr.mxu0 0.0
    %946 = vmatpush1.msra.mxu0 0.0
    %947 = vmatprep.subr.mxu0 0.0
    %948 = vmatpush1.msra.mxu0 0.0
    %949 = vmatprep.subr.mxu0 0.0
    %950 = vmatpush1.msra.mxu0 0.0
    %951 = vmatprep.subr.mxu0 0.0
    %952 = vmatpush1.msra.mxu0 0.0
    %953 = vmatprep.subr.mxu0 0.0
    %954 = vmatpush1.msra.mxu0 0.0
    %955 = vmatprep.subr.mxu0 0.0
    %956 = vmatpush1.msra.mxu0 0.0
    %957 = vmatprep.subr.mxu0 0.0
    %958 = vmatpush1.msra.mxu0 0.0
    %959 = vmatprep.subr.mxu0 0.0
    %960 = vmatpush1.msra.mxu0 0.0
    %961 = vmatprep.subr.mxu0 0.0
    %962 = vmatpush1.msra.mxu0 0.0
    %963 = vmatprep.subr.mxu0 0.0
    %964 = vmatpush1.msra.mxu0 0.0
    %965 = vmatprep.subr.mxu0 0.0
    %966 = vmatpush1.msra.mxu0 0.0
    %967 = vmatprep.subr.mxu0 0.0
    %968 = vmatpush1.msra.mxu0 0.0
    %969 = vmatprep.subr.mxu0 0.0
    %970 = vmatpush1.msra.mxu0 0.0
    %971 = vmatprep.subr.mxu0 0.0
    %972 = vmatpush1.msra.mxu0 0.0
    %973 = vmatprep.subr.mxu0 0.0
    %974 = vmatpush1.msra.mxu0 0.0
    %975 = vmatprep.subr.mxu0 0.0
    %976 = vmatpush1.msra.mxu0 0.0
    %977 = vmatprep.subr.mxu0 0.0
    %978 = vmatpush1.msra.mxu0 0.0
    %979 = vmatprep.subr.mxu0 0.0
    %980 = vmatpush1.msra.mxu0 0.0
    %981 = vmatprep.mubr.f32.mxu0 0.0
    %982 = vmatmul.mubr.f32.gmra.mrb[0].mxu0 %v40
    %v983 = vpop.f32.mrb[0].mxu0
    %v984 = vadd.f32 0.0, %v983
    %v985 = vpop.f32.mrb[0].mxu0
    %v986 = vadd.f32 0.0, %v985
    %987 = vdwg.mxu0
    %v988 = vadd.f32 %v984, %v986
    %989 = vadd.xlane.f32.xlu0 %v988
    %v990 = vpop.xlane.xlu0 %989
    %v991 = vmul.f32 %v916, 0.001953125
    %v992 = vmul.f32 %v990, 0.001953125
    %v993 = vmul.f32 %v991, %v991
    %v994 = vsub.f32 %v992, %v993
    %v995 = vmax.f32 %v994, 0.0
    %v996 = vrsqrt.pop %v995
    %v997 = vmul.f32 %v995, %v996
    %vm998 = vcmp.eq.f32.partialorder %v995, inf
    %v999 = vsel %vm998, %v995, %v997
    %vm1000 = vcmp.eq.f32.partialorder %v995, 0.0
    %v1001 = vand.u32 %v995, 2147483648
    %v1002 = vsel %vm1000, %v1001, %v999
    %v1003 = vadd.f32 %v1002, 1e-06
    %v1004 = vrcp.pop %v1003
    %v1005 = vmul.f32 1.0, %v1004
    %v1006 = vlog2.pop %v1005
    %v1007 = vmul.f32 %v1006, 0.6931472
    %v1008 = vmul.f32 %v1007, 1.442695
    %v1009 = vpow.pop %v1008
    %v1010 = vsub.f32 %v839, %v991
    %v1011 = vsub.f32 %v840, %v991
    %v1012 = vmul.f32 %v1010, %v1009
    %v1013 = vmul.f32 %v1011, %v1009
    %s1014 = scalar_lea.vmem %s1, 24
    %v1015 = vld [vmem:[%s1014] sm:$0xff]
    %v1017 = vsel %vm38, %v1015, 0
    %1019 = vmatprep.subr.mxu0 %v1013
    %1020 = vmatpush1.msra.mxu0 %v1012
    %1021 = vmatprep.subr.mxu0 0.0
    %1022 = vmatpush1.msra.mxu0 0.0
    %1023 = vmatprep.subr.mxu0 0.0
    %1024 = vmatpush1.msra.mxu0 0.0
    %1025 = vmatprep.subr.mxu0 0.0
    %1026 = vmatpush1.msra.mxu0 0.0
    %1027 = vmatprep.subr.mxu0 0.0
    %1028 = vmatpush1.msra.mxu0 0.0
    %1029 = vmatprep.subr.mxu0 0.0
    %1030 = vmatpush1.msra.mxu0 0.0
    %1031 = vmatprep.subr.mxu0 0.0
    %1032 = vmatpush1.msra.mxu0 0.0
    %1033 = vmatprep.subr.mxu0 0.0
    %1034 = vmatpush1.msra.mxu0 0.0
    %1035 = vmatprep.subr.mxu0 0.0
    %1036 = vmatpush1.msra.mxu0 0.0
    %1037 = vmatprep.subr.mxu0 0.0
    %1038 = vmatpush1.msra.mxu0 0.0
    %1039 = vmatprep.subr.mxu0 0.0
    %1040 = vmatpush1.msra.mxu0 0.0
    %1041 = vmatprep.subr.mxu0 0.0
    %1042 = vmatpush1.msra.mxu0 0.0
    %1043 = vmatprep.subr.mxu0 0.0
    %1044 = vmatpush1.msra.mxu0 0.0
    %1045 = vmatprep.subr.mxu0 0.0
    %1046 = vmatpush1.msra.mxu0 0.0
    %1047 = vmatprep.subr.mxu0 0.0
    %1048 = vmatpush1.msra.mxu0 0.0
    %1049 = vmatprep.subr.mxu0 0.0
    %1050 = vmatpush1.msra.mxu0 0.0
    %1051 = vmatprep.subr.mxu0 0.0
    %1052 = vmatpush1.msra.mxu0 0.0
    %1053 = vmatprep.subr.mxu0 0.0
    %1054 = vmatpush1.msra.mxu0 0.0
    %1055 = vmatprep.subr.mxu0 0.0
    %1056 = vmatpush1.msra.mxu0 0.0
    %1057 = vmatprep.subr.mxu0 0.0
    %1058 = vmatpush1.msra.mxu0 0.0
    %1059 = vmatprep.subr.mxu0 0.0
    %1060 = vmatpush1.msra.mxu0 0.0
    %1061 = vmatprep.subr.mxu0 0.0
    %1062 = vmatpush1.msra.mxu0 0.0
    %1063 = vmatprep.subr.mxu0 0.0
    %1064 = vmatpush1.msra.mxu0 0.0
    %1065 = vmatprep.subr.mxu0 0.0
    %1066 = vmatpush1.msra.mxu0 0.0
    %1067 = vmatprep.subr.mxu0 0.0
    %1068 = vmatpush1.msra.mxu0 0.0
    %1069 = vmatprep.subr.mxu0 0.0
    %1070 = vmatpush1.msra.mxu0 0.0
    %1071 = vmatprep.subr.mxu0 0.0
    %1072 = vmatpush1.msra.mxu0 0.0
    %1073 = vmatprep.subr.mxu0 0.0
    %1074 = vmatpush1.msra.mxu0 0.0
    %1075 = vmatprep.subr.mxu0 0.0
    %1076 = vmatpush1.msra.mxu0 0.0
    %1077 = vmatprep.subr.mxu0 0.0
    %1078 = vmatpush1.msra.mxu0 0.0
    %1079 = vmatprep.subr.mxu0 0.0
    %1080 = vmatpush1.msra.mxu0 0.0
    %1081 = vmatprep.subr.mxu0 0.0
    %1082 = vmatpush1.msra.mxu0 0.0
    %1083 = vmatprep.mubr.f32.mxu0 0.0
    %1084 = vmatmul.mubr.f32.gmra.mrb[0].mxu0 %v1017
    %v1085 = vpop.f32.mrb[0].mxu0
    %v1086 = vadd.f32 0.0, %v1085
    %v1087 = vpop.f32.mrb[0].mxu0
    %v1088 = vadd.f32 0.0, %v1087
    %1089 = vdwg.mxu0
    %1090 = vst [vmem:[%s4] sm:$0xff] %v1086
    %1091 = vst [vmem:[%s4 + $0x8] sm:$0xff] %v1088
    %v1092 = vsel %vm290, %v1007, 0.0
    %1093 = vadd.xlane.f32.xlu0 %v1092
    %v1094 = vpop.xlane.xlu0 %1093
    %v1095 = vrot.slane %v1094, 4
    %v1096 = vadd.f32 %v1094, %v1095
    %v1097 = vrot.slane %v1096, 2
    %v1098 = vadd.f32 %v1096, %v1097
    %v1099 = vrot.slane %v1098, 1
    %v1100 = vadd.f32 %v1098, %v1099
    %s1101 = vtos %v1100
    %s1102 = smul.f32 %s1101, 128.0
    %s1103 = sadd.f32 %s838, %s1102
    %s1104 = sld [smem:[#allocation2 + $0x3]]
    %s1105 = sadd.f32 %s1103, %s1104
    %v1106 = vld [vmem:[%s4] sm:$0xff]
    %v1107 = vld [vmem:[%s4 + $0x8] sm:$0xff]
    %v1108 = vmul.f32 %v1106, %v1106
    %v1109 = vmul.f32 %v1107, %v1107
    %1110 = vmatprep.subr.mxu0 %v1107
    %1111 = vmatpush1.msra.mxu0 %v1106
    %1112 = vmatprep.subr.mxu0 0.0
    %1113 = vmatpush1.msra.mxu0 0.0
    %1114 = vmatprep.subr.mxu0 0.0
    %1115 = vmatpush1.msra.mxu0 0.0
    %1116 = vmatprep.subr.mxu0 0.0
    %1117 = vmatpush1.msra.mxu0 0.0
    %1118 = vmatprep.subr.mxu0 0.0
    %1119 = vmatpush1.msra.mxu0 0.0
    %1120 = vmatprep.subr.mxu0 0.0
    %1121 = vmatpush1.msra.mxu0 0.0
    %1122 = vmatprep.subr.mxu0 0.0
    %1123 = vmatpush1.msra.mxu0 0.0
    %1124 = vmatprep.subr.mxu0 0.0
    %1125 = vmatpush1.msra.mxu0 0.0
    %1126 = vmatprep.subr.mxu0 0.0
    %1127 = vmatpush1.msra.mxu0 0.0
    %1128 = vmatprep.subr.mxu0 0.0
    %1129 = vmatpush1.msra.mxu0 0.0
    %1130 = vmatprep.subr.mxu0 0.0
    %1131 = vmatpush1.msra.mxu0 0.0
    %1132 = vmatprep.subr.mxu0 0.0
    %1133 = vmatpush1.msra.mxu0 0.0
    %1134 = vmatprep.subr.mxu0 0.0
    %1135 = vmatpush1.msra.mxu0 0.0
    %1136 = vmatprep.subr.mxu0 0.0
    %1137 = vmatpush1.msra.mxu0 0.0
    %1138 = vmatprep.subr.mxu0 0.0
    %1139 = vmatpush1.msra.mxu0 0.0
    %1140 = vmatprep.subr.mxu0 0.0
    %1141 = vmatpush1.msra.mxu0 0.0
    %1142 = vmatprep.subr.mxu0 0.0
    %1143 = vmatpush1.msra.mxu0 0.0
    %1144 = vmatprep.subr.mxu0 0.0
    %1145 = vmatpush1.msra.mxu0 0.0
    %1146 = vmatprep.subr.mxu0 0.0
    %1147 = vmatpush1.msra.mxu0 0.0
    %1148 = vmatprep.subr.mxu0 0.0
    %1149 = vmatpush1.msra.mxu0 0.0
    %1150 = vmatprep.subr.mxu0 0.0
    %1151 = vmatpush1.msra.mxu0 0.0
    %1152 = vmatprep.subr.mxu0 0.0
    %1153 = vmatpush1.msra.mxu0 0.0
    %1154 = vmatprep.subr.mxu0 0.0
    %1155 = vmatpush1.msra.mxu0 0.0
    %1156 = vmatprep.subr.mxu0 0.0
    %1157 = vmatpush1.msra.mxu0 0.0
    %1158 = vmatprep.subr.mxu0 0.0
    %1159 = vmatpush1.msra.mxu0 0.0
    %1160 = vmatprep.subr.mxu0 0.0
    %1161 = vmatpush1.msra.mxu0 0.0
    %1162 = vmatprep.subr.mxu0 0.0
    %1163 = vmatpush1.msra.mxu0 0.0
    %1164 = vmatprep.subr.mxu0 0.0
    %1165 = vmatpush1.msra.mxu0 0.0
    %1166 = vmatprep.subr.mxu0 0.0
    %1167 = vmatpush1.msra.mxu0 0.0
    %1168 = vmatprep.subr.mxu0 0.0
    %1169 = vmatpush1.msra.mxu0 0.0
    %1170 = vmatprep.subr.mxu0 0.0
    %1171 = vmatpush1.msra.mxu0 0.0
    %1172 = vmatprep.subr.mxu0 0.0
    %1173 = vmatpush1.msra.mxu0 0.0
    %1174 = vmatprep.mubr.f32.mxu0 0.0
    %1175 = vmatmul.mubr.f32.gmra.mrb[0].mxu0 %v40
    %v1176 = vpop.f32.mrb[0].mxu0
    %v1177 = vadd.f32 0.0, %v1176
    %v1178 = vpop.f32.mrb[0].mxu0
    %v1179 = vadd.f32 0.0, %v1178
    %1180 = vdwg.mxu0
    %v1181 = vadd.f32 %v1177, %v1179
    %1182 = vadd.xlane.f32.xlu0 %v1181
    %v1183 = vpop.xlane.xlu0 %1182
    %1184 = vmatprep.subr.mxu0 %v1109
    %1185 = vmatpush1.msra.mxu0 %v1108
    %1186 = vmatprep.subr.mxu0 0.0
    %1187 = vmatpush1.msra.mxu0 0.0
    %1188 = vmatprep.subr.mxu0 0.0
    %1189 = vmatpush1.msra.mxu0 0.0
    %1190 = vmatprep.subr.mxu0 0.0
    %1191 = vmatpush1.msra.mxu0 0.0
    %1192 = vmatprep.subr.mxu0 0.0
    %1193 = vmatpush1.msra.mxu0 0.0
    %1194 = vmatprep.subr.mxu0 0.0
    %1195 = vmatpush1.msra.mxu0 0.0
    %1196 = vmatprep.subr.mxu0 0.0
    %1197 = vmatpush1.msra.mxu0 0.0
    %1198 = vmatprep.subr.mxu0 0.0
    %1199 = vmatpush1.msra.mxu0 0.0
    %1200 = vmatprep.subr.mxu0 0.0
    %1201 = vmatpush1.msra.mxu0 0.0
    %1202 = vmatprep.subr.mxu0 0.0
    %1203 = vmatpush1.msra.mxu0 0.0
    %1204 = vmatprep.subr.mxu0 0.0
    %1205 = vmatpush1.msra.mxu0 0.0
    %1206 = vmatprep.subr.mxu0 0.0
    %1207 = vmatpush1.msra.mxu0 0.0
    %1208 = vmatprep.subr.mxu0 0.0
    %1209 = vmatpush1.msra.mxu0 0.0
    %1210 = vmatprep.subr.mxu0 0.0
    %1211 = vmatpush1.msra.mxu0 0.0
    %1212 = vmatprep.subr.mxu0 0.0
    %1213 = vmatpush1.msra.mxu0 0.0
    %1214 = vmatprep.subr.mxu0 0.0
    %1215 = vmatpush1.msra.mxu0 0.0
    %1216 = vmatprep.subr.mxu0 0.0
    %1217 = vmatpush1.msra.mxu0 0.0
    %1218 = vmatprep.subr.mxu0 0.0
    %1219 = vmatpush1.msra.mxu0 0.0
    %1220 = vmatprep.subr.mxu0 0.0
    %1221 = vmatpush1.msra.mxu0 0.0
    %1222 = vmatprep.subr.mxu0 0.0
    %1223 = vmatpush1.msra.mxu0 0.0
    %1224 = vmatprep.subr.mxu0 0.0
    %1225 = vmatpush1.msra.mxu0 0.0
    %1226 = vmatprep.subr.mxu0 0.0
    %1227 = vmatpush1.msra.mxu0 0.0
    %1228 = vmatprep.subr.mxu0 0.0
    %1229 = vmatpush1.msra.mxu0 0.0
    %1230 = vmatprep.subr.mxu0 0.0
    %1231 = vmatpush1.msra.mxu0 0.0
    %1232 = vmatprep.subr.mxu0 0.0
    %1233 = vmatpush1.msra.mxu0 0.0
    %1234 = vmatprep.subr.mxu0 0.0
    %1235 = vmatpush1.msra.mxu0 0.0
    %1236 = vmatprep.subr.mxu0 0.0
    %1237 = vmatpush1.msra.mxu0 0.0
    %1238 = vmatprep.subr.mxu0 0.0
    %1239 = vmatpush1.msra.mxu0 0.0
    %1240 = vmatprep.subr.mxu0 0.0
    %1241 = vmatpush1.msra.mxu0 0.0
    %1242 = vmatprep.subr.mxu0 0.0
    %1243 = vmatpush1.msra.mxu0 0.0
    %1244 = vmatprep.subr.mxu0 0.0
    %1245 = vmatpush1.msra.mxu0 0.0
    %1246 = vmatprep.subr.mxu0 0.0
    %1247 = vmatpush1.msra.mxu0 0.0
    %1248 = vmatprep.mubr.f32.mxu0 0.0
    %1249 = vmatmul.mubr.f32.gmra.mrb[0].mxu0 %v40
    %v1250 = vpop.f32.mrb[0].mxu0
    %v1251 = vadd.f32 0.0, %v1250
    %v1252 = vpop.f32.mrb[0].mxu0
    %v1253 = vadd.f32 0.0, %v1252
    %1254 = vdwg.mxu0
    %v1255 = vadd.f32 %v1251, %v1253
    %1256 = vadd.xlane.f32.xlu0 %v1255
    %v1257 = vpop.xlane.xlu0 %1256
    %v1258 = vmul.f32 %v1183, 0.001953125
    %v1259 = vmul.f32 %v1257, 0.001953125
    %v1260 = vmul.f32 %v1258, %v1258
    %v1261 = vsub.f32 %v1259, %v1260
    %v1262 = vmax.f32 %v1261, 0.0
    %v1263 = vrsqrt.pop %v1262
    %v1264 = vmul.f32 %v1262, %v1263
    %vm1265 = vcmp.eq.f32.partialorder %v1262, inf
    %v1266 = vsel %vm1265, %v1262, %v1264
    %vm1267 = vcmp.eq.f32.partialorder %v1262, 0.0
    %v1268 = vand.u32 %v1262, 2147483648
    %v1269 = vsel %vm1267, %v1268, %v1266
    %v1270 = vadd.f32 %v1269, 1e-06
    %v1271 = vrcp.pop %v1270
    %v1272 = vmul.f32 1.0, %v1271
    %v1273 = vlog2.pop %v1272
    %v1274 = vmul.f32 %v1273, 0.6931472
    %v1275 = vmul.f32 %v1274, 1.442695
    %v1276 = vpow.pop %v1275
    %v1277 = vsub.f32 %v1106, %v1258
    %v1278 = vsub.f32 %v1107, %v1258
    %v1279 = vmul.f32 %v1277, %v1276
    %v1280 = vmul.f32 %v1278, %v1276
    %s1281 = scalar_lea.vmem %s1, 32
    %v1282 = vld [vmem:[%s1281] sm:$0xff]
    %v1284 = vsel %vm38, %v1282, 0
    %1286 = vmatprep.subr.mxu0 %v1280
    %1287 = vmatpush1.msra.mxu0 %v1279
    %1288 = vmatprep.subr.mxu0 0.0
    %1289 = vmatpush1.msra.mxu0 0.0
    %1290 = vmatprep.subr.mxu0 0.0
    %1291 = vmatpush1.msra.mxu0 0.0
    %1292 = vmatprep.subr.mxu0 0.0
    %1293 = vmatpush1.msra.mxu0 0.0
    %1294 = vmatprep.subr.mxu0 0.0
    %1295 = vmatpush1.msra.mxu0 0.0
    %1296 = vmatprep.subr.mxu0 0.0
    %1297 = vmatpush1.msra.mxu0 0.0
    %1298 = vmatprep.subr.mxu0 0.0
    %1299 = vmatpush1.msra.mxu0 0.0
    %1300 = vmatprep.subr.mxu0 0.0
    %1301 = vmatpush1.msra.mxu0 0.0
    %1302 = vmatprep.subr.mxu0 0.0
    %1303 = vmatpush1.msra.mxu0 0.0
    %1304 = vmatprep.subr.mxu0 0.0
    %1305 = vmatpush1.msra.mxu0 0.0
    %1306 = vmatprep.subr.mxu0 0.0
    %1307 = vmatpush1.msra.mxu0 0.0
    %1308 = vmatprep.subr.mxu0 0.0
    %1309 = vmatpush1.msra.mxu0 0.0
    %1310 = vmatprep.subr.mxu0 0.0
    %1311 = vmatpush1.msra.mxu0 0.0
    %1312 = vmatprep.subr.mxu0 0.0
    %1313 = vmatpush1.msra.mxu0 0.0
    %1314 = vmatprep.subr.mxu0 0.0
    %1315 = vmatpush1.msra.mxu0 0.0
    %1316 = vmatprep.subr.mxu0 0.0
    %1317 = vmatpush1.msra.mxu0 0.0
    %1318 = vmatprep.subr.mxu0 0.0
    %1319 = vmatpush1.msra.mxu0 0.0
    %1320 = vmatprep.subr.mxu0 0.0
    %1321 = vmatpush1.msra.mxu0 0.0
    %1322 = vmatprep.subr.mxu0 0.0
    %1323 = vmatpush1.msra.mxu0 0.0
    %1324 = vmatprep.subr.mxu0 0.0
    %1325 = vmatpush1.msra.mxu0 0.0
    %1326 = vmatprep.subr.mxu0 0.0
    %1327 = vmatpush1.msra.mxu0 0.0
    %1328 = vmatprep.subr.mxu0 0.0
    %1329 = vmatpush1.msra.mxu0 0.0
    %1330 = vmatprep.subr.mxu0 0.0
    %1331 = vmatpush1.msra.mxu0 0.0
    %1332 = vmatprep.subr.mxu0 0.0
    %1333 = vmatpush1.msra.mxu0 0.0
    %1334 = vmatprep.subr.mxu0 0.0
    %1335 = vmatpush1.msra.mxu0 0.0
    %1336 = vmatprep.subr.mxu0 0.0
    %1337 = vmatpush1.msra.mxu0 0.0
    %1338 = vmatprep.subr.mxu0 0.0
    %1339 = vmatpush1.msra.mxu0 0.0
    %1340 = vmatprep.subr.mxu0 0.0
    %1341 = vmatpush1.msra.mxu0 0.0
    %1342 = vmatprep.subr.mxu0 0.0
    %1343 = vmatpush1.msra.mxu0 0.0
    %1344 = vmatprep.subr.mxu0 0.0
    %1345 = vmatpush1.msra.mxu0 0.0
    %1346 = vmatprep.subr.mxu0 0.0
    %1347 = vmatpush1.msra.mxu0 0.0
    %1348 = vmatprep.subr.mxu0 0.0
    %1349 = vmatpush1.msra.mxu0 0.0
    %1350 = vmatprep.mubr.f32.mxu0 0.0
    %1351 = vmatmul.mubr.f32.gmra.mrb[0].mxu0 %v1284
    %v1352 = vpop.f32.mrb[0].mxu0
    %v1353 = vadd.f32 0.0, %v1352
    %v1354 = vpop.f32.mrb[0].mxu0
    %v1355 = vadd.f32 0.0, %v1354
    %1356 = vdwg.mxu0
    %1357 = vst [vmem:[%s4] sm:$0xff] %v1353
    %1358 = vst [vmem:[%s4 + $0x8] sm:$0xff] %v1355
    %v1359 = vsel %vm290, %v1274, 0.0
    %1360 = vadd.xlane.f32.xlu0 %v1359
    %v1361 = vpop.xlane.xlu0 %1360
    %v1362 = vrot.slane %v1361, 4
    %v1363 = vadd.f32 %v1361, %v1362
    %v1364 = vrot.slane %v1363, 2
    %v1365 = vadd.f32 %v1363, %v1364
    %v1366 = vrot.slane %v1365, 1
    %v1367 = vadd.f32 %v1365, %v1366
    %s1368 = vtos %v1367
    %s1369 = smul.f32 %s1368, 128.0
    %s1370 = sadd.f32 %s1105, %s1369
    %s1371 = sld [smem:[#allocation2 + $0x4]]
    %s1372 = sadd.f32 %s1370, %s1371
    %v1373 = vld [vmem:[%s4] sm:$0xff]
    %v1374 = vld [vmem:[%s4 + $0x8] sm:$0xff]
    %v1375 = vmul.f32 %v1373, %v1373
    %v1376 = vmul.f32 %v1374, %v1374
    %1377 = vmatprep.subr.mxu0 %v1374
    %1378 = vmatpush1.msra.mxu0 %v1373
    %1379 = vmatprep.subr.mxu0 0.0
    %1380 = vmatpush1.msra.mxu0 0.0
    %1381 = vmatprep.subr.mxu0 0.0
    %1382 = vmatpush1.msra.mxu0 0.0
    %1383 = vmatprep.subr.mxu0 0.0
    %1384 = vmatpush1.msra.mxu0 0.0
    %1385 = vmatprep.subr.mxu0 0.0
    %1386 = vmatpush1.msra.mxu0 0.0
    %1387 = vmatprep.subr.mxu0 0.0
    %1388 = vmatpush1.msra.mxu0 0.0
    %1389 = vmatprep.subr.mxu0 0.0
    %1390 = vmatpush1.msra.mxu0 0.0
    %1391 = vmatprep.subr.mxu0 0.0
    %1392 = vmatpush1.msra.mxu0 0.0
    %1393 = vmatprep.subr.mxu0 0.0
    %1394 = vmatpush1.msra.mxu0 0.0
    %1395 = vmatprep.subr.mxu0 0.0
    %1396 = vmatpush1.msra.mxu0 0.0
    %1397 = vmatprep.subr.mxu0 0.0
    %1398 = vmatpush1.msra.mxu0 0.0
    %1399 = vmatprep.subr.mxu0 0.0
    %1400 = vmatpush1.msra.mxu0 0.0
    %1401 = vmatprep.subr.mxu0 0.0
    %1402 = vmatpush1.msra.mxu0 0.0
    %1403 = vmatprep.subr.mxu0 0.0
    %1404 = vmatpush1.msra.mxu0 0.0
    %1405 = vmatprep.subr.mxu0 0.0
    %1406 = vmatpush1.msra.mxu0 0.0
    %1407 = vmatprep.subr.mxu0 0.0
    %1408 = vmatpush1.msra.mxu0 0.0
    %1409 = vmatprep.subr.mxu0 0.0
    %1410 = vmatpush1.msra.mxu0 0.0
    %1411 = vmatprep.subr.mxu0 0.0
    %1412 = vmatpush1.msra.mxu0 0.0
    %1413 = vmatprep.subr.mxu0 0.0
    %1414 = vmatpush1.msra.mxu0 0.0
    %1415 = vmatprep.subr.mxu0 0.0
    %1416 = vmatpush1.msra.mxu0 0.0
    %1417 = vmatprep.subr.mxu0 0.0
    %1418 = vmatpush1.msra.mxu0 0.0
    %1419 = vmatprep.subr.mxu0 0.0
    %1420 = vmatpush1.msra.mxu0 0.0
    %1421 = vmatprep.subr.mxu0 0.0
    %1422 = vmatpush1.msra.mxu0 0.0
    %1423 = vmatprep.subr.mxu0 0.0
    %1424 = vmatpush1.msra.mxu0 0.0
    %1425 = vmatprep.subr.mxu0 0.0
    %1426 = vmatpush1.msra.mxu0 0.0
    %1427 = vmatprep.subr.mxu0 0.0
    %1428 = vmatpush1.msra.mxu0 0.0
    %1429 = vmatprep.subr.mxu0 0.0
    %1430 = vmatpush1.msra.mxu0 0.0
    %1431 = vmatprep.subr.mxu0 0.0
    %1432 = vmatpush1.msra.mxu0 0.0
    %1433 = vmatprep.subr.mxu0 0.0
    %1434 = vmatpush1.msra.mxu0 0.0
    %1435 = vmatprep.subr.mxu0 0.0
    %1436 = vmatpush1.msra.mxu0 0.0
    %1437 = vmatprep.subr.mxu0 0.0
    %1438 = vmatpush1.msra.mxu0 0.0
    %1439 = vmatprep.subr.mxu0 0.0
    %1440 = vmatpush1.msra.mxu0 0.0
    %1441 = vmatprep.mubr.f32.mxu0 0.0
    %1442 = vmatmul.mubr.f32.gmra.mrb[0].mxu0 %v40
    %v1443 = vpop.f32.mrb[0].mxu0
    %v1444 = vadd.f32 0.0, %v1443
    %v1445 = vpop.f32.mrb[0].mxu0
    %v1446 = vadd.f32 0.0, %v1445
    %1447 = vdwg.mxu0
    %v1448 = vadd.f32 %v1444, %v1446
    %1449 = vadd.xlane.f32.xlu0 %v1448
    %v1450 = vpop.xlane.xlu0 %1449
    %1451 = vmatprep.subr.mxu0 %v1376
    %1452 = vmatpush1.msra.mxu0 %v1375
    %1453 = vmatprep.subr.mxu0 0.0
    %1454 = vmatpush1.msra.mxu0 0.0
    %1455 = vmatprep.subr.mxu0 0.0
    %1456 = vmatpush1.msra.mxu0 0.0
    %1457 = vmatprep.subr.mxu0 0.0
    %1458 = vmatpush1.msra.mxu0 0.0
    %1459 = vmatprep.subr.mxu0 0.0
    %1460 = vmatpush1.msra.mxu0 0.0
    %1461 = vmatprep.subr.mxu0 0.0
    %1462 = vmatpush1.msra.mxu0 0.0
    %1463 = vmatprep.subr.mxu0 0.0
    %1464 = vmatpush1.msra.mxu0 0.0
    %1465 = vmatprep.subr.mxu0 0.0
    %1466 = vmatpush1.msra.mxu0 0.0
    %1467 = vmatprep.subr.mxu0 0.0
    %1468 = vmatpush1.msra.mxu0 0.0
    %1469 = vmatprep.subr.mxu0 0.0
    %1470 = vmatpush1.msra.mxu0 0.0
    %1471 = vmatprep.subr.mxu0 0.0
    %1472 = vmatpush1.msra.mxu0 0.0
    %1473 = vmatprep.subr.mxu0 0.0
    %1474 = vmatpush1.msra.mxu0 0.0
    %1475 = vmatprep.subr.mxu0 0.0
    %1476 = vmatpush1.msra.mxu0 0.0
    %1477 = vmatprep.subr.mxu0 0.0
    %1478 = vmatpush1.msra.mxu0 0.0
    %1479 = vmatprep.subr.mxu0 0.0
    %1480 = vmatpush1.msra.mxu0 0.0
    %1481 = vmatprep.subr.mxu0 0.0
    %1482 = vmatpush1.msra.mxu0 0.0
    %1483 = vmatprep.subr.mxu0 0.0
    %1484 = vmatpush1.msra.mxu0 0.0
    %1485 = vmatprep.subr.mxu0 0.0
    %1486 = vmatpush1.msra.mxu0 0.0
    %1487 = vmatprep.subr.mxu0 0.0
    %1488 = vmatpush1.msra.mxu0 0.0
    %1489 = vmatprep.subr.mxu0 0.0
    %1490 = vmatpush1.msra.mxu0 0.0
    %1491 = vmatprep.subr.mxu0 0.0
    %1492 = vmatpush1.msra.mxu0 0.0
    %1493 = vmatprep.subr.mxu0 0.0
    %1494 = vmatpush1.msra.mxu0 0.0
    %1495 = vmatprep.subr.mxu0 0.0
    %1496 = vmatpush1.msra.mxu0 0.0
    %1497 = vmatprep.subr.mxu0 0.0
    %1498 = vmatpush1.msra.mxu0 0.0
    %1499 = vmatprep.subr.mxu0 0.0
    %1500 = vmatpush1.msra.mxu0 0.0
    %1501 = vmatprep.subr.mxu0 0.0
    %1502 = vmatpush1.msra.mxu0 0.0
    %1503 = vmatprep.subr.mxu0 0.0
    %1504 = vmatpush1.msra.mxu0 0.0
    %1505 = vmatprep.subr.mxu0 0.0
    %1506 = vmatpush1.msra.mxu0 0.0
    %1507 = vmatprep.subr.mxu0 0.0
    %1508 = vmatpush1.msra.mxu0 0.0
    %1509 = vmatprep.subr.mxu0 0.0
    %1510 = vmatpush1.msra.mxu0 0.0
    %1511 = vmatprep.subr.mxu0 0.0
    %1512 = vmatpush1.msra.mxu0 0.0
    %1513 = vmatprep.subr.mxu0 0.0
    %1514 = vmatpush1.msra.mxu0 0.0
    %1515 = vmatprep.mubr.f32.mxu0 0.0
    %1516 = vmatmul.mubr.f32.gmra.mrb[0].mxu0 %v40
    %v1517 = vpop.f32.mrb[0].mxu0
    %v1518 = vadd.f32 0.0, %v1517
    %v1519 = vpop.f32.mrb[0].mxu0
    %v1520 = vadd.f32 0.0, %v1519
    %1521 = vdwg.mxu0
    %v1522 = vadd.f32 %v1518, %v1520
    %1523 = vadd.xlane.f32.xlu0 %v1522
    %v1524 = vpop.xlane.xlu0 %1523
    %v1525 = vmul.f32 %v1450, 0.001953125
    %v1526 = vmul.f32 %v1524, 0.001953125
    %v1527 = vmul.f32 %v1525, %v1525
    %v1528 = vsub.f32 %v1526, %v1527
    %v1529 = vmax.f32 %v1528, 0.0
    %v1530 = vrsqrt.pop %v1529
    %v1531 = vmul.f32 %v1529, %v1530
    %vm1532 = vcmp.eq.f32.partialorder %v1529, inf
    %v1533 = vsel %vm1532, %v1529, %v1531
    %vm1534 = vcmp.eq.f32.partialorder %v1529, 0.0
    %v1535 = vand.u32 %v1529, 2147483648
    %v1536 = vsel %vm1534, %v1535, %v1533
    %v1537 = vadd.f32 %v1536, 1e-06
    %v1538 = vrcp.pop %v1537
    %v1539 = vmul.f32 1.0, %v1538
    %v1540 = vlog2.pop %v1539
    %v1541 = vmul.f32 %v1540, 0.6931472
    %v1542 = vmul.f32 %v1541, 1.442695
    %v1543 = vpow.pop %v1542
    %v1544 = vsub.f32 %v1373, %v1525
    %v1545 = vsub.f32 %v1374, %v1525
    %v1546 = vmul.f32 %v1544, %v1543
    %v1547 = vmul.f32 %v1545, %v1543
    %s1548 = scalar_lea.vmem %s1, 40
    %v1549 = vld [vmem:[%s1548] sm:$0xff]
    %v1551 = vsel %vm38, %v1549, 0
    %1553 = vmatprep.subr.mxu0 %v1547
    %1554 = vmatpush1.msra.mxu0 %v1546
    %1555 = vmatprep.subr.mxu0 0.0
    %1556 = vmatpush1.msra.mxu0 0.0
    %1557 = vmatprep.subr.mxu0 0.0
    %1558 = vmatpush1.msra.mxu0 0.0
    %1559 = vmatprep.subr.mxu0 0.0
    %1560 = vmatpush1.msra.mxu0 0.0
    %1561 = vmatprep.subr.mxu0 0.0
    %1562 = vmatpush1.msra.mxu0 0.0
    %1563 = vmatprep.subr.mxu0 0.0
    %1564 = vmatpush1.msra.mxu0 0.0
    %1565 = vmatprep.subr.mxu0 0.0
    %1566 = vmatpush1.msra.mxu0 0.0
    %1567 = vmatprep.subr.mxu0 0.0
    %1568 = vmatpush1.msra.mxu0 0.0
    %1569 = vmatprep.subr.mxu0 0.0
    %1570 = vmatpush1.msra.mxu0 0.0
    %1571 = vmatprep.subr.mxu0 0.0
    %1572 = vmatpush1.msra.mxu0 0.0
    %1573 = vmatprep.subr.mxu0 0.0
    %1574 = vmatpush1.msra.mxu0 0.0
    %1575 = vmatprep.subr.mxu0 0.0
    %1576 = vmatpush1.msra.mxu0 0.0
    %1577 = vmatprep.subr.mxu0 0.0
    %1578 = vmatpush1.msra.mxu0 0.0
    %1579 = vmatprep.subr.mxu0 0.0
    %1580 = vmatpush1.msra.mxu0 0.0
    %1581 = vmatprep.subr.mxu0 0.0
    %1582 = vmatpush1.msra.mxu0 0.0
    %1583 = vmatprep.subr.mxu0 0.0
    %1584 = vmatpush1.msra.mxu0 0.0
    %1585 = vmatprep.subr.mxu0 0.0
    %1586 = vmatpush1.msra.mxu0 0.0
    %1587 = vmatprep.subr.mxu0 0.0
    %1588 = vmatpush1.msra.mxu0 0.0
    %1589 = vmatprep.subr.mxu0 0.0
    %1590 = vmatpush1.msra.mxu0 0.0
    %1591 = vmatprep.subr.mxu0 0.0
    %1592 = vmatpush1.msra.mxu0 0.0
    %1593 = vmatprep.subr.mxu0 0.0
    %1594 = vmatpush1.msra.mxu0 0.0
    %1595 = vmatprep.subr.mxu0 0.0
    %1596 = vmatpush1.msra.mxu0 0.0
    %1597 = vmatprep.subr.mxu0 0.0
    %1598 = vmatpush1.msra.mxu0 0.0
    %1599 = vmatprep.subr.mxu0 0.0
    %1600 = vmatpush1.msra.mxu0 0.0
    %1601 = vmatprep.subr.mxu0 0.0
    %1602 = vmatpush1.msra.mxu0 0.0
    %1603 = vmatprep.subr.mxu0 0.0
    %1604 = vmatpush1.msra.mxu0 0.0
    %1605 = vmatprep.subr.mxu0 0.0
    %1606 = vmatpush1.msra.mxu0 0.0
    %1607 = vmatprep.subr.mxu0 0.0
    %1608 = vmatpush1.msra.mxu0 0.0
    %1609 = vmatprep.subr.mxu0 0.0
    %1610 = vmatpush1.msra.mxu0 0.0
    %1611 = vmatprep.subr.mxu0 0.0
    %1612 = vmatpush1.msra.mxu0 0.0
    %1613 = vmatprep.subr.mxu0 0.0
    %1614 = vmatpush1.msra.mxu0 0.0
    %1615 = vmatprep.subr.mxu0 0.0
    %1616 = vmatpush1.msra.mxu0 0.0
    %1617 = vmatprep.mubr.f32.mxu0 0.0
    %1618 = vmatmul.mubr.f32.gmra.mrb[0].mxu0 %v1551
    %v1619 = vpop.f32.mrb[0].mxu0
    %v1620 = vadd.f32 0.0, %v1619
    %v1621 = vpop.f32.mrb[0].mxu0
    %v1622 = vadd.f32 0.0, %v1621
    %1623 = vdwg.mxu0
    %1624 = vst [vmem:[%s4] sm:$0xff] %v1620
    %1625 = vst [vmem:[%s4 + $0x8] sm:$0xff] %v1622
    %v1626 = vsel %vm290, %v1541, 0.0
    %1627 = vadd.xlane.f32.xlu0 %v1626
    %v1628 = vpop.xlane.xlu0 %1627
    %v1629 = vrot.slane %v1628, 4
    %v1630 = vadd.f32 %v1628, %v1629
    %v1631 = vrot.slane %v1630, 2
    %v1632 = vadd.f32 %v1630, %v1631
    %v1633 = vrot.slane %v1632, 1
    %v1634 = vadd.f32 %v1632, %v1633
    %s1635 = vtos %v1634
    %s1636 = smul.f32 %s1635, 128.0
    %s1637 = sadd.f32 %s1372, %s1636
    %s1638 = sld [smem:[#allocation2 + $0x5]]
    %s1639 = sadd.f32 %s1637, %s1638
    %v1640 = vld [vmem:[%s4] sm:$0xff]
    %v1641 = vld [vmem:[%s4 + $0x8] sm:$0xff]
    %v1642 = vmul.f32 %v1640, %v1640
    %v1643 = vmul.f32 %v1641, %v1641
    %1644 = vmatprep.subr.mxu0 %v1641
    %1645 = vmatpush1.msra.mxu0 %v1640
    %1646 = vmatprep.subr.mxu0 0.0
    %1647 = vmatpush1.msra.mxu0 0.0
    %1648 = vmatprep.subr.mxu0 0.0
    %1649 = vmatpush1.msra.mxu0 0.0
    %1650 = vmatprep.subr.mxu0 0.0
    %1651 = vmatpush1.msra.mxu0 0.0
    %1652 = vmatprep.subr.mxu0 0.0
    %1653 = vmatpush1.msra.mxu0 0.0
    %1654 = vmatprep.subr.mxu0 0.0
    %1655 = vmatpush1.msra.mxu0 0.0
    %1656 = vmatprep.subr.mxu0 0.0
    %1657 = vmatpush1.msra.mxu0 0.0
    %1658 = vmatprep.subr.mxu0 0.0
    %1659 = vmatpush1.msra.mxu0 0.0
    %1660 = vmatprep.subr.mxu0 0.0
    %1661 = vmatpush1.msra.mxu0 0.0
    %1662 = vmatprep.subr.mxu0 0.0
    %1663 = vmatpush1.msra.mxu0 0.0
    %1664 = vmatprep.subr.mxu0 0.0
    %1665 = vmatpush1.msra.mxu0 0.0
    %1666 = vmatprep.subr.mxu0 0.0
    %1667 = vmatpush1.msra.mxu0 0.0
    %1668 = vmatprep.subr.mxu0 0.0
    %1669 = vmatpush1.msra.mxu0 0.0
    %1670 = vmatprep.subr.mxu0 0.0
    %1671 = vmatpush1.msra.mxu0 0.0
    %1672 = vmatprep.subr.mxu0 0.0
    %1673 = vmatpush1.msra.mxu0 0.0
    %1674 = vmatprep.subr.mxu0 0.0
    %1675 = vmatpush1.msra.mxu0 0.0
    %1676 = vmatprep.subr.mxu0 0.0
    %1677 = vmatpush1.msra.mxu0 0.0
    %1678 = vmatprep.subr.mxu0 0.0
    %1679 = vmatpush1.msra.mxu0 0.0
    %1680 = vmatprep.subr.mxu0 0.0
    %1681 = vmatpush1.msra.mxu0 0.0
    %1682 = vmatprep.subr.mxu0 0.0
    %1683 = vmatpush1.msra.mxu0 0.0
    %1684 = vmatprep.subr.mxu0 0.0
    %1685 = vmatpush1.msra.mxu0 0.0
    %1686 = vmatprep.subr.mxu0 0.0
    %1687 = vmatpush1.msra.mxu0 0.0
    %1688 = vmatprep.subr.mxu0 0.0
    %1689 = vmatpush1.msra.mxu0 0.0
    %1690 = vmatprep.subr.mxu0 0.0
    %1691 = vmatpush1.msra.mxu0 0.0
    %1692 = vmatprep.subr.mxu0 0.0
    %1693 = vmatpush1.msra.mxu0 0.0
    %1694 = vmatprep.subr.mxu0 0.0
    %1695 = vmatpush1.msra.mxu0 0.0
    %1696 = vmatprep.subr.mxu0 0.0
    %1697 = vmatpush1.msra.mxu0 0.0
    %1698 = vmatprep.subr.mxu0 0.0
    %1699 = vmatpush1.msra.mxu0 0.0
    %1700 = vmatprep.subr.mxu0 0.0
    %1701 = vmatpush1.msra.mxu0 0.0
    %1702 = vmatprep.subr.mxu0 0.0
    %1703 = vmatpush1.msra.mxu0 0.0
    %1704 = vmatprep.subr.mxu0 0.0
    %1705 = vmatpush1.msra.mxu0 0.0
    %1706 = vmatprep.subr.mxu0 0.0
    %1707 = vmatpush1.msra.mxu0 0.0
    %1708 = vmatprep.mubr.f32.mxu0 0.0
    %1709 = vmatmul.mubr.f32.gmra.mrb[0].mxu0 %v40
    %v1710 = vpop.f32.mrb[0].mxu0
    %v1711 = vadd.f32 0.0, %v1710
    %v1712 = vpop.f32.mrb[0].mxu0
    %v1713 = vadd.f32 0.0, %v1712
    %1714 = vdwg.mxu0
    %v1715 = vadd.f32 %v1711, %v1713
    %1716 = vadd.xlane.f32.xlu0 %v1715
    %v1717 = vpop.xlane.xlu0 %1716
    %1718 = vmatprep.subr.mxu0 %v1643
    %1719 = vmatpush1.msra.mxu0 %v1642
    %1720 = vmatprep.subr.mxu0 0.0
    %1721 = vmatpush1.msra.mxu0 0.0
    %1722 = vmatprep.subr.mxu0 0.0
    %1723 = vmatpush1.msra.mxu0 0.0
    %1724 = vmatprep.subr.mxu0 0.0
    %1725 = vmatpush1.msra.mxu0 0.0
    %1726 = vmatprep.subr.mxu0 0.0
    %1727 = vmatpush1.msra.mxu0 0.0
    %1728 = vmatprep.subr.mxu0 0.0
    %1729 = vmatpush1.msra.mxu0 0.0
    %1730 = vmatprep.subr.mxu0 0.0
    %1731 = vmatpush1.msra.mxu0 0.0
    %1732 = vmatprep.subr.mxu0 0.0
    %1733 = vmatpush1.msra.mxu0 0.0
    %1734 = vmatprep.subr.mxu0 0.0
    %1735 = vmatpush1.msra.mxu0 0.0
    %1736 = vmatprep.subr.mxu0 0.0
    %1737 = vmatpush1.msra.mxu0 0.0
    %1738 = vmatprep.subr.mxu0 0.0
    %1739 = vmatpush1.msra.mxu0 0.0
    %1740 = vmatprep.subr.mxu0 0.0
    %1741 = vmatpush1.msra.mxu0 0.0
    %1742 = vmatprep.subr.mxu0 0.0
    %1743 = vmatpush1.msra.mxu0 0.0
    %1744 = vmatprep.subr.mxu0 0.0
    %1745 = vmatpush1.msra.mxu0 0.0
    %1746 = vmatprep.subr.mxu0 0.0
    %1747 = vmatpush1.msra.mxu0 0.0
    %1748 = vmatprep.subr.mxu0 0.0
    %1749 = vmatpush1.msra.mxu0 0.0
    %1750 = vmatprep.subr.mxu0 0.0
    %1751 = vmatpush1.msra.mxu0 0.0
    %1752 = vmatprep.subr.mxu0 0.0
    %1753 = vmatpush1.msra.mxu0 0.0
    %1754 = vmatprep.subr.mxu0 0.0
    %1755 = vmatpush1.msra.mxu0 0.0
    %1756 = vmatprep.subr.mxu0 0.0
    %1757 = vmatpush1.msra.mxu0 0.0
    %1758 = vmatprep.subr.mxu0 0.0
    %1759 = vmatpush1.msra.mxu0 0.0
    %1760 = vmatprep.subr.mxu0 0.0
    %1761 = vmatpush1.msra.mxu0 0.0
    %1762 = vmatprep.subr.mxu0 0.0
    %1763 = vmatpush1.msra.mxu0 0.0
    %1764 = vmatprep.subr.mxu0 0.0
    %1765 = vmatpush1.msra.mxu0 0.0
    %1766 = vmatprep.subr.mxu0 0.0
    %1767 = vmatpush1.msra.mxu0 0.0
    %1768 = vmatprep.subr.mxu0 0.0
    %1769 = vmatpush1.msra.mxu0 0.0
    %1770 = vmatprep.subr.mxu0 0.0
    %1771 = vmatpush1.msra.mxu0 0.0
    %1772 = vmatprep.subr.mxu0 0.0
    %1773 = vmatpush1.msra.mxu0 0.0
    %1774 = vmatprep.subr.mxu0 0.0
    %1775 = vmatpush1.msra.mxu0 0.0
    %1776 = vmatprep.subr.mxu0 0.0
    %1777 = vmatpush1.msra.mxu0 0.0
    %1778 = vmatprep.subr.mxu0 0.0
    %1779 = vmatpush1.msra.mxu0 0.0
    %1780 = vmatprep.subr.mxu0 0.0
    %1781 = vmatpush1.msra.mxu0 0.0
    %1782 = vmatprep.mubr.f32.mxu0 0.0
    %1783 = vmatmul.mubr.f32.gmra.mrb[0].mxu0 %v40
    %v1784 = vpop.f32.mrb[0].mxu0
    %v1785 = vadd.f32 0.0, %v1784
    %v1786 = vpop.f32.mrb[0].mxu0
    %v1787 = vadd.f32 0.0, %v1786
    %1788 = vdwg.mxu0
    %v1789 = vadd.f32 %v1785, %v1787
    %1790 = vadd.xlane.f32.xlu0 %v1789
    %v1791 = vpop.xlane.xlu0 %1790
    %v1792 = vmul.f32 %v1717, 0.001953125
    %v1793 = vmul.f32 %v1791, 0.001953125
    %v1794 = vmul.f32 %v1792, %v1792
    %v1795 = vsub.f32 %v1793, %v1794
    %v1796 = vmax.f32 %v1795, 0.0
    %v1797 = vrsqrt.pop %v1796
    %v1798 = vmul.f32 %v1796, %v1797
    %vm1799 = vcmp.eq.f32.partialorder %v1796, inf
    %v1800 = vsel %vm1799, %v1796, %v1798
    %vm1801 = vcmp.eq.f32.partialorder %v1796, 0.0
    %v1802 = vand.u32 %v1796, 2147483648
    %v1803 = vsel %vm1801, %v1802, %v1800
    %v1804 = vadd.f32 %v1803, 1e-06
    %v1805 = vrcp.pop %v1804
    %v1806 = vmul.f32 1.0, %v1805
    %v1807 = vlog2.pop %v1806
    %v1808 = vmul.f32 %v1807, 0.6931472
    %v1809 = vmul.f32 %v1808, 1.442695
    %v1810 = vpow.pop %v1809
    %v1811 = vsub.f32 %v1640, %v1792
    %v1812 = vsub.f32 %v1641, %v1792
    %v1813 = vmul.f32 %v1811, %v1810
    %v1814 = vmul.f32 %v1812, %v1810
    %s1815 = scalar_lea.vmem %s1, 48
    %v1816 = vld [vmem:[%s1815] sm:$0xff]
    %v1818 = vsel %vm38, %v1816, 0
    %1820 = vmatprep.subr.mxu0 %v1814
    %1821 = vmatpush1.msra.mxu0 %v1813
    %1822 = vmatprep.subr.mxu0 0.0
    %1823 = vmatpush1.msra.mxu0 0.0
    %1824 = vmatprep.subr.mxu0 0.0
    %1825 = vmatpush1.msra.mxu0 0.0
    %1826 = vmatprep.subr.mxu0 0.0
    %1827 = vmatpush1.msra.mxu0 0.0
    %1828 = vmatprep.subr.mxu0 0.0
    %1829 = vmatpush1.msra.mxu0 0.0
    %1830 = vmatprep.subr.mxu0 0.0
    %1831 = vmatpush1.msra.mxu0 0.0
    %1832 = vmatprep.subr.mxu0 0.0
    %1833 = vmatpush1.msra.mxu0 0.0
    %1834 = vmatprep.subr.mxu0 0.0
    %1835 = vmatpush1.msra.mxu0 0.0
    %1836 = vmatprep.subr.mxu0 0.0
    %1837 = vmatpush1.msra.mxu0 0.0
    %1838 = vmatprep.subr.mxu0 0.0
    %1839 = vmatpush1.msra.mxu0 0.0
    %1840 = vmatprep.subr.mxu0 0.0
    %1841 = vmatpush1.msra.mxu0 0.0
    %1842 = vmatprep.subr.mxu0 0.0
    %1843 = vmatpush1.msra.mxu0 0.0
    %1844 = vmatprep.subr.mxu0 0.0
    %1845 = vmatpush1.msra.mxu0 0.0
    %1846 = vmatprep.subr.mxu0 0.0
    %1847 = vmatpush1.msra.mxu0 0.0
    %1848 = vmatprep.subr.mxu0 0.0
    %1849 = vmatpush1.msra.mxu0 0.0
    %1850 = vmatprep.subr.mxu0 0.0
    %1851 = vmatpush1.msra.mxu0 0.0
    %1852 = vmatprep.subr.mxu0 0.0
    %1853 = vmatpush1.msra.mxu0 0.0
    %1854 = vmatprep.subr.mxu0 0.0
    %1855 = vmatpush1.msra.mxu0 0.0
    %1856 = vmatprep.subr.mxu0 0.0
    %1857 = vmatpush1.msra.mxu0 0.0
    %1858 = vmatprep.subr.mxu0 0.0
    %1859 = vmatpush1.msra.mxu0 0.0
    %1860 = vmatprep.subr.mxu0 0.0
    %1861 = vmatpush1.msra.mxu0 0.0
    %1862 = vmatprep.subr.mxu0 0.0
    %1863 = vmatpush1.msra.mxu0 0.0
    %1864 = vmatprep.subr.mxu0 0.0
    %1865 = vmatpush1.msra.mxu0 0.0
    %1866 = vmatprep.subr.mxu0 0.0
    %1867 = vmatpush1.msra.mxu0 0.0
    %1868 = vmatprep.subr.mxu0 0.0
    %1869 = vmatpush1.msra.mxu0 0.0
    %1870 = vmatprep.subr.mxu0 0.0
    %1871 = vmatpush1.msra.mxu0 0.0
    %1872 = vmatprep.subr.mxu0 0.0
    %1873 = vmatpush1.msra.mxu0 0.0
    %1874 = vmatprep.subr.mxu0 0.0
    %1875 = vmatpush1.msra.mxu0 0.0
    %1876 = vmatprep.subr.mxu0 0.0
    %1877 = vmatpush1.msra.mxu0 0.0
    %1878 = vmatprep.subr.mxu0 0.0
    %1879 = vmatpush1.msra.mxu0 0.0
    %1880 = vmatprep.subr.mxu0 0.0
    %1881 = vmatpush1.msra.mxu0 0.0
    %1882 = vmatprep.subr.mxu0 0.0
    %1883 = vmatpush1.msra.mxu0 0.0
    %1884 = vmatprep.mubr.f32.mxu0 0.0
    %1885 = vmatmul.mubr.f32.gmra.mrb[0].mxu0 %v1818
    %v1886 = vpop.f32.mrb[0].mxu0
    %v1887 = vadd.f32 0.0, %v1886
    %v1888 = vpop.f32.mrb[0].mxu0
    %v1889 = vadd.f32 0.0, %v1888
    %1890 = vdwg.mxu0
    %1891 = vst [vmem:[%s4] sm:$0xff] %v1887
    %1892 = vst [vmem:[%s4 + $0x8] sm:$0xff] %v1889
    %v1893 = vsel %vm290, %v1808, 0.0
    %1894 = vadd.xlane.f32.xlu0 %v1893
    %v1895 = vpop.xlane.xlu0 %1894
    %v1896 = vrot.slane %v1895, 4
    %v1897 = vadd.f32 %v1895, %v1896
    %v1898 = vrot.slane %v1897, 2
    %v1899 = vadd.f32 %v1897, %v1898
    %v1900 = vrot.slane %v1899, 1
    %v1901 = vadd.f32 %v1899, %v1900
    %s1902 = vtos %v1901
    %s1903 = smul.f32 %s1902, 128.0
    %s1904 = sadd.f32 %s1639, %s1903
    %s1905 = sld [smem:[#allocation2 + $0x6]]
    %s1906 = sadd.f32 %s1904, %s1905
    %v1907 = vld [vmem:[%s4] sm:$0xff]
    %v1908 = vld [vmem:[%s4 + $0x8] sm:$0xff]
    %v1909 = vmul.f32 %v1907, %v1907
    %v1910 = vmul.f32 %v1908, %v1908
    %1911 = vmatprep.subr.mxu0 %v1908
    %1912 = vmatpush1.msra.mxu0 %v1907
    %1913 = vmatprep.subr.mxu0 0.0
    %1914 = vmatpush1.msra.mxu0 0.0
    %1915 = vmatprep.subr.mxu0 0.0
    %1916 = vmatpush1.msra.mxu0 0.0
    %1917 = vmatprep.subr.mxu0 0.0
    %1918 = vmatpush1.msra.mxu0 0.0
    %1919 = vmatprep.subr.mxu0 0.0
    %1920 = vmatpush1.msra.mxu0 0.0
    %1921 = vmatprep.subr.mxu0 0.0
    %1922 = vmatpush1.msra.mxu0 0.0
    %1923 = vmatprep.subr.mxu0 0.0
    %1924 = vmatpush1.msra.mxu0 0.0
    %1925 = vmatprep.subr.mxu0 0.0
    %1926 = vmatpush1.msra.mxu0 0.0
    %1927 = vmatprep.subr.mxu0 0.0
    %1928 = vmatpush1.msra.mxu0 0.0
    %1929 = vmatprep.subr.mxu0 0.0
    %1930 = vmatpush1.msra.mxu0 0.0
    %1931 = vmatprep.subr.mxu0 0.0
    %1932 = vmatpush1.msra.mxu0 0.0
    %1933 = vmatprep.subr.mxu0 0.0
    %1934 = vmatpush1.msra.mxu0 0.0
    %1935 = vmatprep.subr.mxu0 0.0
    %1936 = vmatpush1.msra.mxu0 0.0
    %1937 = vmatprep.subr.mxu0 0.0
    %1938 = vmatpush1.msra.mxu0 0.0
    %1939 = vmatprep.subr.mxu0 0.0
    %1940 = vmatpush1.msra.mxu0 0.0
    %1941 = vmatprep.subr.mxu0 0.0
    %1942 = vmatpush1.msra.mxu0 0.0
    %1943 = vmatprep.subr.mxu0 0.0
    %1944 = vmatpush1.msra.mxu0 0.0
    %1945 = vmatprep.subr.mxu0 0.0
    %1946 = vmatpush1.msra.mxu0 0.0
    %1947 = vmatprep.subr.mxu0 0.0
    %1948 = vmatpush1.msra.mxu0 0.0
    %1949 = vmatprep.subr.mxu0 0.0
    %1950 = vmatpush1.msra.mxu0 0.0
    %1951 = vmatprep.subr.mxu0 0.0
    %1952 = vmatpush1.msra.mxu0 0.0
    %1953 = vmatprep.subr.mxu0 0.0
    %1954 = vmatpush1.msra.mxu0 0.0
    %1955 = vmatprep.subr.mxu0 0.0
    %1956 = vmatpush1.msra.mxu0 0.0
    %1957 = vmatprep.subr.mxu0 0.0
    %1958 = vmatpush1.msra.mxu0 0.0
    %1959 = vmatprep.subr.mxu0 0.0
    %1960 = vmatpush1.msra.mxu0 0.0
    %1961 = vmatprep.subr.mxu0 0.0
    %1962 = vmatpush1.msra.mxu0 0.0
    %1963 = vmatprep.subr.mxu0 0.0
    %1964 = vmatpush1.msra.mxu0 0.0
    %1965 = vmatprep.subr.mxu0 0.0
    %1966 = vmatpush1.msra.mxu0 0.0
    %1967 = vmatprep.subr.mxu0 0.0
    %1968 = vmatpush1.msra.mxu0 0.0
    %1969 = vmatprep.subr.mxu0 0.0
    %1970 = vmatpush1.msra.mxu0 0.0
    %1971 = vmatprep.subr.mxu0 0.0
    %1972 = vmatpush1.msra.mxu0 0.0
    %1973 = vmatprep.subr.mxu0 0.0
    %1974 = vmatpush1.msra.mxu0 0.0
    %1975 = vmatprep.mubr.f32.mxu0 0.0
    %1976 = vmatmul.mubr.f32.gmra.mrb[0].mxu0 %v40
    %v1977 = vpop.f32.mrb[0].mxu0
    %v1978 = vadd.f32 0.0, %v1977
    %v1979 = vpop.f32.mrb[0].mxu0
    %v1980 = vadd.f32 0.0, %v1979
    %1981 = vdwg.mxu0
    %v1982 = vadd.f32 %v1978, %v1980
    %1983 = vadd.xlane.f32.xlu0 %v1982
    %v1984 = vpop.xlane.xlu0 %1983
    %1985 = vmatprep.subr.mxu0 %v1910
    %1986 = vmatpush1.msra.mxu0 %v1909
    %1987 = vmatprep.subr.mxu0 0.0
    %1988 = vmatpush1.msra.mxu0 0.0
    %1989 = vmatprep.subr.mxu0 0.0
    %1990 = vmatpush1.msra.mxu0 0.0
    %1991 = vmatprep.subr.mxu0 0.0
    %1992 = vmatpush1.msra.mxu0 0.0
    %1993 = vmatprep.subr.mxu0 0.0
    %1994 = vmatpush1.msra.mxu0 0.0
    %1995 = vmatprep.subr.mxu0 0.0
    %1996 = vmatpush1.msra.mxu0 0.0
    %1997 = vmatprep.subr.mxu0 0.0
    %1998 = vmatpush1.msra.mxu0 0.0
    %1999 = vmatprep.subr.mxu0 0.0
    %2000 = vmatpush1.msra.mxu0 0.0
    %2001 = vmatprep.subr.mxu0 0.0
    %2002 = vmatpush1.msra.mxu0 0.0
    %2003 = vmatprep.subr.mxu0 0.0
    %2004 = vmatpush1.msra.mxu0 0.0
    %2005 = vmatprep.subr.mxu0 0.0
    %2006 = vmatpush1.msra.mxu0 0.0
    %2007 = vmatprep.subr.mxu0 0.0
    %2008 = vmatpush1.msra.mxu0 0.0
    %2009 = vmatprep.subr.mxu0 0.0
    %2010 = vmatpush1.msra.mxu0 0.0
    %2011 = vmatprep.subr.mxu0 0.0
    %2012 = vmatpush1.msra.mxu0 0.0
    %2013 = vmatprep.subr.mxu0 0.0
    %2014 = vmatpush1.msra.mxu0 0.0
    %2015 = vmatprep.subr.mxu0 0.0
    %2016 = vmatpush1.msra.mxu0 0.0
    %2017 = vmatprep.subr.mxu0 0.0
    %2018 = vmatpush1.msra.mxu0 0.0
    %2019 = vmatprep.subr.mxu0 0.0
    %2020 = vmatpush1.msra.mxu0 0.0
    %2021 = vmatprep.subr.mxu0 0.0
    %2022 = vmatpush1.msra.mxu0 0.0
    %2023 = vmatprep.subr.mxu0 0.0
    %2024 = vmatpush1.msra.mxu0 0.0
    %2025 = vmatprep.subr.mxu0 0.0
    %2026 = vmatpush1.msra.mxu0 0.0
    %2027 = vmatprep.subr.mxu0 0.0
    %2028 = vmatpush1.msra.mxu0 0.0
    %2029 = vmatprep.subr.mxu0 0.0
    %2030 = vmatpush1.msra.mxu0 0.0
    %2031 = vmatprep.subr.mxu0 0.0
    %2032 = vmatpush1.msra.mxu0 0.0
    %2033 = vmatprep.subr.mxu0 0.0
    %2034 = vmatpush1.msra.mxu0 0.0
    %2035 = vmatprep.subr.mxu0 0.0
    %2036 = vmatpush1.msra.mxu0 0.0
    %2037 = vmatprep.subr.mxu0 0.0
    %2038 = vmatpush1.msra.mxu0 0.0
    %2039 = vmatprep.subr.mxu0 0.0
    %2040 = vmatpush1.msra.mxu0 0.0
    %2041 = vmatprep.subr.mxu0 0.0
    %2042 = vmatpush1.msra.mxu0 0.0
    %2043 = vmatprep.subr.mxu0 0.0
    %2044 = vmatpush1.msra.mxu0 0.0
    %2045 = vmatprep.subr.mxu0 0.0
    %2046 = vmatpush1.msra.mxu0 0.0
    %2047 = vmatprep.subr.mxu0 0.0
    %2048 = vmatpush1.msra.mxu0 0.0
    %2049 = vmatprep.mubr.f32.mxu0 0.0
    %2050 = vmatmul.mubr.f32.gmra.mrb[0].mxu0 %v40
    %v2051 = vpop.f32.mrb[0].mxu0
    %v2052 = vadd.f32 0.0, %v2051
    %v2053 = vpop.f32.mrb[0].mxu0
    %v2054 = vadd.f32 0.0, %v2053
    %2055 = vdwg.mxu0
    %v2056 = vadd.f32 %v2052, %v2054
    %2057 = vadd.xlane.f32.xlu0 %v2056
    %v2058 = vpop.xlane.xlu0 %2057
    %v2059 = vmul.f32 %v1984, 0.001953125
    %v2060 = vmul.f32 %v2058, 0.001953125
    %v2061 = vmul.f32 %v2059, %v2059
    %v2062 = vsub.f32 %v2060, %v2061
    %v2063 = vmax.f32 %v2062, 0.0
    %v2064 = vrsqrt.pop %v2063
    %v2065 = vmul.f32 %v2063, %v2064
    %vm2066 = vcmp.eq.f32.partialorder %v2063, inf
    %v2067 = vsel %vm2066, %v2063, %v2065
    %vm2068 = vcmp.eq.f32.partialorder %v2063, 0.0
    %v2069 = vand.u32 %v2063, 2147483648
    %v2070 = vsel %vm2068, %v2069, %v2067
    %v2071 = vadd.f32 %v2070, 1e-06
    %v2072 = vrcp.pop %v2071
    %v2073 = vmul.f32 1.0, %v2072
    %v2074 = vlog2.pop %v2073
    %v2075 = vmul.f32 %v2074, 0.6931472
    %v2076 = vmul.f32 %v2075, 1.442695
    %v2077 = vpow.pop %v2076
    %v2078 = vsub.f32 %v1907, %v2059
    %v2079 = vsub.f32 %v1908, %v2059
    %v2080 = vmul.f32 %v2078, %v2077
    %v2081 = vmul.f32 %v2079, %v2077
    %s2082 = scalar_lea.vmem %s1, 56
    %v2083 = vld [vmem:[%s2082] sm:$0xff]
    %v2085 = vsel %vm38, %v2083, 0
    %2087 = vmatprep.subr.mxu0 %v2081
    %2088 = vmatpush1.msra.mxu0 %v2080
    %2089 = vmatprep.subr.mxu0 0.0
    %2090 = vmatpush1.msra.mxu0 0.0
    %2091 = vmatprep.subr.mxu0 0.0
    %2092 = vmatpush1.msra.mxu0 0.0
    %2093 = vmatprep.subr.mxu0 0.0
    %2094 = vmatpush1.msra.mxu0 0.0
    %2095 = vmatprep.subr.mxu0 0.0
    %2096 = vmatpush1.msra.mxu0 0.0
    %2097 = vmatprep.subr.mxu0 0.0
    %2098 = vmatpush1.msra.mxu0 0.0
    %2099 = vmatprep.subr.mxu0 0.0
    %2100 = vmatpush1.msra.mxu0 0.0
    %2101 = vmatprep.subr.mxu0 0.0
    %2102 = vmatpush1.msra.mxu0 0.0
    %2103 = vmatprep.subr.mxu0 0.0
    %2104 = vmatpush1.msra.mxu0 0.0
    %2105 = vmatprep.subr.mxu0 0.0
    %2106 = vmatpush1.msra.mxu0 0.0
    %2107 = vmatprep.subr.mxu0 0.0
    %2108 = vmatpush1.msra.mxu0 0.0
    %2109 = vmatprep.subr.mxu0 0.0
    %2110 = vmatpush1.msra.mxu0 0.0
    %2111 = vmatprep.subr.mxu0 0.0
    %2112 = vmatpush1.msra.mxu0 0.0
    %2113 = vmatprep.subr.mxu0 0.0
    %2114 = vmatpush1.msra.mxu0 0.0
    %2115 = vmatprep.subr.mxu0 0.0
    %2116 = vmatpush1.msra.mxu0 0.0
    %2117 = vmatprep.subr.mxu0 0.0
    %2118 = vmatpush1.msra.mxu0 0.0
    %2119 = vmatprep.subr.mxu0 0.0
    %2120 = vmatpush1.msra.mxu0 0.0
    %2121 = vmatprep.subr.mxu0 0.0
    %2122 = vmatpush1.msra.mxu0 0.0
    %2123 = vmatprep.subr.mxu0 0.0
    %2124 = vmatpush1.msra.mxu0 0.0
    %2125 = vmatprep.subr.mxu0 0.0
    %2126 = vmatpush1.msra.mxu0 0.0
    %2127 = vmatprep.subr.mxu0 0.0
    %2128 = vmatpush1.msra.mxu0 0.0
    %2129 = vmatprep.subr.mxu0 0.0
    %2130 = vmatpush1.msra.mxu0 0.0
    %2131 = vmatprep.subr.mxu0 0.0
    %2132 = vmatpush1.msra.mxu0 0.0
    %2133 = vmatprep.subr.mxu0 0.0
    %2134 = vmatpush1.msra.mxu0 0.0
    %2135 = vmatprep.subr.mxu0 0.0
    %2136 = vmatpush1.msra.mxu0 0.0
    %2137 = vmatprep.subr.mxu0 0.0
    %2138 = vmatpush1.msra.mxu0 0.0
    %2139 = vmatprep.subr.mxu0 0.0
    %2140 = vmatpush1.msra.mxu0 0.0
    %2141 = vmatprep.subr.mxu0 0.0
    %2142 = vmatpush1.msra.mxu0 0.0
    %2143 = vmatprep.subr.mxu0 0.0
    %2144 = vmatpush1.msra.mxu0 0.0
    %2145 = vmatprep.subr.mxu0 0.0
    %2146 = vmatpush1.msra.mxu0 0.0
    %2147 = vmatprep.subr.mxu0 0.0
    %2148 = vmatpush1.msra.mxu0 0.0
    %2149 = vmatprep.subr.mxu0 0.0
    %2150 = vmatpush1.msra.mxu0 0.0
    %2151 = vmatprep.mubr.f32.mxu0 0.0
    %2152 = vmatmul.mubr.f32.gmra.mrb[0].mxu0 %v2085
    %v2153 = vpop.f32.mrb[0].mxu0
    %v2154 = vadd.f32 0.0, %v2153
    %v2155 = vpop.f32.mrb[0].mxu0
    %v2156 = vadd.f32 0.0, %v2155
    %2157 = vdwg.mxu0
    %2158 = vst [vmem:[%s4] sm:$0xff] %v2154
    %2159 = vst [vmem:[%s4 + $0x8] sm:$0xff] %v2156
    %v2160 = vsel %vm290, %v2075, 0.0
    %2161 = vadd.xlane.f32.xlu0 %v2160
    %v2162 = vpop.xlane.xlu0 %2161
    %v2163 = vrot.slane %v2162, 4
    %v2164 = vadd.f32 %v2162, %v2163
    %v2165 = vrot.slane %v2164, 2
    %v2166 = vadd.f32 %v2164, %v2165
    %v2167 = vrot.slane %v2166, 1
    %v2168 = vadd.f32 %v2166, %v2167
    %s2169 = vtos %v2168
    %s2170 = smul.f32 %s2169, 128.0
    %s2171 = sadd.f32 %s1906, %s2170
    %s2172 = sld [smem:[#allocation2 + $0x7]]
    %s2173 = sadd.f32 %s2171, %s2172
    %v2174 = vld [vmem:[%s4] sm:$0xff]
    %v2175 = vld [vmem:[%s4 + $0x8] sm:$0xff]
    %v2176 = vmul.f32 %v2174, %v2174
    %v2177 = vmul.f32 %v2175, %v2175
    %2178 = vmatprep.subr.mxu0 %v2175
    %2179 = vmatpush1.msra.mxu0 %v2174
    %2180 = vmatprep.subr.mxu0 0.0
    %2181 = vmatpush1.msra.mxu0 0.0
    %2182 = vmatprep.subr.mxu0 0.0
    %2183 = vmatpush1.msra.mxu0 0.0
    %2184 = vmatprep.subr.mxu0 0.0
    %2185 = vmatpush1.msra.mxu0 0.0
    %2186 = vmatprep.subr.mxu0 0.0
    %2187 = vmatpush1.msra.mxu0 0.0
    %2188 = vmatprep.subr.mxu0 0.0
    %2189 = vmatpush1.msra.mxu0 0.0
    %2190 = vmatprep.subr.mxu0 0.0
    %2191 = vmatpush1.msra.mxu0 0.0
    %2192 = vmatprep.subr.mxu0 0.0
    %2193 = vmatpush1.msra.mxu0 0.0
    %2194 = vmatprep.subr.mxu0 0.0
    %2195 = vmatpush1.msra.mxu0 0.0
    %2196 = vmatprep.subr.mxu0 0.0
    %2197 = vmatpush1.msra.mxu0 0.0
    %2198 = vmatprep.subr.mxu0 0.0
    %2199 = vmatpush1.msra.mxu0 0.0
    %2200 = vmatprep.subr.mxu0 0.0
    %2201 = vmatpush1.msra.mxu0 0.0
    %2202 = vmatprep.subr.mxu0 0.0
    %2203 = vmatpush1.msra.mxu0 0.0
    %2204 = vmatprep.subr.mxu0 0.0
    %2205 = vmatpush1.msra.mxu0 0.0
    %2206 = vmatprep.subr.mxu0 0.0
    %2207 = vmatpush1.msra.mxu0 0.0
    %2208 = vmatprep.subr.mxu0 0.0
    %2209 = vmatpush1.msra.mxu0 0.0
    %2210 = vmatprep.subr.mxu0 0.0
    %2211 = vmatpush1.msra.mxu0 0.0
    %2212 = vmatprep.subr.mxu0 0.0
    %2213 = vmatpush1.msra.mxu0 0.0
    %2214 = vmatprep.subr.mxu0 0.0
    %2215 = vmatpush1.msra.mxu0 0.0
    %2216 = vmatprep.subr.mxu0 0.0
    %2217 = vmatpush1.msra.mxu0 0.0
    %2218 = vmatprep.subr.mxu0 0.0
    %2219 = vmatpush1.msra.mxu0 0.0
    %2220 = vmatprep.subr.mxu0 0.0
    %2221 = vmatpush1.msra.mxu0 0.0
    %2222 = vmatprep.subr.mxu0 0.0
    %2223 = vmatpush1.msra.mxu0 0.0
    %2224 = vmatprep.subr.mxu0 0.0
    %2225 = vmatpush1.msra.mxu0 0.0
    %2226 = vmatprep.subr.mxu0 0.0
    %2227 = vmatpush1.msra.mxu0 0.0
    %2228 = vmatprep.subr.mxu0 0.0
    %2229 = vmatpush1.msra.mxu0 0.0
    %2230 = vmatprep.subr.mxu0 0.0
    %2231 = vmatpush1.msra.mxu0 0.0
    %2232 = vmatprep.subr.mxu0 0.0
    %2233 = vmatpush1.msra.mxu0 0.0
    %2234 = vmatprep.subr.mxu0 0.0
    %2235 = vmatpush1.msra.mxu0 0.0
    %2236 = vmatprep.subr.mxu0 0.0
    %2237 = vmatpush1.msra.mxu0 0.0
    %2238 = vmatprep.subr.mxu0 0.0
    %2239 = vmatpush1.msra.mxu0 0.0
    %2240 = vmatprep.subr.mxu0 0.0
    %2241 = vmatpush1.msra.mxu0 0.0
    %2242 = vmatprep.mubr.f32.mxu0 0.0
    %2243 = vmatmul.mubr.f32.gmra.mrb[0].mxu0 %v40
    %v2244 = vpop.f32.mrb[0].mxu0
    %v2245 = vadd.f32 0.0, %v2244
    %v2246 = vpop.f32.mrb[0].mxu0
    %v2247 = vadd.f32 0.0, %v2246
    %2248 = vdwg.mxu0
    %v2249 = vadd.f32 %v2245, %v2247
    %2250 = vadd.xlane.f32.xlu0 %v2249
    %v2251 = vpop.xlane.xlu0 %2250
    %2252 = vmatprep.subr.mxu0 %v2177
    %2253 = vmatpush1.msra.mxu0 %v2176
    %2254 = vmatprep.subr.mxu0 0.0
    %2255 = vmatpush1.msra.mxu0 0.0
    %2256 = vmatprep.subr.mxu0 0.0
    %2257 = vmatpush1.msra.mxu0 0.0
    %2258 = vmatprep.subr.mxu0 0.0
    %2259 = vmatpush1.msra.mxu0 0.0
    %2260 = vmatprep.subr.mxu0 0.0
    %2261 = vmatpush1.msra.mxu0 0.0
    %2262 = vmatprep.subr.mxu0 0.0
    %2263 = vmatpush1.msra.mxu0 0.0
    %2264 = vmatprep.subr.mxu0 0.0
    %2265 = vmatpush1.msra.mxu0 0.0
    %2266 = vmatprep.subr.mxu0 0.0
    %2267 = vmatpush1.msra.mxu0 0.0
    %2268 = vmatprep.subr.mxu0 0.0
    %2269 = vmatpush1.msra.mxu0 0.0
    %2270 = vmatprep.subr.mxu0 0.0
    %2271 = vmatpush1.msra.mxu0 0.0
    %2272 = vmatprep.subr.mxu0 0.0
    %2273 = vmatpush1.msra.mxu0 0.0
    %2274 = vmatprep.subr.mxu0 0.0
    %2275 = vmatpush1.msra.mxu0 0.0
    %2276 = vmatprep.subr.mxu0 0.0
    %2277 = vmatpush1.msra.mxu0 0.0
    %2278 = vmatprep.subr.mxu0 0.0
    %2279 = vmatpush1.msra.mxu0 0.0
    %2280 = vmatprep.subr.mxu0 0.0
    %2281 = vmatpush1.msra.mxu0 0.0
    %2282 = vmatprep.subr.mxu0 0.0
    %2283 = vmatpush1.msra.mxu0 0.0
    %2284 = vmatprep.subr.mxu0 0.0
    %2285 = vmatpush1.msra.mxu0 0.0
    %2286 = vmatprep.subr.mxu0 0.0
    %2287 = vmatpush1.msra.mxu0 0.0
    %2288 = vmatprep.subr.mxu0 0.0
    %2289 = vmatpush1.msra.mxu0 0.0
    %2290 = vmatprep.subr.mxu0 0.0
    %2291 = vmatpush1.msra.mxu0 0.0
    %2292 = vmatprep.subr.mxu0 0.0
    %2293 = vmatpush1.msra.mxu0 0.0
    %2294 = vmatprep.subr.mxu0 0.0
    %2295 = vmatpush1.msra.mxu0 0.0
    %2296 = vmatprep.subr.mxu0 0.0
    %2297 = vmatpush1.msra.mxu0 0.0
    %2298 = vmatprep.subr.mxu0 0.0
    %2299 = vmatpush1.msra.mxu0 0.0
    %2300 = vmatprep.subr.mxu0 0.0
    %2301 = vmatpush1.msra.mxu0 0.0
    %2302 = vmatprep.subr.mxu0 0.0
    %2303 = vmatpush1.msra.mxu0 0.0
    %2304 = vmatprep.subr.mxu0 0.0
    %2305 = vmatpush1.msra.mxu0 0.0
    %2306 = vmatprep.subr.mxu0 0.0
    %2307 = vmatpush1.msra.mxu0 0.0
    %2308 = vmatprep.subr.mxu0 0.0
    %2309 = vmatpush1.msra.mxu0 0.0
    %2310 = vmatprep.subr.mxu0 0.0
    %2311 = vmatpush1.msra.mxu0 0.0
    %2312 = vmatprep.subr.mxu0 0.0
    %2313 = vmatpush1.msra.mxu0 0.0
    %2314 = vmatprep.subr.mxu0 0.0
    %2315 = vmatpush1.msra.mxu0 0.0
    %2316 = vmatprep.mubr.f32.mxu0 0.0
    %2317 = vmatmul.mubr.f32.gmra.mrb[0].mxu0 %v40
    %v2318 = vpop.f32.mrb[0].mxu0
    %v2319 = vadd.f32 0.0, %v2318
    %v2320 = vpop.f32.mrb[0].mxu0
    %v2321 = vadd.f32 0.0, %v2320
    %2322 = vdwg.mxu0
    %v2323 = vadd.f32 %v2319, %v2321
    %2324 = vadd.xlane.f32.xlu0 %v2323
    %v2325 = vpop.xlane.xlu0 %2324
    %v2326 = vmul.f32 %v2251, 0.001953125
    %v2327 = vmul.f32 %v2325, 0.001953125
    %v2328 = vmul.f32 %v2326, %v2326
    %v2329 = vsub.f32 %v2327, %v2328
    %v2330 = vmax.f32 %v2329, 0.0
    %v2331 = vrsqrt.pop %v2330
    %v2332 = vmul.f32 %v2330, %v2331
    %vm2333 = vcmp.eq.f32.partialorder %v2330, inf
    %v2334 = vsel %vm2333, %v2330, %v2332
    %vm2335 = vcmp.eq.f32.partialorder %v2330, 0.0
    %v2336 = vand.u32 %v2330, 2147483648
    %v2337 = vsel %vm2335, %v2336, %v2334
    %v2338 = vadd.f32 %v2337, 1e-06
    %v2339 = vrcp.pop %v2338
    %v2340 = vmul.f32 1.0, %v2339
    %v2341 = vlog2.pop %v2340
    %v2342 = vmul.f32 %v2341, 0.6931472
    %v2343 = vmul.f32 %v2342, 1.442695
    %v2344 = vpow.pop %v2343
    %v2345 = vsub.f32 %v2174, %v2326
    %v2346 = vsub.f32 %v2175, %v2326
    %v2347 = vmul.f32 %v2345, %v2344
    %v2348 = vmul.f32 %v2346, %v2344
    %s2349 = scalar_lea.vmem %s1, 64
    %v2350 = vld [vmem:[%s2349] sm:$0xff]
    %v2352 = vsel %vm38, %v2350, 0
    %2354 = vmatprep.subr.mxu0 %v2348
    %2355 = vmatpush1.msra.mxu0 %v2347
    %2356 = vmatprep.subr.mxu0 0.0
    %2357 = vmatpush1.msra.mxu0 0.0
    %2358 = vmatprep.subr.mxu0 0.0
    %2359 = vmatpush1.msra.mxu0 0.0
    %2360 = vmatprep.subr.mxu0 0.0
    %2361 = vmatpush1.msra.mxu0 0.0
    %2362 = vmatprep.subr.mxu0 0.0
    %2363 = vmatpush1.msra.mxu0 0.0
    %2364 = vmatprep.subr.mxu0 0.0
    %2365 = vmatpush1.msra.mxu0 0.0
    %2366 = vmatprep.subr.mxu0 0.0
    %2367 = vmatpush1.msra.mxu0 0.0
    %2368 = vmatprep.subr.mxu0 0.0
    %2369 = vmatpush1.msra.mxu0 0.0
    %2370 = vmatprep.subr.mxu0 0.0
    %2371 = vmatpush1.msra.mxu0 0.0
    %2372 = vmatprep.subr.mxu0 0.0
    %2373 = vmatpush1.msra.mxu0 0.0
    %2374 = vmatprep.subr.mxu0 0.0
    %2375 = vmatpush1.msra.mxu0 0.0
    %2376 = vmatprep.subr.mxu0 0.0
    %2377 = vmatpush1.msra.mxu0 0.0
    %2378 = vmatprep.subr.mxu0 0.0
    %2379 = vmatpush1.msra.mxu0 0.0
    %2380 = vmatprep.subr.mxu0 0.0
    %2381 = vmatpush1.msra.mxu0 0.0
    %2382 = vmatprep.subr.mxu0 0.0
    %2383 = vmatpush1.msra.mxu0 0.0
    %2384 = vmatprep.subr.mxu0 0.0
    %2385 = vmatpush1.msra.mxu0 0.0
    %2386 = vmatprep.subr.mxu0 0.0
    %2387 = vmatpush1.msra.mxu0 0.0
    %2388 = vmatprep.subr.mxu0 0.0
    %2389 = vmatpush1.msra.mxu0 0.0
    %2390 = vmatprep.subr.mxu0 0.0
    %2391 = vmatpush1.msra.mxu0 0.0
    %2392 = vmatprep.subr.mxu0 0.0
    %2393 = vmatpush1.msra.mxu0 0.0
    %2394 = vmatprep.subr.mxu0 0.0
    %2395 = vmatpush1.msra.mxu0 0.0
    %2396 = vmatprep.subr.mxu0 0.0
    %2397 = vmatpush1.msra.mxu0 0.0
    %2398 = vmatprep.subr.mxu0 0.0
    %2399 = vmatpush1.msra.mxu0 0.0
    %2400 = vmatprep.subr.mxu0 0.0
    %2401 = vmatpush1.msra.mxu0 0.0
    %2402 = vmatprep.subr.mxu0 0.0
    %2403 = vmatpush1.msra.mxu0 0.0
    %2404 = vmatprep.subr.mxu0 0.0
    %2405 = vmatpush1.msra.mxu0 0.0
    %2406 = vmatprep.subr.mxu0 0.0
    %2407 = vmatpush1.msra.mxu0 0.0
    %2408 = vmatprep.subr.mxu0 0.0
    %2409 = vmatpush1.msra.mxu0 0.0
    %2410 = vmatprep.subr.mxu0 0.0
    %2411 = vmatpush1.msra.mxu0 0.0
    %2412 = vmatprep.subr.mxu0 0.0
    %2413 = vmatpush1.msra.mxu0 0.0
    %2414 = vmatprep.subr.mxu0 0.0
    %2415 = vmatpush1.msra.mxu0 0.0
    %2416 = vmatprep.subr.mxu0 0.0
    %2417 = vmatpush1.msra.mxu0 0.0
    %2418 = vmatprep.mubr.f32.mxu0 0.0
    %2419 = vmatmul.mubr.f32.gmra.mrb[0].mxu0 %v2352
    %v2420 = vpop.f32.mrb[0].mxu0
    %v2421 = vadd.f32 0.0, %v2420
    %v2422 = vpop.f32.mrb[0].mxu0
    %v2423 = vadd.f32 0.0, %v2422
    %2424 = vdwg.mxu0
    %2425 = vst [vmem:[%s4] sm:$0xff] %v2421
    %2426 = vst [vmem:[%s4 + $0x8] sm:$0xff] %v2423
    %v2427 = vsel %vm290, %v2342, 0.0
    %2428 = vadd.xlane.f32.xlu0 %v2427
    %v2429 = vpop.xlane.xlu0 %2428
    %v2430 = vrot.slane %v2429, 4
    %v2431 = vadd.f32 %v2429, %v2430
    %v2432 = vrot.slane %v2431, 2
    %v2433 = vadd.f32 %v2431, %v2432
    %v2434 = vrot.slane %v2433, 1
    %v2435 = vadd.f32 %v2433, %v2434
    %s2436 = vtos %v2435
    %s2437 = smul.f32 %s2436, 128.0
    %s2438 = sadd.f32 %s2173, %s2437
    %s2439 = sld [smem:[#allocation2 + $0x8]]
    %s2440 = sadd.f32 %s2438, %s2439
    %v2441 = vld [vmem:[%s4] sm:$0xff]
    %v2442 = vld [vmem:[%s4 + $0x8] sm:$0xff]
    %v2443 = vmul.f32 %v2441, %v2441
    %v2444 = vmul.f32 %v2442, %v2442
    %2445 = vmatprep.subr.mxu0 %v2442
    %2446 = vmatpush1.msra.mxu0 %v2441
    %2447 = vmatprep.subr.mxu0 0.0
    %2448 = vmatpush1.msra.mxu0 0.0
    %2449 = vmatprep.subr.mxu0 0.0
    %2450 = vmatpush1.msra.mxu0 0.0
    %2451 = vmatprep.subr.mxu0 0.0
    %2452 = vmatpush1.msra.mxu0 0.0
    %2453 = vmatprep.subr.mxu0 0.0
    %2454 = vmatpush1.msra.mxu0 0.0
    %2455 = vmatprep.subr.mxu0 0.0
    %2456 = vmatpush1.msra.mxu0 0.0
    %2457 = vmatprep.subr.mxu0 0.0
    %2458 = vmatpush1.msra.mxu0 0.0
    %2459 = vmatprep.subr.mxu0 0.0
    %2460 = vmatpush1.msra.mxu0 0.0
    %2461 = vmatprep.subr.mxu0 0.0
    %2462 = vmatpush1.msra.mxu0 0.0
    %2463 = vmatprep.subr.mxu0 0.0
    %2464 = vmatpush1.msra.mxu0 0.0
    %2465 = vmatprep.subr.mxu0 0.0
    %2466 = vmatpush1.msra.mxu0 0.0
    %2467 = vmatprep.subr.mxu0 0.0
    %2468 = vmatpush1.msra.mxu0 0.0
    %2469 = vmatprep.subr.mxu0 0.0
    %2470 = vmatpush1.msra.mxu0 0.0
    %2471 = vmatprep.subr.mxu0 0.0
    %2472 = vmatpush1.msra.mxu0 0.0
    %2473 = vmatprep.subr.mxu0 0.0
    %2474 = vmatpush1.msra.mxu0 0.0
    %2475 = vmatprep.subr.mxu0 0.0
    %2476 = vmatpush1.msra.mxu0 0.0
    %2477 = vmatprep.subr.mxu0 0.0
    %2478 = vmatpush1.msra.mxu0 0.0
    %2479 = vmatprep.subr.mxu0 0.0
    %2480 = vmatpush1.msra.mxu0 0.0
    %2481 = vmatprep.subr.mxu0 0.0
    %2482 = vmatpush1.msra.mxu0 0.0
    %2483 = vmatprep.subr.mxu0 0.0
    %2484 = vmatpush1.msra.mxu0 0.0
    %2485 = vmatprep.subr.mxu0 0.0
    %2486 = vmatpush1.msra.mxu0 0.0
    %2487 = vmatprep.subr.mxu0 0.0
    %2488 = vmatpush1.msra.mxu0 0.0
    %2489 = vmatprep.subr.mxu0 0.0
    %2490 = vmatpush1.msra.mxu0 0.0
    %2491 = vmatprep.subr.mxu0 0.0
    %2492 = vmatpush1.msra.mxu0 0.0
    %2493 = vmatprep.subr.mxu0 0.0
    %2494 = vmatpush1.msra.mxu0 0.0
    %2495 = vmatprep.subr.mxu0 0.0
    %2496 = vmatpush1.msra.mxu0 0.0
    %2497 = vmatprep.subr.mxu0 0.0
    %2498 = vmatpush1.msra.mxu0 0.0
    %2499 = vmatprep.subr.mxu0 0.0
    %2500 = vmatpush1.msra.mxu0 0.0
    %2501 = vmatprep.subr.mxu0 0.0
    %2502 = vmatpush1.msra.mxu0 0.0
    %2503 = vmatprep.subr.mxu0 0.0
    %2504 = vmatpush1.msra.mxu0 0.0
    %2505 = vmatprep.subr.mxu0 0.0
    %2506 = vmatpush1.msra.mxu0 0.0
    %2507 = vmatprep.subr.mxu0 0.0
    %2508 = vmatpush1.msra.mxu0 0.0
    %2509 = vmatprep.mubr.f32.mxu0 0.0
    %2510 = vmatmul.mubr.f32.gmra.mrb[0].mxu0 %v40
    %v2511 = vpop.f32.mrb[0].mxu0
    %v2512 = vadd.f32 0.0, %v2511
    %v2513 = vpop.f32.mrb[0].mxu0
    %v2514 = vadd.f32 0.0, %v2513
    %2515 = vdwg.mxu0
    %v2516 = vadd.f32 %v2512, %v2514
    %2517 = vadd.xlane.f32.xlu0 %v2516
    %v2518 = vpop.xlane.xlu0 %2517
    %2519 = vmatprep.subr.mxu0 %v2444
    %2520 = vmatpush1.msra.mxu0 %v2443
    %2521 = vmatprep.subr.mxu0 0.0
    %2522 = vmatpush1.msra.mxu0 0.0
    %2523 = vmatprep.subr.mxu0 0.0
    %2524 = vmatpush1.msra.mxu0 0.0
    %2525 = vmatprep.subr.mxu0 0.0
    %2526 = vmatpush1.msra.mxu0 0.0
    %2527 = vmatprep.subr.mxu0 0.0
    %2528 = vmatpush1.msra.mxu0 0.0
    %2529 = vmatprep.subr.mxu0 0.0
    %2530 = vmatpush1.msra.mxu0 0.0
    %2531 = vmatprep.subr.mxu0 0.0
    %2532 = vmatpush1.msra.mxu0 0.0
    %2533 = vmatprep.subr.mxu0 0.0
    %2534 = vmatpush1.msra.mxu0 0.0
    %2535 = vmatprep.subr.mxu0 0.0
    %2536 = vmatpush1.msra.mxu0 0.0
    %2537 = vmatprep.subr.mxu0 0.0
    %2538 = vmatpush1.msra.mxu0 0.0
    %2539 = vmatprep.subr.mxu0 0.0
    %2540 = vmatpush1.msra.mxu0 0.0
    %2541 = vmatprep.subr.mxu0 0.0
    %2542 = vmatpush1.msra.mxu0 0.0
    %2543 = vmatprep.subr.mxu0 0.0
    %2544 = vmatpush1.msra.mxu0 0.0
    %2545 = vmatprep.subr.mxu0 0.0
    %2546 = vmatpush1.msra.mxu0 0.0
    %2547 = vmatprep.subr.mxu0 0.0
    %2548 = vmatpush1.msra.mxu0 0.0
    %2549 = vmatprep.subr.mxu0 0.0
    %2550 = vmatpush1.msra.mxu0 0.0
    %2551 = vmatprep.subr.mxu0 0.0
    %2552 = vmatpush1.msra.mxu0 0.0
    %2553 = vmatprep.subr.mxu0 0.0
    %2554 = vmatpush1.msra.mxu0 0.0
    %2555 = vmatprep.subr.mxu0 0.0
    %2556 = vmatpush1.msra.mxu0 0.0
    %2557 = vmatprep.subr.mxu0 0.0
    %2558 = vmatpush1.msra.mxu0 0.0
    %2559 = vmatprep.subr.mxu0 0.0
    %2560 = vmatpush1.msra.mxu0 0.0
    %2561 = vmatprep.subr.mxu0 0.0
    %2562 = vmatpush1.msra.mxu0 0.0
    %2563 = vmatprep.subr.mxu0 0.0
    %2564 = vmatpush1.msra.mxu0 0.0
    %2565 = vmatprep.subr.mxu0 0.0
    %2566 = vmatpush1.msra.mxu0 0.0
    %2567 = vmatprep.subr.mxu0 0.0
    %2568 = vmatpush1.msra.mxu0 0.0
    %2569 = vmatprep.subr.mxu0 0.0
    %2570 = vmatpush1.msra.mxu0 0.0
    %2571 = vmatprep.subr.mxu0 0.0
    %2572 = vmatpush1.msra.mxu0 0.0
    %2573 = vmatprep.subr.mxu0 0.0
    %2574 = vmatpush1.msra.mxu0 0.0
    %2575 = vmatprep.subr.mxu0 0.0
    %2576 = vmatpush1.msra.mxu0 0.0
    %2577 = vmatprep.subr.mxu0 0.0
    %2578 = vmatpush1.msra.mxu0 0.0
    %2579 = vmatprep.subr.mxu0 0.0
    %2580 = vmatpush1.msra.mxu0 0.0
    %2581 = vmatprep.subr.mxu0 0.0
    %2582 = vmatpush1.msra.mxu0 0.0
    %2583 = vmatprep.mubr.f32.mxu0 0.0
    %2584 = vmatmul.mubr.f32.gmra.mrb[0].mxu0 %v40
    %v2585 = vpop.f32.mrb[0].mxu0
    %v2586 = vadd.f32 0.0, %v2585
    %v2587 = vpop.f32.mrb[0].mxu0
    %v2588 = vadd.f32 0.0, %v2587
    %2589 = vdwg.mxu0
    %v2590 = vadd.f32 %v2586, %v2588
    %2591 = vadd.xlane.f32.xlu0 %v2590
    %v2592 = vpop.xlane.xlu0 %2591
    %v2593 = vmul.f32 %v2518, 0.001953125
    %v2594 = vmul.f32 %v2592, 0.001953125
    %v2595 = vmul.f32 %v2593, %v2593
    %v2596 = vsub.f32 %v2594, %v2595
    %v2597 = vmax.f32 %v2596, 0.0
    %v2598 = vrsqrt.pop %v2597
    %v2599 = vmul.f32 %v2597, %v2598
    %vm2600 = vcmp.eq.f32.partialorder %v2597, inf
    %v2601 = vsel %vm2600, %v2597, %v2599
    %vm2602 = vcmp.eq.f32.partialorder %v2597, 0.0
    %v2603 = vand.u32 %v2597, 2147483648
    %v2604 = vsel %vm2602, %v2603, %v2601
    %v2605 = vadd.f32 %v2604, 1e-06
    %v2606 = vrcp.pop %v2605
    %v2607 = vmul.f32 1.0, %v2606
    %v2608 = vlog2.pop %v2607
    %v2609 = vmul.f32 %v2608, 0.6931472
    %v2610 = vmul.f32 %v2609, 1.442695
    %v2611 = vpow.pop %v2610
    %v2612 = vsub.f32 %v2441, %v2593
    %v2613 = vsub.f32 %v2442, %v2593
    %v2614 = vmul.f32 %v2612, %v2611
    %v2615 = vmul.f32 %v2613, %v2611
    %s2616 = scalar_lea.vmem %s1, 72
    %v2617 = vld [vmem:[%s2616] sm:$0xff]
    %v2619 = vsel %vm38, %v2617, 0
    %2621 = vmatprep.subr.mxu0 %v2615
    %2622 = vmatpush1.msra.mxu0 %v2614
    %2623 = vmatprep.subr.mxu0 0.0
    %2624 = vmatpush1.msra.mxu0 0.0
    %2625 = vmatprep.subr.mxu0 0.0
    %2626 = vmatpush1.msra.mxu0 0.0
    %2627 = vmatprep.subr.mxu0 0.0
    %2628 = vmatpush1.msra.mxu0 0.0
    %2629 = vmatprep.subr.mxu0 0.0
    %2630 = vmatpush1.msra.mxu0 0.0
    %2631 = vmatprep.subr.mxu0 0.0
    %2632 = vmatpush1.msra.mxu0 0.0
    %2633 = vmatprep.subr.mxu0 0.0
    %2634 = vmatpush1.msra.mxu0 0.0
    %2635 = vmatprep.subr.mxu0 0.0
    %2636 = vmatpush1.msra.mxu0 0.0
    %2637 = vmatprep.subr.mxu0 0.0
    %2638 = vmatpush1.msra.mxu0 0.0
    %2639 = vmatprep.subr.mxu0 0.0
    %2640 = vmatpush1.msra.mxu0 0.0
    %2641 = vmatprep.subr.mxu0 0.0
    %2642 = vmatpush1.msra.mxu0 0.0
    %2643 = vmatprep.subr.mxu0 0.0
    %2644 = vmatpush1.msra.mxu0 0.0
    %2645 = vmatprep.subr.mxu0 0.0
    %2646 = vmatpush1.msra.mxu0 0.0
    %2647 = vmatprep.subr.mxu0 0.0
    %2648 = vmatpush1.msra.mxu0 0.0
    %2649 = vmatprep.subr.mxu0 0.0
    %2650 = vmatpush1.msra.mxu0 0.0
    %2651 = vmatprep.subr.mxu0 0.0
    %2652 = vmatpush1.msra.mxu0 0.0
    %2653 = vmatprep.subr.mxu0 0.0
    %2654 = vmatpush1.msra.mxu0 0.0
    %2655 = vmatprep.subr.mxu0 0.0
    %2656 = vmatpush1.msra.mxu0 0.0
    %2657 = vmatprep.subr.mxu0 0.0
    %2658 = vmatpush1.msra.mxu0 0.0
    %2659 = vmatprep.subr.mxu0 0.0
    %2660 = vmatpush1.msra.mxu0 0.0
    %2661 = vmatprep.subr.mxu0 0.0
    %2662 = vmatpush1.msra.mxu0 0.0
    %2663 = vmatprep.subr.mxu0 0.0
    %2664 = vmatpush1.msra.mxu0 0.0
    %2665 = vmatprep.subr.mxu0 0.0
    %2666 = vmatpush1.msra.mxu0 0.0
    %2667 = vmatprep.subr.mxu0 0.0
    %2668 = vmatpush1.msra.mxu0 0.0
    %2669 = vmatprep.subr.mxu0 0.0
    %2670 = vmatpush1.msra.mxu0 0.0
    %2671 = vmatprep.subr.mxu0 0.0
    %2672 = vmatpush1.msra.mxu0 0.0
    %2673 = vmatprep.subr.mxu0 0.0
    %2674 = vmatpush1.msra.mxu0 0.0
    %2675 = vmatprep.subr.mxu0 0.0
    %2676 = vmatpush1.msra.mxu0 0.0
    %2677 = vmatprep.subr.mxu0 0.0
    %2678 = vmatpush1.msra.mxu0 0.0
    %2679 = vmatprep.subr.mxu0 0.0
    %2680 = vmatpush1.msra.mxu0 0.0
    %2681 = vmatprep.subr.mxu0 0.0
    %2682 = vmatpush1.msra.mxu0 0.0
    %2683 = vmatprep.subr.mxu0 0.0
    %2684 = vmatpush1.msra.mxu0 0.0
    %2685 = vmatprep.mubr.f32.mxu0 0.0
    %2686 = vmatmul.mubr.f32.gmra.mrb[0].mxu0 %v2619
    %v2687 = vpop.f32.mrb[0].mxu0
    %v2688 = vadd.f32 0.0, %v2687
    %v2689 = vpop.f32.mrb[0].mxu0
    %v2690 = vadd.f32 0.0, %v2689
    %2691 = vdwg.mxu0
    %2692 = vst [vmem:[%s4] sm:$0xff] %v2688
    %2693 = vst [vmem:[%s4 + $0x8] sm:$0xff] %v2690
    %v2694 = vsel %vm290, %v2609, 0.0
    %2695 = vadd.xlane.f32.xlu0 %v2694
    %v2696 = vpop.xlane.xlu0 %2695
    %v2697 = vrot.slane %v2696, 4
    %v2698 = vadd.f32 %v2696, %v2697
    %v2699 = vrot.slane %v2698, 2
    %v2700 = vadd.f32 %v2698, %v2699
    %v2701 = vrot.slane %v2700, 1
    %v2702 = vadd.f32 %v2700, %v2701
    %s2703 = vtos %v2702
    %s2704 = smul.f32 %s2703, 128.0
    %s2705 = sadd.f32 %s2440, %s2704
    %s2706 = sld [smem:[#allocation2 + $0x9]]
    %s2707 = sadd.f32 %s2705, %s2706
    %v2708 = vld [vmem:[%s4] sm:$0xff]
    %v2709 = vld [vmem:[%s4 + $0x8] sm:$0xff]
    %v2710 = vmul.f32 %v2708, %v2708
    %v2711 = vmul.f32 %v2709, %v2709
    %2712 = vmatprep.subr.mxu0 %v2709
    %2713 = vmatpush1.msra.mxu0 %v2708
    %2714 = vmatprep.subr.mxu0 0.0
    %2715 = vmatpush1.msra.mxu0 0.0
    %2716 = vmatprep.subr.mxu0 0.0
    %2717 = vmatpush1.msra.mxu0 0.0
    %2718 = vmatprep.subr.mxu0 0.0
    %2719 = vmatpush1.msra.mxu0 0.0
    %2720 = vmatprep.subr.mxu0 0.0
    %2721 = vmatpush1.msra.mxu0 0.0
    %2722 = vmatprep.subr.mxu0 0.0
    %2723 = vmatpush1.msra.mxu0 0.0
    %2724 = vmatprep.subr.mxu0 0.0
    %2725 = vmatpush1.msra.mxu0 0.0
    %2726 = vmatprep.subr.mxu0 0.0
    %2727 = vmatpush1.msra.mxu0 0.0
    %2728 = vmatprep.subr.mxu0 0.0
    %2729 = vmatpush1.msra.mxu0 0.0
    %2730 = vmatprep.subr.mxu0 0.0
    %2731 = vmatpush1.msra.mxu0 0.0
    %2732 = vmatprep.subr.mxu0 0.0
    %2733 = vmatpush1.msra.mxu0 0.0
    %2734 = vmatprep.subr.mxu0 0.0
    %2735 = vmatpush1.msra.mxu0 0.0
    %2736 = vmatprep.subr.mxu0 0.0
    %2737 = vmatpush1.msra.mxu0 0.0
    %2738 = vmatprep.subr.mxu0 0.0
    %2739 = vmatpush1.msra.mxu0 0.0
    %2740 = vmatprep.subr.mxu0 0.0
    %2741 = vmatpush1.msra.mxu0 0.0
    %2742 = vmatprep.subr.mxu0 0.0
    %2743 = vmatpush1.msra.mxu0 0.0
    %2744 = vmatprep.subr.mxu0 0.0
    %2745 = vmatpush1.msra.mxu0 0.0
    %2746 = vmatprep.subr.mxu0 0.0
    %2747 = vmatpush1.msra.mxu0 0.0
    %2748 = vmatprep.subr.mxu0 0.0
    %2749 = vmatpush1.msra.mxu0 0.0
    %2750 = vmatprep.subr.mxu0 0.0
    %2751 = vmatpush1.msra.mxu0 0.0
    %2752 = vmatprep.subr.mxu0 0.0
    %2753 = vmatpush1.msra.mxu0 0.0
    %2754 = vmatprep.subr.mxu0 0.0
    %2755 = vmatpush1.msra.mxu0 0.0
    %2756 = vmatprep.subr.mxu0 0.0
    %2757 = vmatpush1.msra.mxu0 0.0
    %2758 = vmatprep.subr.mxu0 0.0
    %2759 = vmatpush1.msra.mxu0 0.0
    %2760 = vmatprep.subr.mxu0 0.0
    %2761 = vmatpush1.msra.mxu0 0.0
    %2762 = vmatprep.subr.mxu0 0.0
    %2763 = vmatpush1.msra.mxu0 0.0
    %2764 = vmatprep.subr.mxu0 0.0
    %2765 = vmatpush1.msra.mxu0 0.0
    %2766 = vmatprep.subr.mxu0 0.0
    %2767 = vmatpush1.msra.mxu0 0.0
    %2768 = vmatprep.subr.mxu0 0.0
    %2769 = vmatpush1.msra.mxu0 0.0
    %2770 = vmatprep.subr.mxu0 0.0
    %2771 = vmatpush1.msra.mxu0 0.0
    %2772 = vmatprep.subr.mxu0 0.0
    %2773 = vmatpush1.msra.mxu0 0.0
    %2774 = vmatprep.subr.mxu0 0.0
    %2775 = vmatpush1.msra.mxu0 0.0
    %2776 = vmatprep.mubr.f32.mxu0 0.0
    %2777 = vmatmul.mubr.f32.gmra.mrb[0].mxu0 %v40
    %v2778 = vpop.f32.mrb[0].mxu0
    %v2779 = vadd.f32 0.0, %v2778
    %v2780 = vpop.f32.mrb[0].mxu0
    %v2781 = vadd.f32 0.0, %v2780
    %2782 = vdwg.mxu0
    %v2783 = vadd.f32 %v2779, %v2781
    %2784 = vadd.xlane.f32.xlu0 %v2783
    %v2785 = vpop.xlane.xlu0 %2784
    %2786 = vmatprep.subr.mxu0 %v2711
    %2787 = vmatpush1.msra.mxu0 %v2710
    %2788 = vmatprep.subr.mxu0 0.0
    %2789 = vmatpush1.msra.mxu0 0.0
    %2790 = vmatprep.subr.mxu0 0.0
    %2791 = vmatpush1.msra.mxu0 0.0
    %2792 = vmatprep.subr.mxu0 0.0
    %2793 = vmatpush1.msra.mxu0 0.0
    %2794 = vmatprep.subr.mxu0 0.0
    %2795 = vmatpush1.msra.mxu0 0.0
    %2796 = vmatprep.subr.mxu0 0.0
    %2797 = vmatpush1.msra.mxu0 0.0
    %2798 = vmatprep.subr.mxu0 0.0
    %2799 = vmatpush1.msra.mxu0 0.0
    %2800 = vmatprep.subr.mxu0 0.0
    %2801 = vmatpush1.msra.mxu0 0.0
    %2802 = vmatprep.subr.mxu0 0.0
    %2803 = vmatpush1.msra.mxu0 0.0
    %2804 = vmatprep.subr.mxu0 0.0
    %2805 = vmatpush1.msra.mxu0 0.0
    %2806 = vmatprep.subr.mxu0 0.0
    %2807 = vmatpush1.msra.mxu0 0.0
    %2808 = vmatprep.subr.mxu0 0.0
    %2809 = vmatpush1.msra.mxu0 0.0
    %2810 = vmatprep.subr.mxu0 0.0
    %2811 = vmatpush1.msra.mxu0 0.0
    %2812 = vmatprep.subr.mxu0 0.0
    %2813 = vmatpush1.msra.mxu0 0.0
    %2814 = vmatprep.subr.mxu0 0.0
    %2815 = vmatpush1.msra.mxu0 0.0
    %2816 = vmatprep.subr.mxu0 0.0
    %2817 = vmatpush1.msra.mxu0 0.0
    %2818 = vmatprep.subr.mxu0 0.0
    %2819 = vmatpush1.msra.mxu0 0.0
    %2820 = vmatprep.subr.mxu0 0.0
    %2821 = vmatpush1.msra.mxu0 0.0
    %2822 = vmatprep.subr.mxu0 0.0
    %2823 = vmatpush1.msra.mxu0 0.0
    %2824 = vmatprep.subr.mxu0 0.0
    %2825 = vmatpush1.msra.mxu0 0.0
    %2826 = vmatprep.subr.mxu0 0.0
    %2827 = vmatpush1.msra.mxu0 0.0
    %2828 = vmatprep.subr.mxu0 0.0
    %2829 = vmatpush1.msra.mxu0 0.0
    %2830 = vmatprep.subr.mxu0 0.0
    %2831 = vmatpush1.msra.mxu0 0.0
    %2832 = vmatprep.subr.mxu0 0.0
    %2833 = vmatpush1.msra.mxu0 0.0
    %2834 = vmatprep.subr.mxu0 0.0
    %2835 = vmatpush1.msra.mxu0 0.0
    %2836 = vmatprep.subr.mxu0 0.0
    %2837 = vmatpush1.msra.mxu0 0.0
    %2838 = vmatprep.subr.mxu0 0.0
    %2839 = vmatpush1.msra.mxu0 0.0
    %2840 = vmatprep.subr.mxu0 0.0
    %2841 = vmatpush1.msra.mxu0 0.0
    %2842 = vmatprep.subr.mxu0 0.0
    %2843 = vmatpush1.msra.mxu0 0.0
    %2844 = vmatprep.subr.mxu0 0.0
    %2845 = vmatpush1.msra.mxu0 0.0
    %2846 = vmatprep.subr.mxu0 0.0
    %2847 = vmatpush1.msra.mxu0 0.0
    %2848 = vmatprep.subr.mxu0 0.0
    %2849 = vmatpush1.msra.mxu0 0.0
    %2850 = vmatprep.mubr.f32.mxu0 0.0
    %2851 = vmatmul.mubr.f32.gmra.mrb[0].mxu0 %v40
    %v2852 = vpop.f32.mrb[0].mxu0
    %v2853 = vadd.f32 0.0, %v2852
    %v2854 = vpop.f32.mrb[0].mxu0
    %v2855 = vadd.f32 0.0, %v2854
    %2856 = vdwg.mxu0
    %v2857 = vadd.f32 %v2853, %v2855
    %2858 = vadd.xlane.f32.xlu0 %v2857
    %v2859 = vpop.xlane.xlu0 %2858
    %v2860 = vmul.f32 %v2785, 0.001953125
    %v2861 = vmul.f32 %v2859, 0.001953125
    %v2862 = vmul.f32 %v2860, %v2860
    %v2863 = vsub.f32 %v2861, %v2862
    %v2864 = vmax.f32 %v2863, 0.0
    %v2865 = vrsqrt.pop %v2864
    %v2866 = vmul.f32 %v2864, %v2865
    %vm2867 = vcmp.eq.f32.partialorder %v2864, inf
    %v2868 = vsel %vm2867, %v2864, %v2866
    %vm2869 = vcmp.eq.f32.partialorder %v2864, 0.0
    %v2870 = vand.u32 %v2864, 2147483648
    %v2871 = vsel %vm2869, %v2870, %v2868
    %v2872 = vadd.f32 %v2871, 1e-06
    %v2873 = vrcp.pop %v2872
    %v2874 = vmul.f32 1.0, %v2873
    %v2875 = vlog2.pop %v2874
    %v2876 = vmul.f32 %v2875, 0.6931472
    %v2877 = vmul.f32 %v2876, 1.442695
    %v2878 = vpow.pop %v2877
    %v2879 = vsub.f32 %v2708, %v2860
    %v2880 = vsub.f32 %v2709, %v2860
    %v2881 = vmul.f32 %v2879, %v2878
    %v2882 = vmul.f32 %v2880, %v2878
    %s2883 = scalar_lea.vmem %s1, 80
    %v2884 = vld [vmem:[%s2883] sm:$0xff]
    %v2886 = vsel %vm38, %v2884, 0
    %2888 = vmatprep.subr.mxu0 %v2882
    %2889 = vmatpush1.msra.mxu0 %v2881
    %2890 = vmatprep.subr.mxu0 0.0
    %2891 = vmatpush1.msra.mxu0 0.0
    %2892 = vmatprep.subr.mxu0 0.0
    %2893 = vmatpush1.msra.mxu0 0.0
    %2894 = vmatprep.subr.mxu0 0.0
    %2895 = vmatpush1.msra.mxu0 0.0
    %2896 = vmatprep.subr.mxu0 0.0
    %2897 = vmatpush1.msra.mxu0 0.0
    %2898 = vmatprep.subr.mxu0 0.0
    %2899 = vmatpush1.msra.mxu0 0.0
    %2900 = vmatprep.subr.mxu0 0.0
    %2901 = vmatpush1.msra.mxu0 0.0
    %2902 = vmatprep.subr.mxu0 0.0
    %2903 = vmatpush1.msra.mxu0 0.0
    %2904 = vmatprep.subr.mxu0 0.0
    %2905 = vmatpush1.msra.mxu0 0.0
    %2906 = vmatprep.subr.mxu0 0.0
    %2907 = vmatpush1.msra.mxu0 0.0
    %2908 = vmatprep.subr.mxu0 0.0
    %2909 = vmatpush1.msra.mxu0 0.0
    %2910 = vmatprep.subr.mxu0 0.0
    %2911 = vmatpush1.msra.mxu0 0.0
    %2912 = vmatprep.subr.mxu0 0.0
    %2913 = vmatpush1.msra.mxu0 0.0
    %2914 = vmatprep.subr.mxu0 0.0
    %2915 = vmatpush1.msra.mxu0 0.0
    %2916 = vmatprep.subr.mxu0 0.0
    %2917 = vmatpush1.msra.mxu0 0.0
    %2918 = vmatprep.subr.mxu0 0.0
    %2919 = vmatpush1.msra.mxu0 0.0
    %2920 = vmatprep.subr.mxu0 0.0
    %2921 = vmatpush1.msra.mxu0 0.0
    %2922 = vmatprep.subr.mxu0 0.0
    %2923 = vmatpush1.msra.mxu0 0.0
    %2924 = vmatprep.subr.mxu0 0.0
    %2925 = vmatpush1.msra.mxu0 0.0
    %2926 = vmatprep.subr.mxu0 0.0
    %2927 = vmatpush1.msra.mxu0 0.0
    %2928 = vmatprep.subr.mxu0 0.0
    %2929 = vmatpush1.msra.mxu0 0.0
    %2930 = vmatprep.subr.mxu0 0.0
    %2931 = vmatpush1.msra.mxu0 0.0
    %2932 = vmatprep.subr.mxu0 0.0
    %2933 = vmatpush1.msra.mxu0 0.0
    %2934 = vmatprep.subr.mxu0 0.0
    %2935 = vmatpush1.msra.mxu0 0.0
    %2936 = vmatprep.subr.mxu0 0.0
    %2937 = vmatpush1.msra.mxu0 0.0
    %2938 = vmatprep.subr.mxu0 0.0
    %2939 = vmatpush1.msra.mxu0 0.0
    %2940 = vmatprep.subr.mxu0 0.0
    %2941 = vmatpush1.msra.mxu0 0.0
    %2942 = vmatprep.subr.mxu0 0.0
    %2943 = vmatpush1.msra.mxu0 0.0
    %2944 = vmatprep.subr.mxu0 0.0
    %2945 = vmatpush1.msra.mxu0 0.0
    %2946 = vmatprep.subr.mxu0 0.0
    %2947 = vmatpush1.msra.mxu0 0.0
    %2948 = vmatprep.subr.mxu0 0.0
    %2949 = vmatpush1.msra.mxu0 0.0
    %2950 = vmatprep.subr.mxu0 0.0
    %2951 = vmatpush1.msra.mxu0 0.0
    %2952 = vmatprep.mubr.f32.mxu0 0.0
    %2953 = vmatmul.mubr.f32.gmra.mrb[0].mxu0 %v2886
    %v2954 = vpop.f32.mrb[0].mxu0
    %v2955 = vadd.f32 0.0, %v2954
    %v2956 = vpop.f32.mrb[0].mxu0
    %v2957 = vadd.f32 0.0, %v2956
    %2958 = vdwg.mxu0
    %2959 = vst [vmem:[%s4] sm:$0xff] %v2955
    %2960 = vst [vmem:[%s4 + $0x8] sm:$0xff] %v2957
    %v2961 = vsel %vm290, %v2876, 0.0
    %2962 = vadd.xlane.f32.xlu0 %v2961
    %v2963 = vpop.xlane.xlu0 %2962
    %v2964 = vrot.slane %v2963, 4
    %v2965 = vadd.f32 %v2963, %v2964
    %v2966 = vrot.slane %v2965, 2
    %v2967 = vadd.f32 %v2965, %v2966
    %v2968 = vrot.slane %v2967, 1
    %v2969 = vadd.f32 %v2967, %v2968
    %s2970 = vtos %v2969
    %s2971 = smul.f32 %s2970, 128.0
    %s2972 = sadd.f32 %s2707, %s2971
    %s2973 = sld [smem:[#allocation2 + $0xa]]
    %s2974 = sadd.f32 %s2972, %s2973
    %v2975 = vld [vmem:[%s4] sm:$0xff]
    %v2976 = vld [vmem:[%s4 + $0x8] sm:$0xff]
    %v2977 = vmul.f32 %v2975, %v2975
    %v2978 = vmul.f32 %v2976, %v2976
    %2979 = vmatprep.subr.mxu0 %v2976
    %2980 = vmatpush1.msra.mxu0 %v2975
    %2981 = vmatprep.subr.mxu0 0.0
    %2982 = vmatpush1.msra.mxu0 0.0
    %2983 = vmatprep.subr.mxu0 0.0
    %2984 = vmatpush1.msra.mxu0 0.0
    %2985 = vmatprep.subr.mxu0 0.0
    %2986 = vmatpush1.msra.mxu0 0.0
    %2987 = vmatprep.subr.mxu0 0.0
    %2988 = vmatpush1.msra.mxu0 0.0
    %2989 = vmatprep.subr.mxu0 0.0
    %2990 = vmatpush1.msra.mxu0 0.0
    %2991 = vmatprep.subr.mxu0 0.0
    %2992 = vmatpush1.msra.mxu0 0.0
    %2993 = vmatprep.subr.mxu0 0.0
    %2994 = vmatpush1.msra.mxu0 0.0
    %2995 = vmatprep.subr.mxu0 0.0
    %2996 = vmatpush1.msra.mxu0 0.0
    %2997 = vmatprep.subr.mxu0 0.0
    %2998 = vmatpush1.msra.mxu0 0.0
    %2999 = vmatprep.subr.mxu0 0.0
    %3000 = vmatpush1.msra.mxu0 0.0
    %3001 = vmatprep.subr.mxu0 0.0
    %3002 = vmatpush1.msra.mxu0 0.0
    %3003 = vmatprep.subr.mxu0 0.0
    %3004 = vmatpush1.msra.mxu0 0.0
    %3005 = vmatprep.subr.mxu0 0.0
    %3006 = vmatpush1.msra.mxu0 0.0
    %3007 = vmatprep.subr.mxu0 0.0
    %3008 = vmatpush1.msra.mxu0 0.0
    %3009 = vmatprep.subr.mxu0 0.0
    %3010 = vmatpush1.msra.mxu0 0.0
    %3011 = vmatprep.subr.mxu0 0.0
    %3012 = vmatpush1.msra.mxu0 0.0
    %3013 = vmatprep.subr.mxu0 0.0
    %3014 = vmatpush1.msra.mxu0 0.0
    %3015 = vmatprep.subr.mxu0 0.0
    %3016 = vmatpush1.msra.mxu0 0.0
    %3017 = vmatprep.subr.mxu0 0.0
    %3018 = vmatpush1.msra.mxu0 0.0
    %3019 = vmatprep.subr.mxu0 0.0
    %3020 = vmatpush1.msra.mxu0 0.0
    %3021 = vmatprep.subr.mxu0 0.0
    %3022 = vmatpush1.msra.mxu0 0.0
    %3023 = vmatprep.subr.mxu0 0.0
    %3024 = vmatpush1.msra.mxu0 0.0
    %3025 = vmatprep.subr.mxu0 0.0
    %3026 = vmatpush1.msra.mxu0 0.0
    %3027 = vmatprep.subr.mxu0 0.0
    %3028 = vmatpush1.msra.mxu0 0.0
    %3029 = vmatprep.subr.mxu0 0.0
    %3030 = vmatpush1.msra.mxu0 0.0
    %3031 = vmatprep.subr.mxu0 0.0
    %3032 = vmatpush1.msra.mxu0 0.0
    %3033 = vmatprep.subr.mxu0 0.0
    %3034 = vmatpush1.msra.mxu0 0.0
    %3035 = vmatprep.subr.mxu0 0.0
    %3036 = vmatpush1.msra.mxu0 0.0
    %3037 = vmatprep.subr.mxu0 0.0
    %3038 = vmatpush1.msra.mxu0 0.0
    %3039 = vmatprep.subr.mxu0 0.0
    %3040 = vmatpush1.msra.mxu0 0.0
    %3041 = vmatprep.subr.mxu0 0.0
    %3042 = vmatpush1.msra.mxu0 0.0
    %3043 = vmatprep.mubr.f32.mxu0 0.0
    %3044 = vmatmul.mubr.f32.gmra.mrb[0].mxu0 %v40
    %v3045 = vpop.f32.mrb[0].mxu0
    %v3046 = vadd.f32 0.0, %v3045
    %v3047 = vpop.f32.mrb[0].mxu0
    %v3048 = vadd.f32 0.0, %v3047
    %3049 = vdwg.mxu0
    %v3050 = vadd.f32 %v3046, %v3048
    %3051 = vadd.xlane.f32.xlu0 %v3050
    %v3052 = vpop.xlane.xlu0 %3051
    %3053 = vmatprep.subr.mxu0 %v2978
    %3054 = vmatpush1.msra.mxu0 %v2977
    %3055 = vmatprep.subr.mxu0 0.0
    %3056 = vmatpush1.msra.mxu0 0.0
    %3057 = vmatprep.subr.mxu0 0.0
    %3058 = vmatpush1.msra.mxu0 0.0
    %3059 = vmatprep.subr.mxu0 0.0
    %3060 = vmatpush1.msra.mxu0 0.0
    %3061 = vmatprep.subr.mxu0 0.0
    %3062 = vmatpush1.msra.mxu0 0.0
    %3063 = vmatprep.subr.mxu0 0.0
    %3064 = vmatpush1.msra.mxu0 0.0
    %3065 = vmatprep.subr.mxu0 0.0
    %3066 = vmatpush1.msra.mxu0 0.0
    %3067 = vmatprep.subr.mxu0 0.0
    %3068 = vmatpush1.msra.mxu0 0.0
    %3069 = vmatprep.subr.mxu0 0.0
    %3070 = vmatpush1.msra.mxu0 0.0
    %3071 = vmatprep.subr.mxu0 0.0
    %3072 = vmatpush1.msra.mxu0 0.0
    %3073 = vmatprep.subr.mxu0 0.0
    %3074 = vmatpush1.msra.mxu0 0.0
    %3075 = vmatprep.subr.mxu0 0.0
    %3076 = vmatpush1.msra.mxu0 0.0
    %3077 = vmatprep.subr.mxu0 0.0
    %3078 = vmatpush1.msra.mxu0 0.0
    %3079 = vmatprep.subr.mxu0 0.0
    %3080 = vmatpush1.msra.mxu0 0.0
    %3081 = vmatprep.subr.mxu0 0.0
    %3082 = vmatpush1.msra.mxu0 0.0
    %3083 = vmatprep.subr.mxu0 0.0
    %3084 = vmatpush1.msra.mxu0 0.0
    %3085 = vmatprep.subr.mxu0 0.0
    %3086 = vmatpush1.msra.mxu0 0.0
    %3087 = vmatprep.subr.mxu0 0.0
    %3088 = vmatpush1.msra.mxu0 0.0
    %3089 = vmatprep.subr.mxu0 0.0
    %3090 = vmatpush1.msra.mxu0 0.0
    %3091 = vmatprep.subr.mxu0 0.0
    %3092 = vmatpush1.msra.mxu0 0.0
    %3093 = vmatprep.subr.mxu0 0.0
    %3094 = vmatpush1.msra.mxu0 0.0
    %3095 = vmatprep.subr.mxu0 0.0
    %3096 = vmatpush1.msra.mxu0 0.0
    %3097 = vmatprep.subr.mxu0 0.0
    %3098 = vmatpush1.msra.mxu0 0.0
    %3099 = vmatprep.subr.mxu0 0.0
    %3100 = vmatpush1.msra.mxu0 0.0
    %3101 = vmatprep.subr.mxu0 0.0
    %3102 = vmatpush1.msra.mxu0 0.0
    %3103 = vmatprep.subr.mxu0 0.0
    %3104 = vmatpush1.msra.mxu0 0.0
    %3105 = vmatprep.subr.mxu0 0.0
    %3106 = vmatpush1.msra.mxu0 0.0
    %3107 = vmatprep.subr.mxu0 0.0
    %3108 = vmatpush1.msra.mxu0 0.0
    %3109 = vmatprep.subr.mxu0 0.0
    %3110 = vmatpush1.msra.mxu0 0.0
    %3111 = vmatprep.subr.mxu0 0.0
    %3112 = vmatpush1.msra.mxu0 0.0
    %3113 = vmatprep.subr.mxu0 0.0
    %3114 = vmatpush1.msra.mxu0 0.0
    %3115 = vmatprep.subr.mxu0 0.0
    %3116 = vmatpush1.msra.mxu0 0.0
    %3117 = vmatprep.mubr.f32.mxu0 0.0
    %3118 = vmatmul.mubr.f32.gmra.mrb[0].mxu0 %v40
    %v3119 = vpop.f32.mrb[0].mxu0
    %v3120 = vadd.f32 0.0, %v3119
    %v3121 = vpop.f32.mrb[0].mxu0
    %v3122 = vadd.f32 0.0, %v3121
    %3123 = vdwg.mxu0
    %v3124 = vadd.f32 %v3120, %v3122
    %3125 = vadd.xlane.f32.xlu0 %v3124
    %v3126 = vpop.xlane.xlu0 %3125
    %v3127 = vmul.f32 %v3052, 0.001953125
    %v3128 = vmul.f32 %v3126, 0.001953125
    %v3129 = vmul.f32 %v3127, %v3127
    %v3130 = vsub.f32 %v3128, %v3129
    %v3131 = vmax.f32 %v3130, 0.0
    %v3132 = vrsqrt.pop %v3131
    %v3133 = vmul.f32 %v3131, %v3132
    %vm3134 = vcmp.eq.f32.partialorder %v3131, inf
    %v3135 = vsel %vm3134, %v3131, %v3133
    %vm3136 = vcmp.eq.f32.partialorder %v3131, 0.0
    %v3137 = vand.u32 %v3131, 2147483648
    %v3138 = vsel %vm3136, %v3137, %v3135
    %v3139 = vadd.f32 %v3138, 1e-06
    %v3140 = vrcp.pop %v3139
    %v3141 = vmul.f32 1.0, %v3140
    %v3142 = vlog2.pop %v3141
    %v3143 = vmul.f32 %v3142, 0.6931472
    %v3144 = vmul.f32 %v3143, 1.442695
    %v3145 = vpow.pop %v3144
    %v3146 = vsub.f32 %v2975, %v3127
    %v3147 = vsub.f32 %v2976, %v3127
    %v3148 = vmul.f32 %v3146, %v3145
    %v3149 = vmul.f32 %v3147, %v3145
    %s3150 = scalar_lea.vmem %s1, 88
    %v3151 = vld [vmem:[%s3150] sm:$0xff]
    %v3153 = vsel %vm38, %v3151, 0
    %3155 = vmatprep.subr.mxu0 %v3149
    %3156 = vmatpush1.msra.mxu0 %v3148
    %3157 = vmatprep.subr.mxu0 0.0
    %3158 = vmatpush1.msra.mxu0 0.0
    %3159 = vmatprep.subr.mxu0 0.0
    %3160 = vmatpush1.msra.mxu0 0.0
    %3161 = vmatprep.subr.mxu0 0.0
    %3162 = vmatpush1.msra.mxu0 0.0
    %3163 = vmatprep.subr.mxu0 0.0
    %3164 = vmatpush1.msra.mxu0 0.0
    %3165 = vmatprep.subr.mxu0 0.0
    %3166 = vmatpush1.msra.mxu0 0.0
    %3167 = vmatprep.subr.mxu0 0.0
    %3168 = vmatpush1.msra.mxu0 0.0
    %3169 = vmatprep.subr.mxu0 0.0
    %3170 = vmatpush1.msra.mxu0 0.0
    %3171 = vmatprep.subr.mxu0 0.0
    %3172 = vmatpush1.msra.mxu0 0.0
    %3173 = vmatprep.subr.mxu0 0.0
    %3174 = vmatpush1.msra.mxu0 0.0
    %3175 = vmatprep.subr.mxu0 0.0
    %3176 = vmatpush1.msra.mxu0 0.0
    %3177 = vmatprep.subr.mxu0 0.0
    %3178 = vmatpush1.msra.mxu0 0.0
    %3179 = vmatprep.subr.mxu0 0.0
    %3180 = vmatpush1.msra.mxu0 0.0
    %3181 = vmatprep.subr.mxu0 0.0
    %3182 = vmatpush1.msra.mxu0 0.0
    %3183 = vmatprep.subr.mxu0 0.0
    %3184 = vmatpush1.msra.mxu0 0.0
    %3185 = vmatprep.subr.mxu0 0.0
    %3186 = vmatpush1.msra.mxu0 0.0
    %3187 = vmatprep.subr.mxu0 0.0
    %3188 = vmatpush1.msra.mxu0 0.0
    %3189 = vmatprep.subr.mxu0 0.0
    %3190 = vmatpush1.msra.mxu0 0.0
    %3191 = vmatprep.subr.mxu0 0.0
    %3192 = vmatpush1.msra.mxu0 0.0
    %3193 = vmatprep.subr.mxu0 0.0
    %3194 = vmatpush1.msra.mxu0 0.0
    %3195 = vmatprep.subr.mxu0 0.0
    %3196 = vmatpush1.msra.mxu0 0.0
    %3197 = vmatprep.subr.mxu0 0.0
    %3198 = vmatpush1.msra.mxu0 0.0
    %3199 = vmatprep.subr.mxu0 0.0
    %3200 = vmatpush1.msra.mxu0 0.0
    %3201 = vmatprep.subr.mxu0 0.0
    %3202 = vmatpush1.msra.mxu0 0.0
    %3203 = vmatprep.subr.mxu0 0.0
    %3204 = vmatpush1.msra.mxu0 0.0
    %3205 = vmatprep.subr.mxu0 0.0
    %3206 = vmatpush1.msra.mxu0 0.0
    %3207 = vmatprep.subr.mxu0 0.0
    %3208 = vmatpush1.msra.mxu0 0.0
    %3209 = vmatprep.subr.mxu0 0.0
    %3210 = vmatpush1.msra.mxu0 0.0
    %3211 = vmatprep.subr.mxu0 0.0
    %3212 = vmatpush1.msra.mxu0 0.0
    %3213 = vmatprep.subr.mxu0 0.0
    %3214 = vmatpush1.msra.mxu0 0.0
    %3215 = vmatprep.subr.mxu0 0.0
    %3216 = vmatpush1.msra.mxu0 0.0
    %3217 = vmatprep.subr.mxu0 0.0
    %3218 = vmatpush1.msra.mxu0 0.0
    %3219 = vmatprep.mubr.f32.mxu0 0.0
    %3220 = vmatmul.mubr.f32.gmra.mrb[0].mxu0 %v3153
    %v3221 = vpop.f32.mrb[0].mxu0
    %v3222 = vadd.f32 0.0, %v3221
    %v3223 = vpop.f32.mrb[0].mxu0
    %v3224 = vadd.f32 0.0, %v3223
    %3225 = vdwg.mxu0
    %3226 = vst [vmem:[%s4] sm:$0xff] %v3222
    %3227 = vst [vmem:[%s4 + $0x8] sm:$0xff] %v3224
    %v3228 = vsel %vm290, %v3143, 0.0
    %3229 = vadd.xlane.f32.xlu0 %v3228
    %v3230 = vpop.xlane.xlu0 %3229
    %v3231 = vrot.slane %v3230, 4
    %v3232 = vadd.f32 %v3230, %v3231
    %v3233 = vrot.slane %v3232, 2
    %v3234 = vadd.f32 %v3232, %v3233
    %v3235 = vrot.slane %v3234, 1
    %v3236 = vadd.f32 %v3234, %v3235
    %s3237 = vtos %v3236
    %s3238 = smul.f32 %s3237, 128.0
    %s3239 = sadd.f32 %s2974, %s3238
    %s3240 = sld [smem:[#allocation2 + $0xb]]
    %s3241 = sadd.f32 %s3239, %s3240
    %v3242 = vld [vmem:[%s4] sm:$0xff]
    %v3243 = vld [vmem:[%s4 + $0x8] sm:$0xff]
    %v3244 = vmul.f32 %v3242, %v3242
    %v3245 = vmul.f32 %v3243, %v3243
    %3246 = vmatprep.subr.mxu0 %v3243
    %3247 = vmatpush1.msra.mxu0 %v3242
    %3248 = vmatprep.subr.mxu0 0.0
    %3249 = vmatpush1.msra.mxu0 0.0
    %3250 = vmatprep.subr.mxu0 0.0
    %3251 = vmatpush1.msra.mxu0 0.0
    %3252 = vmatprep.subr.mxu0 0.0
    %3253 = vmatpush1.msra.mxu0 0.0
    %3254 = vmatprep.subr.mxu0 0.0
    %3255 = vmatpush1.msra.mxu0 0.0
    %3256 = vmatprep.subr.mxu0 0.0
    %3257 = vmatpush1.msra.mxu0 0.0
    %3258 = vmatprep.subr.mxu0 0.0
    %3259 = vmatpush1.msra.mxu0 0.0
    %3260 = vmatprep.subr.mxu0 0.0
    %3261 = vmatpush1.msra.mxu0 0.0
    %3262 = vmatprep.subr.mxu0 0.0
    %3263 = vmatpush1.msra.mxu0 0.0
    %3264 = vmatprep.subr.mxu0 0.0
    %3265 = vmatpush1.msra.mxu0 0.0
    %3266 = vmatprep.subr.mxu0 0.0
    %3267 = vmatpush1.msra.mxu0 0.0
    %3268 = vmatprep.subr.mxu0 0.0
    %3269 = vmatpush1.msra.mxu0 0.0
    %3270 = vmatprep.subr.mxu0 0.0
    %3271 = vmatpush1.msra.mxu0 0.0
    %3272 = vmatprep.subr.mxu0 0.0
    %3273 = vmatpush1.msra.mxu0 0.0
    %3274 = vmatprep.subr.mxu0 0.0
    %3275 = vmatpush1.msra.mxu0 0.0
    %3276 = vmatprep.subr.mxu0 0.0
    %3277 = vmatpush1.msra.mxu0 0.0
    %3278 = vmatprep.subr.mxu0 0.0
    %3279 = vmatpush1.msra.mxu0 0.0
    %3280 = vmatprep.subr.mxu0 0.0
    %3281 = vmatpush1.msra.mxu0 0.0
    %3282 = vmatprep.subr.mxu0 0.0
    %3283 = vmatpush1.msra.mxu0 0.0
    %3284 = vmatprep.subr.mxu0 0.0
    %3285 = vmatpush1.msra.mxu0 0.0
    %3286 = vmatprep.subr.mxu0 0.0
    %3287 = vmatpush1.msra.mxu0 0.0
    %3288 = vmatprep.subr.mxu0 0.0
    %3289 = vmatpush1.msra.mxu0 0.0
    %3290 = vmatprep.subr.mxu0 0.0
    %3291 = vmatpush1.msra.mxu0 0.0
    %3292 = vmatprep.subr.mxu0 0.0
    %3293 = vmatpush1.msra.mxu0 0.0
    %3294 = vmatprep.subr.mxu0 0.0
    %3295 = vmatpush1.msra.mxu0 0.0
    %3296 = vmatprep.subr.mxu0 0.0
    %3297 = vmatpush1.msra.mxu0 0.0
    %3298 = vmatprep.subr.mxu0 0.0
    %3299 = vmatpush1.msra.mxu0 0.0
    %3300 = vmatprep.subr.mxu0 0.0
    %3301 = vmatpush1.msra.mxu0 0.0
    %3302 = vmatprep.subr.mxu0 0.0
    %3303 = vmatpush1.msra.mxu0 0.0
    %3304 = vmatprep.subr.mxu0 0.0
    %3305 = vmatpush1.msra.mxu0 0.0
    %3306 = vmatprep.subr.mxu0 0.0
    %3307 = vmatpush1.msra.mxu0 0.0
    %3308 = vmatprep.subr.mxu0 0.0
    %3309 = vmatpush1.msra.mxu0 0.0
    %3310 = vmatprep.mubr.f32.mxu0 0.0
    %3311 = vmatmul.mubr.f32.gmra.mrb[0].mxu0 %v40
    %v3312 = vpop.f32.mrb[0].mxu0
    %v3313 = vadd.f32 0.0, %v3312
    %v3314 = vpop.f32.mrb[0].mxu0
    %v3315 = vadd.f32 0.0, %v3314
    %3316 = vdwg.mxu0
    %v3317 = vadd.f32 %v3313, %v3315
    %3318 = vadd.xlane.f32.xlu0 %v3317
    %v3319 = vpop.xlane.xlu0 %3318
    %3320 = vmatprep.subr.mxu0 %v3245
    %3321 = vmatpush1.msra.mxu0 %v3244
    %3322 = vmatprep.subr.mxu0 0.0
    %3323 = vmatpush1.msra.mxu0 0.0
    %3324 = vmatprep.subr.mxu0 0.0
    %3325 = vmatpush1.msra.mxu0 0.0
    %3326 = vmatprep.subr.mxu0 0.0
    %3327 = vmatpush1.msra.mxu0 0.0
    %3328 = vmatprep.subr.mxu0 0.0
    %3329 = vmatpush1.msra.mxu0 0.0
    %3330 = vmatprep.subr.mxu0 0.0
    %3331 = vmatpush1.msra.mxu0 0.0
    %3332 = vmatprep.subr.mxu0 0.0
    %3333 = vmatpush1.msra.mxu0 0.0
    %3334 = vmatprep.subr.mxu0 0.0
    %3335 = vmatpush1.msra.mxu0 0.0
    %3336 = vmatprep.subr.mxu0 0.0
    %3337 = vmatpush1.msra.mxu0 0.0
    %3338 = vmatprep.subr.mxu0 0.0
    %3339 = vmatpush1.msra.mxu0 0.0
    %3340 = vmatprep.subr.mxu0 0.0
    %3341 = vmatpush1.msra.mxu0 0.0
    %3342 = vmatprep.subr.mxu0 0.0
    %3343 = vmatpush1.msra.mxu0 0.0
    %3344 = vmatprep.subr.mxu0 0.0
    %3345 = vmatpush1.msra.mxu0 0.0
    %3346 = vmatprep.subr.mxu0 0.0
    %3347 = vmatpush1.msra.mxu0 0.0
    %3348 = vmatprep.subr.mxu0 0.0
    %3349 = vmatpush1.msra.mxu0 0.0
    %3350 = vmatprep.subr.mxu0 0.0
    %3351 = vmatpush1.msra.mxu0 0.0
    %3352 = vmatprep.subr.mxu0 0.0
    %3353 = vmatpush1.msra.mxu0 0.0
    %3354 = vmatprep.subr.mxu0 0.0
    %3355 = vmatpush1.msra.mxu0 0.0
    %3356 = vmatprep.subr.mxu0 0.0
    %3357 = vmatpush1.msra.mxu0 0.0
    %3358 = vmatprep.subr.mxu0 0.0
    %3359 = vmatpush1.msra.mxu0 0.0
    %3360 = vmatprep.subr.mxu0 0.0
    %3361 = vmatpush1.msra.mxu0 0.0
    %3362 = vmatprep.subr.mxu0 0.0
    %3363 = vmatpush1.msra.mxu0 0.0
    %3364 = vmatprep.subr.mxu0 0.0
    %3365 = vmatpush1.msra.mxu0 0.0
    %3366 = vmatprep.subr.mxu0 0.0
    %3367 = vmatpush1.msra.mxu0 0.0
    %3368 = vmatprep.subr.mxu0 0.0
    %3369 = vmatpush1.msra.mxu0 0.0
    %3370 = vmatprep.subr.mxu0 0.0
    %3371 = vmatpush1.msra.mxu0 0.0
    %3372 = vmatprep.subr.mxu0 0.0
    %3373 = vmatpush1.msra.mxu0 0.0
    %3374 = vmatprep.subr.mxu0 0.0
    %3375 = vmatpush1.msra.mxu0 0.0
    %3376 = vmatprep.subr.mxu0 0.0
    %3377 = vmatpush1.msra.mxu0 0.0
    %3378 = vmatprep.subr.mxu0 0.0
    %3379 = vmatpush1.msra.mxu0 0.0
    %3380 = vmatprep.subr.mxu0 0.0
    %3381 = vmatpush1.msra.mxu0 0.0
    %3382 = vmatprep.subr.mxu0 0.0
    %3383 = vmatpush1.msra.mxu0 0.0
    %3384 = vmatprep.mubr.f32.mxu0 0.0
    %3385 = vmatmul.mubr.f32.gmra.mrb[0].mxu0 %v40
    %v3386 = vpop.f32.mrb[0].mxu0
    %v3387 = vadd.f32 0.0, %v3386
    %v3388 = vpop.f32.mrb[0].mxu0
    %v3389 = vadd.f32 0.0, %v3388
    %3390 = vdwg.mxu0
    %v3391 = vadd.f32 %v3387, %v3389
    %3392 = vadd.xlane.f32.xlu0 %v3391
    %v3393 = vpop.xlane.xlu0 %3392
    %v3394 = vmul.f32 %v3319, 0.001953125
    %v3395 = vmul.f32 %v3393, 0.001953125
    %v3396 = vmul.f32 %v3394, %v3394
    %v3397 = vsub.f32 %v3395, %v3396
    %v3398 = vmax.f32 %v3397, 0.0
    %v3399 = vrsqrt.pop %v3398
    %v3400 = vmul.f32 %v3398, %v3399
    %vm3401 = vcmp.eq.f32.partialorder %v3398, inf
    %v3402 = vsel %vm3401, %v3398, %v3400
    %vm3403 = vcmp.eq.f32.partialorder %v3398, 0.0
    %v3404 = vand.u32 %v3398, 2147483648
    %v3405 = vsel %vm3403, %v3404, %v3402
    %v3406 = vadd.f32 %v3405, 1e-06
    %v3407 = vrcp.pop %v3406
    %v3408 = vmul.f32 1.0, %v3407
    %v3409 = vlog2.pop %v3408
    %v3410 = vmul.f32 %v3409, 0.6931472
    %v3411 = vmul.f32 %v3410, 1.442695
    %v3412 = vpow.pop %v3411
    %v3413 = vsub.f32 %v3242, %v3394
    %v3414 = vsub.f32 %v3243, %v3394
    %v3415 = vmul.f32 %v3413, %v3412
    %v3416 = vmul.f32 %v3414, %v3412
    %s3417 = scalar_lea.vmem %s1, 96
    %v3418 = vld [vmem:[%s3417] sm:$0xff]
    %v3420 = vsel %vm38, %v3418, 0
    %3422 = vmatprep.subr.mxu0 %v3416
    %3423 = vmatpush1.msra.mxu0 %v3415
    %3424 = vmatprep.subr.mxu0 0.0
    %3425 = vmatpush1.msra.mxu0 0.0
    %3426 = vmatprep.subr.mxu0 0.0
    %3427 = vmatpush1.msra.mxu0 0.0
    %3428 = vmatprep.subr.mxu0 0.0
    %3429 = vmatpush1.msra.mxu0 0.0
    %3430 = vmatprep.subr.mxu0 0.0
    %3431 = vmatpush1.msra.mxu0 0.0
    %3432 = vmatprep.subr.mxu0 0.0
    %3433 = vmatpush1.msra.mxu0 0.0
    %3434 = vmatprep.subr.mxu0 0.0
    %3435 = vmatpush1.msra.mxu0 0.0
    %3436 = vmatprep.subr.mxu0 0.0
    %3437 = vmatpush1.msra.mxu0 0.0
    %3438 = vmatprep.subr.mxu0 0.0
    %3439 = vmatpush1.msra.mxu0 0.0
    %3440 = vmatprep.subr.mxu0 0.0
    %3441 = vmatpush1.msra.mxu0 0.0
    %3442 = vmatprep.subr.mxu0 0.0
    %3443 = vmatpush1.msra.mxu0 0.0
    %3444 = vmatprep.subr.mxu0 0.0
    %3445 = vmatpush1.msra.mxu0 0.0
    %3446 = vmatprep.subr.mxu0 0.0
    %3447 = vmatpush1.msra.mxu0 0.0
    %3448 = vmatprep.subr.mxu0 0.0
    %3449 = vmatpush1.msra.mxu0 0.0
    %3450 = vmatprep.subr.mxu0 0.0
    %3451 = vmatpush1.msra.mxu0 0.0
    %3452 = vmatprep.subr.mxu0 0.0
    %3453 = vmatpush1.msra.mxu0 0.0
    %3454 = vmatprep.subr.mxu0 0.0
    %3455 = vmatpush1.msra.mxu0 0.0
    %3456 = vmatprep.subr.mxu0 0.0
    %3457 = vmatpush1.msra.mxu0 0.0
    %3458 = vmatprep.subr.mxu0 0.0
    %3459 = vmatpush1.msra.mxu0 0.0
    %3460 = vmatprep.subr.mxu0 0.0
    %3461 = vmatpush1.msra.mxu0 0.0
    %3462 = vmatprep.subr.mxu0 0.0
    %3463 = vmatpush1.msra.mxu0 0.0
    %3464 = vmatprep.subr.mxu0 0.0
    %3465 = vmatpush1.msra.mxu0 0.0
    %3466 = vmatprep.subr.mxu0 0.0
    %3467 = vmatpush1.msra.mxu0 0.0
    %3468 = vmatprep.subr.mxu0 0.0
    %3469 = vmatpush1.msra.mxu0 0.0
    %3470 = vmatprep.subr.mxu0 0.0
    %3471 = vmatpush1.msra.mxu0 0.0
    %3472 = vmatprep.subr.mxu0 0.0
    %3473 = vmatpush1.msra.mxu0 0.0
    %3474 = vmatprep.subr.mxu0 0.0
    %3475 = vmatpush1.msra.mxu0 0.0
    %3476 = vmatprep.subr.mxu0 0.0
    %3477 = vmatpush1.msra.mxu0 0.0
    %3478 = vmatprep.subr.mxu0 0.0
    %3479 = vmatpush1.msra.mxu0 0.0
    %3480 = vmatprep.subr.mxu0 0.0
    %3481 = vmatpush1.msra.mxu0 0.0
    %3482 = vmatprep.subr.mxu0 0.0
    %3483 = vmatpush1.msra.mxu0 0.0
    %3484 = vmatprep.subr.mxu0 0.0
    %3485 = vmatpush1.msra.mxu0 0.0
    %3486 = vmatprep.mubr.f32.mxu0 0.0
    %3487 = vmatmul.mubr.f32.gmra.mrb[0].mxu0 %v3420
    %v3488 = vpop.f32.mrb[0].mxu0
    %v3489 = vadd.f32 0.0, %v3488
    %v3490 = vpop.f32.mrb[0].mxu0
    %v3491 = vadd.f32 0.0, %v3490
    %3492 = vdwg.mxu0
    %3493 = vst [vmem:[%s4] sm:$0xff] %v3489
    %3494 = vst [vmem:[%s4 + $0x8] sm:$0xff] %v3491
    %v3495 = vsel %vm290, %v3410, 0.0
    %3496 = vadd.xlane.f32.xlu0 %v3495
    %v3497 = vpop.xlane.xlu0 %3496
    %v3498 = vrot.slane %v3497, 4
    %v3499 = vadd.f32 %v3497, %v3498
    %v3500 = vrot.slane %v3499, 2
    %v3501 = vadd.f32 %v3499, %v3500
    %v3502 = vrot.slane %v3501, 1
    %v3503 = vadd.f32 %v3501, %v3502
    %s3504 = vtos %v3503
    %s3505 = smul.f32 %s3504, 128.0
    %s3506 = sadd.f32 %s3241, %s3505
    %s3507 = sld [smem:[#allocation2 + $0xc]]
    %s3508 = sadd.f32 %s3506, %s3507
    %v3509 = vld [vmem:[%s4] sm:$0xff]
    %v3510 = vld [vmem:[%s4 + $0x8] sm:$0xff]
    %v3511 = vmul.f32 %v3509, %v3509
    %v3512 = vmul.f32 %v3510, %v3510
    %3513 = vmatprep.subr.mxu0 %v3510
    %3514 = vmatpush1.msra.mxu0 %v3509
    %3515 = vmatprep.subr.mxu0 0.0
    %3516 = vmatpush1.msra.mxu0 0.0
    %3517 = vmatprep.subr.mxu0 0.0
    %3518 = vmatpush1.msra.mxu0 0.0
    %3519 = vmatprep.subr.mxu0 0.0
    %3520 = vmatpush1.msra.mxu0 0.0
    %3521 = vmatprep.subr.mxu0 0.0
    %3522 = vmatpush1.msra.mxu0 0.0
    %3523 = vmatprep.subr.mxu0 0.0
    %3524 = vmatpush1.msra.mxu0 0.0
    %3525 = vmatprep.subr.mxu0 0.0
    %3526 = vmatpush1.msra.mxu0 0.0
    %3527 = vmatprep.subr.mxu0 0.0
    %3528 = vmatpush1.msra.mxu0 0.0
    %3529 = vmatprep.subr.mxu0 0.0
    %3530 = vmatpush1.msra.mxu0 0.0
    %3531 = vmatprep.subr.mxu0 0.0
    %3532 = vmatpush1.msra.mxu0 0.0
    %3533 = vmatprep.subr.mxu0 0.0
    %3534 = vmatpush1.msra.mxu0 0.0
    %3535 = vmatprep.subr.mxu0 0.0
    %3536 = vmatpush1.msra.mxu0 0.0
    %3537 = vmatprep.subr.mxu0 0.0
    %3538 = vmatpush1.msra.mxu0 0.0
    %3539 = vmatprep.subr.mxu0 0.0
    %3540 = vmatpush1.msra.mxu0 0.0
    %3541 = vmatprep.subr.mxu0 0.0
    %3542 = vmatpush1.msra.mxu0 0.0
    %3543 = vmatprep.subr.mxu0 0.0
    %3544 = vmatpush1.msra.mxu0 0.0
    %3545 = vmatprep.subr.mxu0 0.0
    %3546 = vmatpush1.msra.mxu0 0.0
    %3547 = vmatprep.subr.mxu0 0.0
    %3548 = vmatpush1.msra.mxu0 0.0
    %3549 = vmatprep.subr.mxu0 0.0
    %3550 = vmatpush1.msra.mxu0 0.0
    %3551 = vmatprep.subr.mxu0 0.0
    %3552 = vmatpush1.msra.mxu0 0.0
    %3553 = vmatprep.subr.mxu0 0.0
    %3554 = vmatpush1.msra.mxu0 0.0
    %3555 = vmatprep.subr.mxu0 0.0
    %3556 = vmatpush1.msra.mxu0 0.0
    %3557 = vmatprep.subr.mxu0 0.0
    %3558 = vmatpush1.msra.mxu0 0.0
    %3559 = vmatprep.subr.mxu0 0.0
    %3560 = vmatpush1.msra.mxu0 0.0
    %3561 = vmatprep.subr.mxu0 0.0
    %3562 = vmatpush1.msra.mxu0 0.0
    %3563 = vmatprep.subr.mxu0 0.0
    %3564 = vmatpush1.msra.mxu0 0.0
    %3565 = vmatprep.subr.mxu0 0.0
    %3566 = vmatpush1.msra.mxu0 0.0
    %3567 = vmatprep.subr.mxu0 0.0
    %3568 = vmatpush1.msra.mxu0 0.0
    %3569 = vmatprep.subr.mxu0 0.0
    %3570 = vmatpush1.msra.mxu0 0.0
    %3571 = vmatprep.subr.mxu0 0.0
    %3572 = vmatpush1.msra.mxu0 0.0
    %3573 = vmatprep.subr.mxu0 0.0
    %3574 = vmatpush1.msra.mxu0 0.0
    %3575 = vmatprep.subr.mxu0 0.0
    %3576 = vmatpush1.msra.mxu0 0.0
    %3577 = vmatprep.mubr.f32.mxu0 0.0
    %3578 = vmatmul.mubr.f32.gmra.mrb[0].mxu0 %v40
    %v3579 = vpop.f32.mrb[0].mxu0
    %v3580 = vadd.f32 0.0, %v3579
    %v3581 = vpop.f32.mrb[0].mxu0
    %v3582 = vadd.f32 0.0, %v3581
    %3583 = vdwg.mxu0
    %v3584 = vadd.f32 %v3580, %v3582
    %3585 = vadd.xlane.f32.xlu0 %v3584
    %v3586 = vpop.xlane.xlu0 %3585
    %3587 = vmatprep.subr.mxu0 %v3512
    %3588 = vmatpush1.msra.mxu0 %v3511
    %3589 = vmatprep.subr.mxu0 0.0
    %3590 = vmatpush1.msra.mxu0 0.0
    %3591 = vmatprep.subr.mxu0 0.0
    %3592 = vmatpush1.msra.mxu0 0.0
    %3593 = vmatprep.subr.mxu0 0.0
    %3594 = vmatpush1.msra.mxu0 0.0
    %3595 = vmatprep.subr.mxu0 0.0
    %3596 = vmatpush1.msra.mxu0 0.0
    %3597 = vmatprep.subr.mxu0 0.0
    %3598 = vmatpush1.msra.mxu0 0.0
    %3599 = vmatprep.subr.mxu0 0.0
    %3600 = vmatpush1.msra.mxu0 0.0
    %3601 = vmatprep.subr.mxu0 0.0
    %3602 = vmatpush1.msra.mxu0 0.0
    %3603 = vmatprep.subr.mxu0 0.0
    %3604 = vmatpush1.msra.mxu0 0.0
    %3605 = vmatprep.subr.mxu0 0.0
    %3606 = vmatpush1.msra.mxu0 0.0
    %3607 = vmatprep.subr.mxu0 0.0
    %3608 = vmatpush1.msra.mxu0 0.0
    %3609 = vmatprep.subr.mxu0 0.0
    %3610 = vmatpush1.msra.mxu0 0.0
    %3611 = vmatprep.subr.mxu0 0.0
    %3612 = vmatpush1.msra.mxu0 0.0
    %3613 = vmatprep.subr.mxu0 0.0
    %3614 = vmatpush1.msra.mxu0 0.0
    %3615 = vmatprep.subr.mxu0 0.0
    %3616 = vmatpush1.msra.mxu0 0.0
    %3617 = vmatprep.subr.mxu0 0.0
    %3618 = vmatpush1.msra.mxu0 0.0
    %3619 = vmatprep.subr.mxu0 0.0
    %3620 = vmatpush1.msra.mxu0 0.0
    %3621 = vmatprep.subr.mxu0 0.0
    %3622 = vmatpush1.msra.mxu0 0.0
    %3623 = vmatprep.subr.mxu0 0.0
    %3624 = vmatpush1.msra.mxu0 0.0
    %3625 = vmatprep.subr.mxu0 0.0
    %3626 = vmatpush1.msra.mxu0 0.0
    %3627 = vmatprep.subr.mxu0 0.0
    %3628 = vmatpush1.msra.mxu0 0.0
    %3629 = vmatprep.subr.mxu0 0.0
    %3630 = vmatpush1.msra.mxu0 0.0
    %3631 = vmatprep.subr.mxu0 0.0
    %3632 = vmatpush1.msra.mxu0 0.0
    %3633 = vmatprep.subr.mxu0 0.0
    %3634 = vmatpush1.msra.mxu0 0.0
    %3635 = vmatprep.subr.mxu0 0.0
    %3636 = vmatpush1.msra.mxu0 0.0
    %3637 = vmatprep.subr.mxu0 0.0
    %3638 = vmatpush1.msra.mxu0 0.0
    %3639 = vmatprep.subr.mxu0 0.0
    %3640 = vmatpush1.msra.mxu0 0.0
    %3641 = vmatprep.subr.mxu0 0.0
    %3642 = vmatpush1.msra.mxu0 0.0
    %3643 = vmatprep.subr.mxu0 0.0
    %3644 = vmatpush1.msra.mxu0 0.0
    %3645 = vmatprep.subr.mxu0 0.0
    %3646 = vmatpush1.msra.mxu0 0.0
    %3647 = vmatprep.subr.mxu0 0.0
    %3648 = vmatpush1.msra.mxu0 0.0
    %3649 = vmatprep.subr.mxu0 0.0
    %3650 = vmatpush1.msra.mxu0 0.0
    %3651 = vmatprep.mubr.f32.mxu0 0.0
    %3652 = vmatmul.mubr.f32.gmra.mrb[0].mxu0 %v40
    %v3653 = vpop.f32.mrb[0].mxu0
    %v3654 = vadd.f32 0.0, %v3653
    %v3655 = vpop.f32.mrb[0].mxu0
    %v3656 = vadd.f32 0.0, %v3655
    %3657 = vdwg.mxu0
    %v3658 = vadd.f32 %v3654, %v3656
    %3659 = vadd.xlane.f32.xlu0 %v3658
    %v3660 = vpop.xlane.xlu0 %3659
    %v3661 = vmul.f32 %v3586, 0.001953125
    %v3662 = vmul.f32 %v3660, 0.001953125
    %v3663 = vmul.f32 %v3661, %v3661
    %v3664 = vsub.f32 %v3662, %v3663
    %v3665 = vmax.f32 %v3664, 0.0
    %v3666 = vrsqrt.pop %v3665
    %v3667 = vmul.f32 %v3665, %v3666
    %vm3668 = vcmp.eq.f32.partialorder %v3665, inf
    %v3669 = vsel %vm3668, %v3665, %v3667
    %vm3670 = vcmp.eq.f32.partialorder %v3665, 0.0
    %v3671 = vand.u32 %v3665, 2147483648
    %v3672 = vsel %vm3670, %v3671, %v3669
    %v3673 = vadd.f32 %v3672, 1e-06
    %v3674 = vrcp.pop %v3673
    %v3675 = vmul.f32 1.0, %v3674
    %v3676 = vlog2.pop %v3675
    %v3677 = vmul.f32 %v3676, 0.6931472
    %v3678 = vmul.f32 %v3677, 1.442695
    %v3679 = vpow.pop %v3678
    %v3680 = vsub.f32 %v3509, %v3661
    %v3681 = vsub.f32 %v3510, %v3661
    %v3682 = vmul.f32 %v3680, %v3679
    %v3683 = vmul.f32 %v3681, %v3679
    %s3684 = scalar_lea.vmem %s1, 104
    %v3685 = vld [vmem:[%s3684] sm:$0xff]
    %v3687 = vsel %vm38, %v3685, 0
    %3689 = vmatprep.subr.mxu0 %v3683
    %3690 = vmatpush1.msra.mxu0 %v3682
    %3691 = vmatprep.subr.mxu0 0.0
    %3692 = vmatpush1.msra.mxu0 0.0
    %3693 = vmatprep.subr.mxu0 0.0
    %3694 = vmatpush1.msra.mxu0 0.0
    %3695 = vmatprep.subr.mxu0 0.0
    %3696 = vmatpush1.msra.mxu0 0.0
    %3697 = vmatprep.subr.mxu0 0.0
    %3698 = vmatpush1.msra.mxu0 0.0
    %3699 = vmatprep.subr.mxu0 0.0
    %3700 = vmatpush1.msra.mxu0 0.0
    %3701 = vmatprep.subr.mxu0 0.0
    %3702 = vmatpush1.msra.mxu0 0.0
    %3703 = vmatprep.subr.mxu0 0.0
    %3704 = vmatpush1.msra.mxu0 0.0
    %3705 = vmatprep.subr.mxu0 0.0
    %3706 = vmatpush1.msra.mxu0 0.0
    %3707 = vmatprep.subr.mxu0 0.0
    %3708 = vmatpush1.msra.mxu0 0.0
    %3709 = vmatprep.subr.mxu0 0.0
    %3710 = vmatpush1.msra.mxu0 0.0
    %3711 = vmatprep.subr.mxu0 0.0
    %3712 = vmatpush1.msra.mxu0 0.0
    %3713 = vmatprep.subr.mxu0 0.0
    %3714 = vmatpush1.msra.mxu0 0.0
    %3715 = vmatprep.subr.mxu0 0.0
    %3716 = vmatpush1.msra.mxu0 0.0
    %3717 = vmatprep.subr.mxu0 0.0
    %3718 = vmatpush1.msra.mxu0 0.0
    %3719 = vmatprep.subr.mxu0 0.0
    %3720 = vmatpush1.msra.mxu0 0.0
    %3721 = vmatprep.subr.mxu0 0.0
    %3722 = vmatpush1.msra.mxu0 0.0
    %3723 = vmatprep.subr.mxu0 0.0
    %3724 = vmatpush1.msra.mxu0 0.0
    %3725 = vmatprep.subr.mxu0 0.0
    %3726 = vmatpush1.msra.mxu0 0.0
    %3727 = vmatprep.subr.mxu0 0.0
    %3728 = vmatpush1.msra.mxu0 0.0
    %3729 = vmatprep.subr.mxu0 0.0
    %3730 = vmatpush1.msra.mxu0 0.0
    %3731 = vmatprep.subr.mxu0 0.0
    %3732 = vmatpush1.msra.mxu0 0.0
    %3733 = vmatprep.subr.mxu0 0.0
    %3734 = vmatpush1.msra.mxu0 0.0
    %3735 = vmatprep.subr.mxu0 0.0
    %3736 = vmatpush1.msra.mxu0 0.0
    %3737 = vmatprep.subr.mxu0 0.0
    %3738 = vmatpush1.msra.mxu0 0.0
    %3739 = vmatprep.subr.mxu0 0.0
    %3740 = vmatpush1.msra.mxu0 0.0
    %3741 = vmatprep.subr.mxu0 0.0
    %3742 = vmatpush1.msra.mxu0 0.0
    %3743 = vmatprep.subr.mxu0 0.0
    %3744 = vmatpush1.msra.mxu0 0.0
    %3745 = vmatprep.subr.mxu0 0.0
    %3746 = vmatpush1.msra.mxu0 0.0
    %3747 = vmatprep.subr.mxu0 0.0
    %3748 = vmatpush1.msra.mxu0 0.0
    %3749 = vmatprep.subr.mxu0 0.0
    %3750 = vmatpush1.msra.mxu0 0.0
    %3751 = vmatprep.subr.mxu0 0.0
    %3752 = vmatpush1.msra.mxu0 0.0
    %3753 = vmatprep.mubr.f32.mxu0 0.0
    %3754 = vmatmul.mubr.f32.gmra.mrb[0].mxu0 %v3687
    %v3755 = vpop.f32.mrb[0].mxu0
    %v3756 = vadd.f32 0.0, %v3755
    %v3757 = vpop.f32.mrb[0].mxu0
    %v3758 = vadd.f32 0.0, %v3757
    %3759 = vdwg.mxu0
    %3760 = vst [vmem:[%s4] sm:$0xff] %v3756
    %3761 = vst [vmem:[%s4 + $0x8] sm:$0xff] %v3758
    %v3762 = vsel %vm290, %v3677, 0.0
    %3763 = vadd.xlane.f32.xlu0 %v3762
    %v3764 = vpop.xlane.xlu0 %3763
    %v3765 = vrot.slane %v3764, 4
    %v3766 = vadd.f32 %v3764, %v3765
    %v3767 = vrot.slane %v3766, 2
    %v3768 = vadd.f32 %v3766, %v3767
    %v3769 = vrot.slane %v3768, 1
    %v3770 = vadd.f32 %v3768, %v3769
    %s3771 = vtos %v3770
    %s3772 = smul.f32 %s3771, 128.0
    %s3773 = sadd.f32 %s3508, %s3772
    %s3774 = sld [smem:[#allocation2 + $0xd]]
    %s3775 = sadd.f32 %s3773, %s3774
    %v3776 = vld [vmem:[%s4] sm:$0xff]
    %v3777 = vld [vmem:[%s4 + $0x8] sm:$0xff]
    %v3778 = vmul.f32 %v3776, %v3776
    %v3779 = vmul.f32 %v3777, %v3777
    %3780 = vmatprep.subr.mxu0 %v3777
    %3781 = vmatpush1.msra.mxu0 %v3776
    %3782 = vmatprep.subr.mxu0 0.0
    %3783 = vmatpush1.msra.mxu0 0.0
    %3784 = vmatprep.subr.mxu0 0.0
    %3785 = vmatpush1.msra.mxu0 0.0
    %3786 = vmatprep.subr.mxu0 0.0
    %3787 = vmatpush1.msra.mxu0 0.0
    %3788 = vmatprep.subr.mxu0 0.0
    %3789 = vmatpush1.msra.mxu0 0.0
    %3790 = vmatprep.subr.mxu0 0.0
    %3791 = vmatpush1.msra.mxu0 0.0
    %3792 = vmatprep.subr.mxu0 0.0
    %3793 = vmatpush1.msra.mxu0 0.0
    %3794 = vmatprep.subr.mxu0 0.0
    %3795 = vmatpush1.msra.mxu0 0.0
    %3796 = vmatprep.subr.mxu0 0.0
    %3797 = vmatpush1.msra.mxu0 0.0
    %3798 = vmatprep.subr.mxu0 0.0
    %3799 = vmatpush1.msra.mxu0 0.0
    %3800 = vmatprep.subr.mxu0 0.0
    %3801 = vmatpush1.msra.mxu0 0.0
    %3802 = vmatprep.subr.mxu0 0.0
    %3803 = vmatpush1.msra.mxu0 0.0
    %3804 = vmatprep.subr.mxu0 0.0
    %3805 = vmatpush1.msra.mxu0 0.0
    %3806 = vmatprep.subr.mxu0 0.0
    %3807 = vmatpush1.msra.mxu0 0.0
    %3808 = vmatprep.subr.mxu0 0.0
    %3809 = vmatpush1.msra.mxu0 0.0
    %3810 = vmatprep.subr.mxu0 0.0
    %3811 = vmatpush1.msra.mxu0 0.0
    %3812 = vmatprep.subr.mxu0 0.0
    %3813 = vmatpush1.msra.mxu0 0.0
    %3814 = vmatprep.subr.mxu0 0.0
    %3815 = vmatpush1.msra.mxu0 0.0
    %3816 = vmatprep.subr.mxu0 0.0
    %3817 = vmatpush1.msra.mxu0 0.0
    %3818 = vmatprep.subr.mxu0 0.0
    %3819 = vmatpush1.msra.mxu0 0.0
    %3820 = vmatprep.subr.mxu0 0.0
    %3821 = vmatpush1.msra.mxu0 0.0
    %3822 = vmatprep.subr.mxu0 0.0
    %3823 = vmatpush1.msra.mxu0 0.0
    %3824 = vmatprep.subr.mxu0 0.0
    %3825 = vmatpush1.msra.mxu0 0.0
    %3826 = vmatprep.subr.mxu0 0.0
    %3827 = vmatpush1.msra.mxu0 0.0
    %3828 = vmatprep.subr.mxu0 0.0
    %3829 = vmatpush1.msra.mxu0 0.0
    %3830 = vmatprep.subr.mxu0 0.0
    %3831 = vmatpush1.msra.mxu0 0.0
    %3832 = vmatprep.subr.mxu0 0.0
    %3833 = vmatpush1.msra.mxu0 0.0
    %3834 = vmatprep.subr.mxu0 0.0
    %3835 = vmatpush1.msra.mxu0 0.0
    %3836 = vmatprep.subr.mxu0 0.0
    %3837 = vmatpush1.msra.mxu0 0.0
    %3838 = vmatprep.subr.mxu0 0.0
    %3839 = vmatpush1.msra.mxu0 0.0
    %3840 = vmatprep.subr.mxu0 0.0
    %3841 = vmatpush1.msra.mxu0 0.0
    %3842 = vmatprep.subr.mxu0 0.0
    %3843 = vmatpush1.msra.mxu0 0.0
    %3844 = vmatprep.mubr.f32.mxu0 0.0
    %3845 = vmatmul.mubr.f32.gmra.mrb[0].mxu0 %v40
    %v3846 = vpop.f32.mrb[0].mxu0
    %v3847 = vadd.f32 0.0, %v3846
    %v3848 = vpop.f32.mrb[0].mxu0
    %v3849 = vadd.f32 0.0, %v3848
    %3850 = vdwg.mxu0
    %v3851 = vadd.f32 %v3847, %v3849
    %3852 = vadd.xlane.f32.xlu0 %v3851
    %v3853 = vpop.xlane.xlu0 %3852
    %3854 = vmatprep.subr.mxu0 %v3779
    %3855 = vmatpush1.msra.mxu0 %v3778
    %3856 = vmatprep.subr.mxu0 0.0
    %3857 = vmatpush1.msra.mxu0 0.0
    %3858 = vmatprep.subr.mxu0 0.0
    %3859 = vmatpush1.msra.mxu0 0.0
    %3860 = vmatprep.subr.mxu0 0.0
    %3861 = vmatpush1.msra.mxu0 0.0
    %3862 = vmatprep.subr.mxu0 0.0
    %3863 = vmatpush1.msra.mxu0 0.0
    %3864 = vmatprep.subr.mxu0 0.0
    %3865 = vmatpush1.msra.mxu0 0.0
    %3866 = vmatprep.subr.mxu0 0.0
    %3867 = vmatpush1.msra.mxu0 0.0
    %3868 = vmatprep.subr.mxu0 0.0
    %3869 = vmatpush1.msra.mxu0 0.0
    %3870 = vmatprep.subr.mxu0 0.0
    %3871 = vmatpush1.msra.mxu0 0.0
    %3872 = vmatprep.subr.mxu0 0.0
    %3873 = vmatpush1.msra.mxu0 0.0
    %3874 = vmatprep.subr.mxu0 0.0
    %3875 = vmatpush1.msra.mxu0 0.0
    %3876 = vmatprep.subr.mxu0 0.0
    %3877 = vmatpush1.msra.mxu0 0.0
    %3878 = vmatprep.subr.mxu0 0.0
    %3879 = vmatpush1.msra.mxu0 0.0
    %3880 = vmatprep.subr.mxu0 0.0
    %3881 = vmatpush1.msra.mxu0 0.0
    %3882 = vmatprep.subr.mxu0 0.0
    %3883 = vmatpush1.msra.mxu0 0.0
    %3884 = vmatprep.subr.mxu0 0.0
    %3885 = vmatpush1.msra.mxu0 0.0
    %3886 = vmatprep.subr.mxu0 0.0
    %3887 = vmatpush1.msra.mxu0 0.0
    %3888 = vmatprep.subr.mxu0 0.0
    %3889 = vmatpush1.msra.mxu0 0.0
    %3890 = vmatprep.subr.mxu0 0.0
    %3891 = vmatpush1.msra.mxu0 0.0
    %3892 = vmatprep.subr.mxu0 0.0
    %3893 = vmatpush1.msra.mxu0 0.0
    %3894 = vmatprep.subr.mxu0 0.0
    %3895 = vmatpush1.msra.mxu0 0.0
    %3896 = vmatprep.subr.mxu0 0.0
    %3897 = vmatpush1.msra.mxu0 0.0
    %3898 = vmatprep.subr.mxu0 0.0
    %3899 = vmatpush1.msra.mxu0 0.0
    %3900 = vmatprep.subr.mxu0 0.0
    %3901 = vmatpush1.msra.mxu0 0.0
    %3902 = vmatprep.subr.mxu0 0.0
    %3903 = vmatpush1.msra.mxu0 0.0
    %3904 = vmatprep.subr.mxu0 0.0
    %3905 = vmatpush1.msra.mxu0 0.0
    %3906 = vmatprep.subr.mxu0 0.0
    %3907 = vmatpush1.msra.mxu0 0.0
    %3908 = vmatprep.subr.mxu0 0.0
    %3909 = vmatpush1.msra.mxu0 0.0
    %3910 = vmatprep.subr.mxu0 0.0
    %3911 = vmatpush1.msra.mxu0 0.0
    %3912 = vmatprep.subr.mxu0 0.0
    %3913 = vmatpush1.msra.mxu0 0.0
    %3914 = vmatprep.subr.mxu0 0.0
    %3915 = vmatpush1.msra.mxu0 0.0
    %3916 = vmatprep.subr.mxu0 0.0
    %3917 = vmatpush1.msra.mxu0 0.0
    %3918 = vmatprep.mubr.f32.mxu0 0.0
    %3919 = vmatmul.mubr.f32.gmra.mrb[0].mxu0 %v40
    %v3920 = vpop.f32.mrb[0].mxu0
    %v3921 = vadd.f32 0.0, %v3920
    %v3922 = vpop.f32.mrb[0].mxu0
    %v3923 = vadd.f32 0.0, %v3922
    %3924 = vdwg.mxu0
    %v3925 = vadd.f32 %v3921, %v3923
    %3926 = vadd.xlane.f32.xlu0 %v3925
    %v3927 = vpop.xlane.xlu0 %3926
    %v3928 = vmul.f32 %v3853, 0.001953125
    %v3929 = vmul.f32 %v3927, 0.001953125
    %v3930 = vmul.f32 %v3928, %v3928
    %v3931 = vsub.f32 %v3929, %v3930
    %v3932 = vmax.f32 %v3931, 0.0
    %v3933 = vrsqrt.pop %v3932
    %v3934 = vmul.f32 %v3932, %v3933
    %vm3935 = vcmp.eq.f32.partialorder %v3932, inf
    %v3936 = vsel %vm3935, %v3932, %v3934
    %vm3937 = vcmp.eq.f32.partialorder %v3932, 0.0
    %v3938 = vand.u32 %v3932, 2147483648
    %v3939 = vsel %vm3937, %v3938, %v3936
    %v3940 = vadd.f32 %v3939, 1e-06
    %v3941 = vrcp.pop %v3940
    %v3942 = vmul.f32 1.0, %v3941
    %v3943 = vlog2.pop %v3942
    %v3944 = vmul.f32 %v3943, 0.6931472
    %v3945 = vmul.f32 %v3944, 1.442695
    %v3946 = vpow.pop %v3945
    %v3947 = vsub.f32 %v3776, %v3928
    %v3948 = vsub.f32 %v3777, %v3928
    %v3949 = vmul.f32 %v3947, %v3946
    %v3950 = vmul.f32 %v3948, %v3946
    %s3951 = scalar_lea.vmem %s1, 112
    %v3952 = vld [vmem:[%s3951] sm:$0xff]
    %v3954 = vsel %vm38, %v3952, 0
    %3956 = vmatprep.subr.mxu0 %v3950
    %3957 = vmatpush1.msra.mxu0 %v3949
    %3958 = vmatprep.subr.mxu0 0.0
    %3959 = vmatpush1.msra.mxu0 0.0
    %3960 = vmatprep.subr.mxu0 0.0
    %3961 = vmatpush1.msra.mxu0 0.0
    %3962 = vmatprep.subr.mxu0 0.0
    %3963 = vmatpush1.msra.mxu0 0.0
    %3964 = vmatprep.subr.mxu0 0.0
    %3965 = vmatpush1.msra.mxu0 0.0
    %3966 = vmatprep.subr.mxu0 0.0
    %3967 = vmatpush1.msra.mxu0 0.0
    %3968 = vmatprep.subr.mxu0 0.0
    %3969 = vmatpush1.msra.mxu0 0.0
    %3970 = vmatprep.subr.mxu0 0.0
    %3971 = vmatpush1.msra.mxu0 0.0
    %3972 = vmatprep.subr.mxu0 0.0
    %3973 = vmatpush1.msra.mxu0 0.0
    %3974 = vmatprep.subr.mxu0 0.0
    %3975 = vmatpush1.msra.mxu0 0.0
    %3976 = vmatprep.subr.mxu0 0.0
    %3977 = vmatpush1.msra.mxu0 0.0
    %3978 = vmatprep.subr.mxu0 0.0
    %3979 = vmatpush1.msra.mxu0 0.0
    %3980 = vmatprep.subr.mxu0 0.0
    %3981 = vmatpush1.msra.mxu0 0.0
    %3982 = vmatprep.subr.mxu0 0.0
    %3983 = vmatpush1.msra.mxu0 0.0
    %3984 = vmatprep.subr.mxu0 0.0
    %3985 = vmatpush1.msra.mxu0 0.0
    %3986 = vmatprep.subr.mxu0 0.0
    %3987 = vmatpush1.msra.mxu0 0.0
    %3988 = vmatprep.subr.mxu0 0.0
    %3989 = vmatpush1.msra.mxu0 0.0
    %3990 = vmatprep.subr.mxu0 0.0
    %3991 = vmatpush1.msra.mxu0 0.0
    %3992 = vmatprep.subr.mxu0 0.0
    %3993 = vmatpush1.msra.mxu0 0.0
    %3994 = vmatprep.subr.mxu0 0.0
    %3995 = vmatpush1.msra.mxu0 0.0
    %3996 = vmatprep.subr.mxu0 0.0
    %3997 = vmatpush1.msra.mxu0 0.0
    %3998 = vmatprep.subr.mxu0 0.0
    %3999 = vmatpush1.msra.mxu0 0.0
    %4000 = vmatprep.subr.mxu0 0.0
    %4001 = vmatpush1.msra.mxu0 0.0
    %4002 = vmatprep.subr.mxu0 0.0
    %4003 = vmatpush1.msra.mxu0 0.0
    %4004 = vmatprep.subr.mxu0 0.0
    %4005 = vmatpush1.msra.mxu0 0.0
    %4006 = vmatprep.subr.mxu0 0.0
    %4007 = vmatpush1.msra.mxu0 0.0
    %4008 = vmatprep.subr.mxu0 0.0
    %4009 = vmatpush1.msra.mxu0 0.0
    %4010 = vmatprep.subr.mxu0 0.0
    %4011 = vmatpush1.msra.mxu0 0.0
    %4012 = vmatprep.subr.mxu0 0.0
    %4013 = vmatpush1.msra.mxu0 0.0
    %4014 = vmatprep.subr.mxu0 0.0
    %4015 = vmatpush1.msra.mxu0 0.0
    %4016 = vmatprep.subr.mxu0 0.0
    %4017 = vmatpush1.msra.mxu0 0.0
    %4018 = vmatprep.subr.mxu0 0.0
    %4019 = vmatpush1.msra.mxu0 0.0
    %4020 = vmatprep.mubr.f32.mxu0 0.0
    %4021 = vmatmul.mubr.f32.gmra.mrb[0].mxu0 %v3954
    %v4022 = vpop.f32.mrb[0].mxu0
    %v4023 = vadd.f32 0.0, %v4022
    %v4024 = vpop.f32.mrb[0].mxu0
    %v4025 = vadd.f32 0.0, %v4024
    %4026 = vdwg.mxu0
    %4027 = vst [vmem:[%s4] sm:$0xff] %v4023
    %4028 = vst [vmem:[%s4 + $0x8] sm:$0xff] %v4025
    %v4029 = vsel %vm290, %v3944, 0.0
    %4030 = vadd.xlane.f32.xlu0 %v4029
    %v4031 = vpop.xlane.xlu0 %4030
    %v4032 = vrot.slane %v4031, 4
    %v4033 = vadd.f32 %v4031, %v4032
    %v4034 = vrot.slane %v4033, 2
    %v4035 = vadd.f32 %v4033, %v4034
    %v4036 = vrot.slane %v4035, 1
    %v4037 = vadd.f32 %v4035, %v4036
    %s4038 = vtos %v4037
    %s4039 = smul.f32 %s4038, 128.0
    %s4040 = sadd.f32 %s3775, %s4039
    %s4041 = sld [smem:[#allocation2 + $0xe]]
    %s4042 = sadd.f32 %s4040, %s4041
    %v4043 = vld [vmem:[%s4] sm:$0xff]
    %v4044 = vld [vmem:[%s4 + $0x8] sm:$0xff]
    %v4045 = vmul.f32 %v4043, %v4043
    %v4046 = vmul.f32 %v4044, %v4044
    %4047 = vmatprep.subr.mxu0 %v4044
    %4048 = vmatpush1.msra.mxu0 %v4043
    %4049 = vmatprep.subr.mxu0 0.0
    %4050 = vmatpush1.msra.mxu0 0.0
    %4051 = vmatprep.subr.mxu0 0.0
    %4052 = vmatpush1.msra.mxu0 0.0
    %4053 = vmatprep.subr.mxu0 0.0
    %4054 = vmatpush1.msra.mxu0 0.0
    %4055 = vmatprep.subr.mxu0 0.0
    %4056 = vmatpush1.msra.mxu0 0.0
    %4057 = vmatprep.subr.mxu0 0.0
    %4058 = vmatpush1.msra.mxu0 0.0
    %4059 = vmatprep.subr.mxu0 0.0
    %4060 = vmatpush1.msra.mxu0 0.0
    %4061 = vmatprep.subr.mxu0 0.0
    %4062 = vmatpush1.msra.mxu0 0.0
    %4063 = vmatprep.subr.mxu0 0.0
    %4064 = vmatpush1.msra.mxu0 0.0
    %4065 = vmatprep.subr.mxu0 0.0
    %4066 = vmatpush1.msra.mxu0 0.0
    %4067 = vmatprep.subr.mxu0 0.0
    %4068 = vmatpush1.msra.mxu0 0.0
    %4069 = vmatprep.subr.mxu0 0.0
    %4070 = vmatpush1.msra.mxu0 0.0
    %4071 = vmatprep.subr.mxu0 0.0
    %4072 = vmatpush1.msra.mxu0 0.0
    %4073 = vmatprep.subr.mxu0 0.0
    %4074 = vmatpush1.msra.mxu0 0.0
    %4075 = vmatprep.subr.mxu0 0.0
    %4076 = vmatpush1.msra.mxu0 0.0
    %4077 = vmatprep.subr.mxu0 0.0
    %4078 = vmatpush1.msra.mxu0 0.0
    %4079 = vmatprep.subr.mxu0 0.0
    %4080 = vmatpush1.msra.mxu0 0.0
    %4081 = vmatprep.subr.mxu0 0.0
    %4082 = vmatpush1.msra.mxu0 0.0
    %4083 = vmatprep.subr.mxu0 0.0
    %4084 = vmatpush1.msra.mxu0 0.0
    %4085 = vmatprep.subr.mxu0 0.0
    %4086 = vmatpush1.msra.mxu0 0.0
    %4087 = vmatprep.subr.mxu0 0.0
    %4088 = vmatpush1.msra.mxu0 0.0
    %4089 = vmatprep.subr.mxu0 0.0
    %4090 = vmatpush1.msra.mxu0 0.0
    %4091 = vmatprep.subr.mxu0 0.0
    %4092 = vmatpush1.msra.mxu0 0.0
    %4093 = vmatprep.subr.mxu0 0.0
    %4094 = vmatpush1.msra.mxu0 0.0
    %4095 = vmatprep.subr.mxu0 0.0
    %4096 = vmatpush1.msra.mxu0 0.0
    %4097 = vmatprep.subr.mxu0 0.0
    %4098 = vmatpush1.msra.mxu0 0.0
    %4099 = vmatprep.subr.mxu0 0.0
    %4100 = vmatpush1.msra.mxu0 0.0
    %4101 = vmatprep.subr.mxu0 0.0
    %4102 = vmatpush1.msra.mxu0 0.0
    %4103 = vmatprep.subr.mxu0 0.0
    %4104 = vmatpush1.msra.mxu0 0.0
    %4105 = vmatprep.subr.mxu0 0.0
    %4106 = vmatpush1.msra.mxu0 0.0
    %4107 = vmatprep.subr.mxu0 0.0
    %4108 = vmatpush1.msra.mxu0 0.0
    %4109 = vmatprep.subr.mxu0 0.0
    %4110 = vmatpush1.msra.mxu0 0.0
    %4111 = vmatprep.mubr.f32.mxu0 0.0
    %4112 = vmatmul.mubr.f32.gmra.mrb[0].mxu0 %v40
    %v4113 = vpop.f32.mrb[0].mxu0
    %v4114 = vadd.f32 0.0, %v4113
    %v4115 = vpop.f32.mrb[0].mxu0
    %v4116 = vadd.f32 0.0, %v4115
    %4117 = vdwg.mxu0
    %v4118 = vadd.f32 %v4114, %v4116
    %4119 = vadd.xlane.f32.xlu0 %v4118
    %v4120 = vpop.xlane.xlu0 %4119
    %4121 = vmatprep.subr.mxu0 %v4046
    %4122 = vmatpush1.msra.mxu0 %v4045
    %4123 = vmatprep.subr.mxu0 0.0
    %4124 = vmatpush1.msra.mxu0 0.0
    %4125 = vmatprep.subr.mxu0 0.0
    %4126 = vmatpush1.msra.mxu0 0.0
    %4127 = vmatprep.subr.mxu0 0.0
    %4128 = vmatpush1.msra.mxu0 0.0
    %4129 = vmatprep.subr.mxu0 0.0
    %4130 = vmatpush1.msra.mxu0 0.0
    %4131 = vmatprep.subr.mxu0 0.0
    %4132 = vmatpush1.msra.mxu0 0.0
    %4133 = vmatprep.subr.mxu0 0.0
    %4134 = vmatpush1.msra.mxu0 0.0
    %4135 = vmatprep.subr.mxu0 0.0
    %4136 = vmatpush1.msra.mxu0 0.0
    %4137 = vmatprep.subr.mxu0 0.0
    %4138 = vmatpush1.msra.mxu0 0.0
    %4139 = vmatprep.subr.mxu0 0.0
    %4140 = vmatpush1.msra.mxu0 0.0
    %4141 = vmatprep.subr.mxu0 0.0
    %4142 = vmatpush1.msra.mxu0 0.0
    %4143 = vmatprep.subr.mxu0 0.0
    %4144 = vmatpush1.msra.mxu0 0.0
    %4145 = vmatprep.subr.mxu0 0.0
    %4146 = vmatpush1.msra.mxu0 0.0
    %4147 = vmatprep.subr.mxu0 0.0
    %4148 = vmatpush1.msra.mxu0 0.0
    %4149 = vmatprep.subr.mxu0 0.0
    %4150 = vmatpush1.msra.mxu0 0.0
    %4151 = vmatprep.subr.mxu0 0.0
    %4152 = vmatpush1.msra.mxu0 0.0
    %4153 = vmatprep.subr.mxu0 0.0
    %4154 = vmatpush1.msra.mxu0 0.0
    %4155 = vmatprep.subr.mxu0 0.0
    %4156 = vmatpush1.msra.mxu0 0.0
    %4157 = vmatprep.subr.mxu0 0.0
    %4158 = vmatpush1.msra.mxu0 0.0
    %4159 = vmatprep.subr.mxu0 0.0
    %4160 = vmatpush1.msra.mxu0 0.0
    %4161 = vmatprep.subr.mxu0 0.0
    %4162 = vmatpush1.msra.mxu0 0.0
    %4163 = vmatprep.subr.mxu0 0.0
    %4164 = vmatpush1.msra.mxu0 0.0
    %4165 = vmatprep.subr.mxu0 0.0
    %4166 = vmatpush1.msra.mxu0 0.0
    %4167 = vmatprep.subr.mxu0 0.0
    %4168 = vmatpush1.msra.mxu0 0.0
    %4169 = vmatprep.subr.mxu0 0.0
    %4170 = vmatpush1.msra.mxu0 0.0
    %4171 = vmatprep.subr.mxu0 0.0
    %4172 = vmatpush1.msra.mxu0 0.0
    %4173 = vmatprep.subr.mxu0 0.0
    %4174 = vmatpush1.msra.mxu0 0.0
    %4175 = vmatprep.subr.mxu0 0.0
    %4176 = vmatpush1.msra.mxu0 0.0
    %4177 = vmatprep.subr.mxu0 0.0
    %4178 = vmatpush1.msra.mxu0 0.0
    %4179 = vmatprep.subr.mxu0 0.0
    %4180 = vmatpush1.msra.mxu0 0.0
    %4181 = vmatprep.subr.mxu0 0.0
    %4182 = vmatpush1.msra.mxu0 0.0
    %4183 = vmatprep.subr.mxu0 0.0
    %4184 = vmatpush1.msra.mxu0 0.0
    %4185 = vmatprep.mubr.f32.mxu0 0.0
    %4186 = vmatmul.mubr.f32.gmra.mrb[0].mxu0 %v40
    %v4187 = vpop.f32.mrb[0].mxu0
    %v4188 = vadd.f32 0.0, %v4187
    %v4189 = vpop.f32.mrb[0].mxu0
    %v4190 = vadd.f32 0.0, %v4189
    %4191 = vdwg.mxu0
    %v4192 = vadd.f32 %v4188, %v4190
    %4193 = vadd.xlane.f32.xlu0 %v4192
    %v4194 = vpop.xlane.xlu0 %4193
    %v4195 = vmul.f32 %v4120, 0.001953125
    %v4196 = vmul.f32 %v4194, 0.001953125
    %v4197 = vmul.f32 %v4195, %v4195
    %v4198 = vsub.f32 %v4196, %v4197
    %v4199 = vmax.f32 %v4198, 0.0
    %v4200 = vrsqrt.pop %v4199
    %v4201 = vmul.f32 %v4199, %v4200
    %vm4202 = vcmp.eq.f32.partialorder %v4199, inf
    %v4203 = vsel %vm4202, %v4199, %v4201
    %vm4204 = vcmp.eq.f32.partialorder %v4199, 0.0
    %v4205 = vand.u32 %v4199, 2147483648
    %v4206 = vsel %vm4204, %v4205, %v4203
    %v4207 = vadd.f32 %v4206, 1e-06
    %v4208 = vrcp.pop %v4207
    %v4209 = vmul.f32 1.0, %v4208
    %v4210 = vlog2.pop %v4209
    %v4211 = vmul.f32 %v4210, 0.6931472
    %v4212 = vmul.f32 %v4211, 1.442695
    %v4213 = vpow.pop %v4212
    %v4214 = vsub.f32 %v4043, %v4195
    %v4215 = vsub.f32 %v4044, %v4195
    %v4216 = vmul.f32 %v4214, %v4213
    %v4217 = vmul.f32 %v4215, %v4213
    %s4218 = scalar_lea.vmem %s1, 120
    %v4219 = vld [vmem:[%s4218] sm:$0xff]
    %v4221 = vsel %vm38, %v4219, 0
    %4223 = vmatprep.subr.mxu0 %v4217
    %4224 = vmatpush1.msra.mxu0 %v4216
    %4225 = vmatprep.subr.mxu0 0.0
    %4226 = vmatpush1.msra.mxu0 0.0
    %4227 = vmatprep.subr.mxu0 0.0
    %4228 = vmatpush1.msra.mxu0 0.0
    %4229 = vmatprep.subr.mxu0 0.0
    %4230 = vmatpush1.msra.mxu0 0.0
    %4231 = vmatprep.subr.mxu0 0.0
    %4232 = vmatpush1.msra.mxu0 0.0
    %4233 = vmatprep.subr.mxu0 0.0
    %4234 = vmatpush1.msra.mxu0 0.0
    %4235 = vmatprep.subr.mxu0 0.0
    %4236 = vmatpush1.msra.mxu0 0.0
    %4237 = vmatprep.subr.mxu0 0.0
    %4238 = vmatpush1.msra.mxu0 0.0
    %4239 = vmatprep.subr.mxu0 0.0
    %4240 = vmatpush1.msra.mxu0 0.0
    %4241 = vmatprep.subr.mxu0 0.0
    %4242 = vmatpush1.msra.mxu0 0.0
    %4243 = vmatprep.subr.mxu0 0.0
    %4244 = vmatpush1.msra.mxu0 0.0
    %4245 = vmatprep.subr.mxu0 0.0
    %4246 = vmatpush1.msra.mxu0 0.0
    %4247 = vmatprep.subr.mxu0 0.0
    %4248 = vmatpush1.msra.mxu0 0.0
    %4249 = vmatprep.subr.mxu0 0.0
    %4250 = vmatpush1.msra.mxu0 0.0
    %4251 = vmatprep.subr.mxu0 0.0
    %4252 = vmatpush1.msra.mxu0 0.0
    %4253 = vmatprep.subr.mxu0 0.0
    %4254 = vmatpush1.msra.mxu0 0.0
    %4255 = vmatprep.subr.mxu0 0.0
    %4256 = vmatpush1.msra.mxu0 0.0
    %4257 = vmatprep.subr.mxu0 0.0
    %4258 = vmatpush1.msra.mxu0 0.0
    %4259 = vmatprep.subr.mxu0 0.0
    %4260 = vmatpush1.msra.mxu0 0.0
    %4261 = vmatprep.subr.mxu0 0.0
    %4262 = vmatpush1.msra.mxu0 0.0
    %4263 = vmatprep.subr.mxu0 0.0
    %4264 = vmatpush1.msra.mxu0 0.0
    %4265 = vmatprep.subr.mxu0 0.0
    %4266 = vmatpush1.msra.mxu0 0.0
    %4267 = vmatprep.subr.mxu0 0.0
    %4268 = vmatpush1.msra.mxu0 0.0
    %4269 = vmatprep.subr.mxu0 0.0
    %4270 = vmatpush1.msra.mxu0 0.0
    %4271 = vmatprep.subr.mxu0 0.0
    %4272 = vmatpush1.msra.mxu0 0.0
    %4273 = vmatprep.subr.mxu0 0.0
    %4274 = vmatpush1.msra.mxu0 0.0
    %4275 = vmatprep.subr.mxu0 0.0
    %4276 = vmatpush1.msra.mxu0 0.0
    %4277 = vmatprep.subr.mxu0 0.0
    %4278 = vmatpush1.msra.mxu0 0.0
    %4279 = vmatprep.subr.mxu0 0.0
    %4280 = vmatpush1.msra.mxu0 0.0
    %4281 = vmatprep.subr.mxu0 0.0
    %4282 = vmatpush1.msra.mxu0 0.0
    %4283 = vmatprep.subr.mxu0 0.0
    %4284 = vmatpush1.msra.mxu0 0.0
    %4285 = vmatprep.subr.mxu0 0.0
    %4286 = vmatpush1.msra.mxu0 0.0
    %4287 = vmatprep.mubr.f32.mxu0 0.0
    %4288 = vmatmul.mubr.f32.gmra.mrb[0].mxu0 %v4221
    %v4289 = vpop.f32.mrb[0].mxu0
    %v4290 = vadd.f32 0.0, %v4289
    %v4291 = vpop.f32.mrb[0].mxu0
    %v4292 = vadd.f32 0.0, %v4291
    %4293 = vdwg.mxu0
    %4294 = vst [vmem:[%s4] sm:$0xff] %v4290
    %4295 = vst [vmem:[%s4 + $0x8] sm:$0xff] %v4292
    %v4296 = vsel %vm290, %v4211, 0.0
    %4297 = vadd.xlane.f32.xlu0 %v4296
    %v4298 = vpop.xlane.xlu0 %4297
    %v4299 = vrot.slane %v4298, 4
    %v4300 = vadd.f32 %v4298, %v4299
    %v4301 = vrot.slane %v4300, 2
    %v4302 = vadd.f32 %v4300, %v4301
    %v4303 = vrot.slane %v4302, 1
    %v4304 = vadd.f32 %v4302, %v4303
    %s4305 = vtos %v4304
    %s4306 = smul.f32 %s4305, 128.0
    %s4307 = sadd.f32 %s4042, %s4306
    %s4308 = sld [smem:[#allocation2 + $0xf]]
    %s4309 = sadd.f32 %s4307, %s4308
    %s4310 = scalar_lea.smem [#allocation5], 0
    %4311 = sst [smem:[%s4310]] %s4309
    // Predicated region
    $region22: #{flownet_encode.1} parent=1 // pred_check
      _
    $region23: #{flownet_encode.1} parent=1 // pred_check_branch
      %4313 = sbr.rel (0) target = $region25
    $region24: #{flownet_encode.1} parent=1 // pred_region
      _
    $region25: #{flownet_encode.1} parent=1 // pred_fallthru
      _
    // Predicated region
    $region26: #{flownet_encode.1} parent=1 // pred_check
      _
    $region27: #{flownet_encode.1} parent=1 // pred_check_branch
      %4315 = sbr.rel (0) target = $region29
    $region28: #{flownet_encode.1} parent=1 // pred_region
      %s4317 = ssub.s32 16, 16
      %4318 = vsyncadd [#allocation3], %s4317
      %4321 = dma.smem_to_hbm [#allocation5], 16, %s5, [#allocation3]
    $region29: #{flownet_encode.1} parent=1 // pred_fallthru
      _
    // Predicated region
    $region30: #{flownet_encode.1} parent=1 // pred_check
      _
    $region31: #{flownet_encode.1} parent=1 // pred_check_branch
      %4323 = sbr.rel (0) target = $region33
    $region32: #{flownet_encode.1} parent=1 // pred_region
      _
    $region33: #{flownet_encode.1} parent=1 // pred_fallthru
      _
    // Predicated region
    $region34: #{flownet_encode.1} parent=1 // pred_check
      _
    $region35: #{flownet_encode.1} parent=1 // pred_check_branch
      %4325 = sbr.rel (0) target = $region37
    $region36: #{flownet_encode.1} parent=1 // pred_region
      %4326 = dma.done [#allocation3], 16
    $region37: #{flownet_encode.1} parent=1 // pred_fallthru
      _
    %4327 = sfence
    %4328 = vsyncpa [#allocation3], 1
    %4329 = vsyncpa [#allocation4], 1

</llo_original>
